<compile_context>
chip_gen: v7x
topology: tpu7x:2x2x1
jax: 0.10.0
libtpu: 0.0.40
codegen_flags: <defaults>
</compile_context>

<pallas_src>
import functools
import math

import jax
import jax.numpy as jnp
from jax.experimental import pallas as pl
from jax.experimental.pallas import tpu as pltpu


def _round_up(x, m):
    return (x + m - 1) // m * m


# -----------------------------------------------------------------------------
# Fused kernel: [conv1 | shortcut](1x1)+bn -> Res2Net 3x3 branches -> conv3(1x1)
#               + bn3 + residual add + Hardtanh(0, 20).  One lane group of
#               (batch-folded) samples per grid step; everything stays in VMEM.
# -----------------------------------------------------------------------------
def _block_kernel(scale, cwp, c1p, shifts, has_shortcut, *refs):
    if has_shortcut:
        (x_ref, mask_ref, w1_ref, b1_ref, wc_ref, bc_ref, w3_ref, b3_ref,
         o_ref, col_ref, cat_ref, res_ref) = refs
    else:
        (x_ref, mask_ref, w1_ref, b1_ref, wc_ref, bc_ref, w3_ref, b3_ref,
         o_ref, col_ref, cat_ref) = refs

    gw = col_ref.shape[1]                 # lane width of this grid step
    x = x_ref[...]                        # (Cin, GW), compute dtype

    # Interior mask (1 on interior pixels, 0 on pad ring / lane tail),
    # broadcast ONCE per grid step and reused by every branch.
    mask_w = jnp.broadcast_to(mask_ref[...], (cwp, gw))    # (cwp, GW) f32

    # conv1 (1x1)+bn1 and (optionally) the 1x1 shortcut conv+bn merged into a
    # single MXU matmul: rows [0:c1p] are conv1, rows [c1p:] are the shortcut.
    h_all = jnp.dot(w1_ref[...], x, preferred_element_type=jnp.float32)
    h_all = h_all + b1_ref[...]
    if has_shortcut:
        res_ref[...] = h_all[c1p:].astype(res_ref.dtype)   # explicit scratch
    h1 = jnp.clip(h_all[:c1p], 0.0, 20.0)                  # (c1p, GW) f32

    # Hierarchical (Res2Net) 3x3 branches.  Each branch is ONE MXU matmul with
    # K = 9*cwp: the im2col operand is built in VMEM from 9 lane rotations
    # (pltpu.roll -> XLU slot); all scratch row offsets are tile-aligned.
    sp = None
    for i in range(scale):
        spx_i = h1[i * cwp:(i + 1) * cwp, :] * mask_w      # zero the pad ring
        sp = spx_i if i == 0 else sp + spx_i
        sp_c = sp.astype(col_ref.dtype)
        for k, s in enumerate(shifts):
            col_ref[k * cwp:(k + 1) * cwp, :] = pltpu.roll(
                sp_c, shift=(-s) % gw, axis=1)
        y = jnp.dot(wc_ref[i], col_ref[...], preferred_element_type=jnp.float32)
        y = jnp.clip(y + bc_ref[i], 0.0, 20.0) * mask_w     # (cwp, GW) f32
        cat_ref[i * cwp:(i + 1) * cwp, :] = y.astype(cat_ref.dtype)
        sp = y

    # conv3 (1x1) + bn3 (folded) + residual + Hardtanh(0, 20)
    out = jnp.dot(w3_ref[...], cat_ref[...], preferred_element_type=jnp.float32)
    out = out + b3_ref[...]
    if has_shortcut:
        out = out + res_ref[...].astype(jnp.float32)
    else:
        out = out + x.astype(jnp.float32)                  # identity shortcut
    o_ref[...] = jnp.clip(out, 0.0, 20.0).astype(o_ref.dtype)


# -----------------------------------------------------------------------------
# Fold BN scales into the conv weights and repack them into the kernel layout.
# -----------------------------------------------------------------------------
def _fold_and_pack(p, *, width, scale, cwp, compute_dtype):
    cw = width
    cin = p["conv1_w"].shape[1]
    cexp = p["conv3_w"].shape[0]
    pad_c = cwp - cw

    # conv1: (cw*scale, cin, 1, 1) -> (scale*cwp, cin), branch-major rows.
    w1 = p["conv1_w"][:, :, 0, 0] * p["bn1_s"][:, None]
    w1 = jnp.pad(w1.reshape(scale, cw, cin), ((0, 0), (0, pad_c), (0, 0)))
    w1 = w1.reshape(scale * cwp, cin)
    b1 = jnp.pad(p["bn1_b"].reshape(scale, cw), ((0, 0), (0, pad_c)))
    b1 = b1.reshape(scale * cwp, 1)

    # Merge the 1x1 shortcut conv + bn (if present) into the SAME matmul:
    # rows [0:scale*cwp] = conv1, rows [scale*cwp:] = shortcut.
    has_shortcut = p["shortcut_w"] is not None
    if has_shortcut:
        ws_ = p["shortcut_w"][:, :, 0, 0] * p["sbn_s"][:, None]
        w1 = jnp.concatenate([w1, ws_], axis=0)
        b1 = jnp.concatenate([b1, p["sbn_b"].reshape(cexp, 1)], axis=0)

    # 3x3 convs: (cw, cw, 3, 3) -> (cwp, 9*cwp); rows = out channel,
    # columns = (tap k, in channel) matching the in-kernel im2col layout.
    wcs, bcs = [], []
    for i in range(scale):
        w = p["convs_w"][i] * p["bns_s"][i][:, None, None, None]
        w = jnp.transpose(w, (0, 2, 3, 1)).reshape(cw, 9, cw)      # [o, k, c]
        w = jnp.pad(w, ((0, pad_c), (0, 0), (0, pad_c))).reshape(cwp, 9 * cwp)
        wcs.append(w)
        bcs.append(jnp.pad(p["bns_b"][i], (0, pad_c)).reshape(cwp, 1))
    wc = jnp.stack(wcs, axis=0)          # (scale, cwp, 9*cwp)
    bc = jnp.stack(bcs, axis=0)          # (scale, cwp, 1)

    # conv3: (cexp, cw*scale, 1, 1) -> (cexp, scale*cwp)
    w3 = p["conv3_w"][:, :, 0, 0] * p["bn3_s"][:, None]
    w3 = jnp.pad(w3.reshape(cexp, scale, cw), ((0, 0), (0, 0), (0, pad_c)))
    w3 = w3.reshape(cexp, scale * cwp)
    b3 = p["bn3_b"].reshape(cexp, 1)

    packed = {
        "w1s": w1.astype(compute_dtype), "b1s": b1.astype(jnp.float32),
        "wc": wc.astype(compute_dtype), "bc": bc.astype(jnp.float32),
        "w3": w3.astype(compute_dtype), "b3": b3.astype(jnp.float32),
    }
    return packed, cexp, has_shortcut


# -----------------------------------------------------------------------------
# Module forward: one pallas_call for the whole residual block.
# -----------------------------------------------------------------------------
def basic_block_eres2netv2_forward(x, params, *, stride, width, scale,
                                   compute_dtype=jnp.bfloat16, lane_groups=1):
    """x: (N, Cin, H, W) NCHW, same as the PyTorch module.  Returns NCHW.

    compute_dtype: matmul-input / scratch dtype (accumulation is always f32).
                   bf16 by default; pass jnp.float32 for bit-accurate eval.
    lane_groups:   number of "parallel" grid steps the batch lanes are split
                   into.  1 (default) = one fat step, best on v5e/v6e (single
                   TensorCore); use 2 on v7x so both TensorCores get work.
    """
    n, cin, _, _ = x.shape
    assert n % lane_groups == 0, "batch must be divisible by lane_groups"
    xs = x[:, :, ::stride, ::stride] if stride > 1 else x
    hs, wsp = xs.shape[2], xs.shape[3]

    # Per-branch channel group padded to the compute dtype's sublane tile
    # (8 rows for f32, 16 for bf16) so every in-kernel row offset is aligned.
    sub = 8 * 4 // jnp.dtype(compute_dtype).itemsize
    cwp = _round_up(max(width, sub), sub)
    packed, cexp, has_shortcut = _fold_and_pack(
        params, width=width, scale=scale, cwp=cwp, compute_dtype=compute_dtype)
    if not has_shortcut:
        assert stride == 1 and cin == cexp, "identity shortcut shape mismatch"

    wp2 = wsp + 2
    p_img = (hs + 2) * wp2               # flattened padded image size
    p_pad = _round_up(p_img, 128)        # lane-dense (multiple of 128)
    spg = n // lane_groups               # samples per grid step
    gw = spg * p_pad                     # lane width per grid step
    total = n * p_pad
    c1p = scale * cwp

    # Single zero-pad of the (small) input, then fold the batch into the lane
    # axis: (Cin, N*P_pad).  Every matmul runs with N = gw lanes per step.
    xp = jnp.pad(xs, ((0, 0), (0, 0), (1, 1), (1, 1))).reshape(n, cin, p_img)
    xp = jnp.pad(xp, ((0, 0), (0, 0), (0, p_pad - p_img)))
    xp = jnp.transpose(xp, (1, 0, 2)).reshape(cin, total).astype(compute_dtype)

    # Per-sample interior mask, tiled across the batch; interior 3x3 taps never
    # leave a sample's P_pad window, and ring/tail positions are masked, so
    # rolls cannot leak values across samples.
    idx = jnp.arange(p_pad)
    ph, pw = idx // wp2, idx % wp2
    m = ((idx < p_img) & (ph >= 1) & (ph <= hs) & (pw >= 1) & (pw <= wsp))
    mask = jnp.tile(m.astype(jnp.float32), (n,)).reshape(1, total)

    # 3x3 tap offsets in the flat padded layout (row-major over kh, kw).
    shifts = tuple((kh - 1) * wp2 + (kw - 1)
                   for kh in range(3) for kw in range(3))

    out_dtype = x.dtype
    rows1 = packed["w1s"].shape[0]       # c1p (+ cexp if shortcut merged in)

    in_specs = [
        pl.BlockSpec((cin, gw), lambda g: (0, g)),
        pl.BlockSpec((1, gw), lambda g: (0, g)),
        pl.BlockSpec((rows1, cin), lambda g: (0, 0)),
        pl.BlockSpec((rows1, 1), lambda g: (0, 0)),
        pl.BlockSpec((scale, cwp, 9 * cwp), lambda g: (0, 0, 0)),
        pl.BlockSpec((scale, cwp, 1), lambda g: (0, 0, 0)),
        pl.BlockSpec((cexp, c1p), lambda g: (0, 0)),
        pl.BlockSpec((cexp, 1), lambda g: (0, 0)),
    ]
    args = [xp, mask, packed["w1s"], packed["b1s"], packed["wc"], packed["bc"],
            packed["w3"], packed["b3"]]

    scratch_shapes = [pltpu.VMEM((9 * cwp, gw), compute_dtype),   # im2col
                      pltpu.VMEM((c1p, gw), compute_dtype)]       # branch cat
    if has_shortcut:
        scratch_shapes.append(pltpu.VMEM((cexp, gw), compute_dtype))  # residual

    # Explicit scoped-VMEM budget from the actual block + scratch sizes
    # (defaults are 16/32 MiB and would undersize larger configurations).
    itm = jnp.dtype(compute_dtype).itemsize
    w_bytes = sum(int(v.size) * v.dtype.itemsize for v in packed.values())
    blk_bytes = (cin * gw * itm + gw * 4
                 + cexp * gw * jnp.dtype(out_dtype).itemsize + w_bytes)
    scr_bytes = (9 * cwp + c1p + (cexp if has_shortcut else 0)) * gw * itm
    vmem_limit = int(min(max(2 * blk_bytes + scr_bytes + (4 << 20), 32 << 20),
                         100 << 20))

    out_flat = pl.pallas_call(
        functools.partial(_block_kernel, scale, cwp, c1p, shifts, has_shortcut),
        out_shape=jax.ShapeDtypeStruct((cexp, total), out_dtype),
        grid=(lane_groups,),
        in_specs=in_specs,
        out_specs=pl.BlockSpec((cexp, gw), lambda g: (0, g)),
        scratch_shapes=scratch_shapes,
        compiler_params=pltpu.CompilerParams(
            dimension_semantics=("parallel",),
            vmem_limit_bytes=vmem_limit),
    )(*args)

    out = out_flat.reshape(cexp, n, p_pad).transpose(1, 0, 2)[:, :, :p_img]
    out = out.reshape(n, cexp, hs + 2, wp2)
    return out[:, :, 1:hs + 1, 1:wsp + 1]


# -----------------------------------------------------------------------------
# Pure-JAX reference (NCHW, lax convolutions) for correctness checking only.
# -----------------------------------------------------------------------------
def _reference_forward(x, p, *, stride, width, scale):
    prec = jax.lax.Precision.HIGHEST

    def conv(v, w, s=1, pad=0):
        return jax.lax.conv_general_dilated(
            v, w, window_strides=(s, s), padding=[(pad, pad), (pad, pad)],
            dimension_numbers=("NCHW", "OIHW", "NCHW"), precision=prec)

    def bn(v, s_, b_):
        return v * s_[None, :, None, None] + b_[None, :, None, None]

    act = lambda v: jnp.clip(v, 0.0, 20.0)   # module's ReLU := Hardtanh(0, 20)

    out = act(bn(conv(x, p["conv1_w"], s=stride), p["bn1_s"], p["bn1_b"]))
    spx = [out[:, i * width:(i + 1) * width] for i in range(scale)]
    pieces, sp = [], None
    for i in range(scale):
        sp = spx[i] if i == 0 else sp + spx[i]
        sp = act(bn(conv(sp, p["convs_w"][i], pad=1),
                    p["bns_s"][i], p["bns_b"][i]))
        pieces.append(sp)
    out = jnp.concatenate(pieces, axis=1)
    out = bn(conv(out, p["conv3_w"]), p["bn3_s"], p["bn3_b"])
    if p["shortcut_w"] is not None:
        residual = bn(conv(x, p["shortcut_w"], s=stride),
                      p["sbn_s"], p["sbn_b"])
    else:
        residual = x
    return act(out + residual)


# -----------------------------------------------------------------------------
# Deterministic parameter construction (PyTorch OIHW shapes, eval-mode BN).
# -----------------------------------------------------------------------------
def _bn_fold(key, c):
    k1, k2, k3, k4 = jax.random.split(key, 4)
    gamma = jax.random.uniform(k1, (c,), minval=0.5, maxval=1.5)
    beta = jax.random.normal(k2, (c,)) * 0.1
    mean = jax.random.normal(k3, (c,)) * 0.1
    var = jax.random.uniform(k4, (c,), minval=0.5, maxval=1.5)
    s = gamma / jnp.sqrt(var + 1e-5)
    b = beta - mean * s
    return s.astype(jnp.float32), b.astype(jnp.float32)


def make_params(key, *, expansion, in_planes, planes, stride, base_width, scale):
    width = int(math.floor(planes * (base_width / 64.0)))
    ks = jax.random.split(key, 16)
    p = {}
    p["conv1_w"] = (jax.random.normal(ks[0], (width * scale, in_planes, 1, 1))
                    / math.sqrt(in_planes)).astype(jnp.float32)
    p["bn1_s"], p["bn1_b"] = _bn_fold(ks[1], width * scale)
    p["convs_w"], p["bns_s"], p["bns_b"] = [], [], []
    for i in range(scale):
        w = (jax.random.normal(ks[2 + i], (width, width, 3, 3))
             / math.sqrt(9 * width)).astype(jnp.float32)
        s, b = _bn_fold(ks[6 + i], width)
        p["convs_w"].append(w)
        p["bns_s"].append(s)
        p["bns_b"].append(b)
    p["conv3_w"] = (jax.random.normal(
        ks[10], (planes * expansion, width * scale, 1, 1))
        / math.sqrt(width * scale)).astype(jnp.float32)
    p["bn3_s"], p["bn3_b"] = _bn_fold(ks[11], planes * expansion)
    if stride != 1 or in_planes != expansion * planes:
        p["shortcut_w"] = (jax.random.normal(
            ks[12], (planes * expansion, in_planes, 1, 1))
            / math.sqrt(in_planes)).astype(jnp.float32)
        p["sbn_s"], p["sbn_b"] = _bn_fold(ks[13], planes * expansion)
    else:
        p["shortcut_w"] = None
        p["sbn_s"] = p["sbn_b"] = None
    return p, width


if __name__ == "__main__":
    key = jax.random.PRNGKey(0)
    kx, kp, kx2, kp2 = jax.random.split(key, 4)

    # Config A: BasicBlockERes2NetV2(expansion=2, in_planes=16, planes=32,
    #           stride=1, base_width=26, scale=2) -> width=13, conv shortcut.
    expansion, in_planes, planes = 2, 16, 32
    stride, base_width, scale = 1, 26, 2
    n, h, w = 2, 16, 16

    x = jax.random.normal(kx, (n, in_planes, h, w), dtype=jnp.float32)  # NCHW
    params, width = make_params(
        kp, expansion=expansion, in_planes=in_planes, planes=planes,
        stride=stride, base_width=base_width, scale=scale)
    ref = jax.block_until_ready(
        _reference_forward(x, params, stride=stride, width=width, scale=scale))

    # (1) f32 compute, batch folded into ONE fat lane step (v5e/v6e sweet spot)
    fwd_f32 = jax.jit(functools.partial(
        basic_block_eres2netv2_forward, stride=stride, width=width,
        scale=scale, compute_dtype=jnp.float32, lane_groups=1))
    out = jax.block_until_ready(fwd_f32(x, params))
    assert out.shape == (n, planes * expansion, h, w), out.shape
    assert jnp.allclose(out, ref, atol=1e-3, rtol=1e-3), float(
        jnp.max(jnp.abs(out - ref)))

    # (2) f32 compute, batch split into 2 "parallel" lane groups (v7x: 2 TCs)
    fwd_2tc = jax.jit(functools.partial(
        basic_block_eres2netv2_forward, stride=stride, width=width,
        scale=scale, compute_dtype=jnp.float32, lane_groups=2))
    out2 = jax.block_until_ready(fwd_2tc(x, params))
    assert jnp.allclose(out2, ref, atol=1e-3, rtol=1e-3), float(
        jnp.max(jnp.abs(out2 - ref)))

    # (3) default bf16 matmul-input variant (f32 accumulation), loose tolerance
    fwd_bf16 = jax.jit(functools.partial(
        basic_block_eres2netv2_forward, stride=stride, width=width,
        scale=scale))
    out_bf = jax.block_until_ready(fwd_bf16(x, params))
    assert jnp.allclose(out_bf, ref, atol=0.5, rtol=0.1), float(
        jnp.max(jnp.abs(out_bf - ref)))

    # Config B: identity shortcut (in_planes == expansion*planes, stride=1)
    in_planes_b = expansion * planes
    x_b = jax.random.normal(kx2, (n, in_planes_b, h, w), dtype=jnp.float32)
    params_b, width_b = make_params(
        kp2, expansion=expansion, in_planes=in_planes_b, planes=planes,
        stride=1, base_width=base_width, scale=scale)
    ref_b = jax.block_until_ready(
        _reference_forward(x_b, params_b, stride=1, width=width_b, scale=scale))
    fwd_b = jax.jit(functools.partial(
        basic_block_eres2netv2_forward, stride=1, width=width_b, scale=scale,
        compute_dtype=jnp.float32))
    out_b = jax.block_until_ready(fwd_b(x_b, params_b))
    assert jnp.allclose(out_b, ref_b, atol=1e-3, rtol=1e-3), float(
        jnp.max(jnp.abs(out_b - ref_b)))

    print("KERNEL_OK")
</pallas_src>

<mosaic_0001>
module attributes {stable_mosaic.version = 11 : i64} {
  func.func @_block_kernel(%arg0: i32, %arg1: memref<16x768xf32, #tpu.memory_space<vmem>>, %arg2: memref<1x768xf32, #tpu.memory_space<vmem>>, %arg3: memref<96x16xf32, #tpu.memory_space<vmem>>, %arg4: memref<96x1xf32, #tpu.memory_space<vmem>>, %arg5: memref<2x16x144xf32, #tpu.memory_space<vmem>>, %arg6: memref<2x16x1xf32, #tpu.memory_space<vmem>>, %arg7: memref<64x32xf32, #tpu.memory_space<vmem>>, %arg8: memref<64x1xf32, #tpu.memory_space<vmem>>, %arg9: memref<64x768xf32, #tpu.memory_space<vmem>>, %arg10: memref<144x768xf32, #tpu.memory_space<vmem>>, %arg11: memref<32x768xf32, #tpu.memory_space<vmem>>, %arg12: memref<64x768xf32, #tpu.memory_space<vmem>>) attributes {dimension_semantics = [#tpu.dimension_semantics<parallel>], iteration_bounds = array<i64: 1>, scalar_prefetch = 0 : i64, scratch_operands = 3 : i64, tpu.core_type = #tpu.core_type<tc>, window_params = [{transform_indices = @transform_0, window_bounds = array<i64: 16, 768>}, {transform_indices = @transform_1, window_bounds = array<i64: 1, 768>}, {pipeline_mode = #tpu.pipeline_mode<synchronous>, transform_indices = @transform_2, window_bounds = array<i64: 96, 16>}, {pipeline_mode = #tpu.pipeline_mode<synchronous>, transform_indices = @transform_3, window_bounds = array<i64: 96, 1>}, {pipeline_mode = #tpu.pipeline_mode<synchronous>, transform_indices = @transform_4, window_bounds = array<i64: 2, 16, 144>}, {pipeline_mode = #tpu.pipeline_mode<synchronous>, transform_indices = @transform_5, window_bounds = array<i64: 2, 16, 1>}, {pipeline_mode = #tpu.pipeline_mode<synchronous>, transform_indices = @transform_6, window_bounds = array<i64: 64, 32>}, {pipeline_mode = #tpu.pipeline_mode<synchronous>, transform_indices = @transform_7, window_bounds = array<i64: 64, 1>}, {transform_indices = @transform_8, window_bounds = array<i64: 64, 768>}]} {
    %c0 = arith.constant 0 : index
    %c0_0 = arith.constant 0 : index
    %0 = vector.load %arg1[%c0, %c0_0] : memref<16x768xf32, #tpu.memory_space<vmem>>, vector<16x768xf32>
    %c0_1 = arith.constant 0 : index
    %c0_2 = arith.constant 0 : index
    %1 = vector.load %arg2[%c0_1, %c0_2] : memref<1x768xf32, #tpu.memory_space<vmem>>, vector<1x768xf32>
    %2 = vector.shape_cast %1 : vector<1x768xf32> to vector<1x768xf32>
    %3 = vector.broadcast %2 : vector<1x768xf32> to vector<16x768xf32>
    %c0_3 = arith.constant 0 : index
    %c0_4 = arith.constant 0 : index
    %4 = vector.load %arg3[%c0_3, %c0_4] : memref<96x16xf32, #tpu.memory_space<vmem>>, vector<96x16xf32>
    %cst = arith.constant dense<0.000000e+00> : vector<96x768xf32>
    %5 = tpu.matmul %4, %0, %cst {dimension_numbers = #tpu.dot_dimension_numbers<[1], [0], [0], [1], [0, 0, 1, 1], [], []>} : vector<96x16xf32>, vector<16x768xf32>, vector<96x768xf32> -> vector<96x768xf32>
    %c0_5 = arith.constant 0 : index
    %c0_6 = arith.constant 0 : index
    %6 = vector.load %arg4[%c0_5, %c0_6] : memref<96x1xf32, #tpu.memory_space<vmem>>, vector<96x1xf32>
    %7 = vector.broadcast %6 : vector<96x1xf32> to vector<96x768xf32>
    %8 = arith.addf %5, %7 : vector<96x768xf32>
    %9 = vector.extract_strided_slice %8 {offsets = [32, 0], sizes = [64, 768], strides = [1, 1]} : vector<96x768xf32> to vector<64x768xf32>
    %c0_7 = arith.constant 0 : index
    %c0_8 = arith.constant 0 : index
    %10 = vector.load %arg12[%c0_7, %c0_8] : memref<64x768xf32, #tpu.memory_space<vmem>>, vector<64x768xf32>
    tpu.vector_store %arg12[%c0_7, %c0_8], %9 {strides = array<i32>} : memref<64x768xf32, #tpu.memory_space<vmem>>, vector<64x768xf32>,
    %11 = vector.extract_strided_slice %8 {offsets = [0, 0], sizes = [32, 768], strides = [1, 1]} : vector<96x768xf32> to vector<32x768xf32>
    %cst_9 = arith.constant 0.000000e+00 : f32
    %cst_10 = arith.constant 2.000000e+01 : f32
    %12 = vector.broadcast %cst_9 : f32 to vector<32x768xf32>
    %13 = arith.maximumf %12, %11 : vector<32x768xf32>
    %14 = vector.broadcast %cst_10 : f32 to vector<32x768xf32>
    %15 = arith.minimumf %14, %13 : vector<32x768xf32>
    %16 = vector.extract_strided_slice %15 {offsets = [0, 0], sizes = [16, 768], strides = [1, 1]} : vector<32x768xf32> to vector<16x768xf32>
    %17 = arith.mulf %16, %3 : vector<16x768xf32>
    %c19_i32 = arith.constant 19 : i32
    %18 = tpu.dynamic_rotate %17 by %c19_i32 dim 1 : vector<16x768xf32>, i32 -> vector<16x768xf32>
    %c0_11 = arith.constant 0 : index
    %c0_12 = arith.constant 0 : index
    %19 = vector.load %arg10[%c0_11, %c0_12] : memref<144x768xf32, #tpu.memory_space<vmem>>, vector<16x768xf32>
    tpu.vector_store %arg10[%c0_11, %c0_12], %18 {strides = array<i32>} : memref<144x768xf32, #tpu.memory_space<vmem>>, vector<16x768xf32>,
    %c18_i32 = arith.constant 18 : i32
    %20 = tpu.dynamic_rotate %17 by %c18_i32 dim 1 : vector<16x768xf32>, i32 -> vector<16x768xf32>
    %c16 = arith.constant 16 : index
    %c0_13 = arith.constant 0 : index
    %21 = vector.load %arg10[%c16, %c0_13] : memref<144x768xf32, #tpu.memory_space<vmem>>, vector<16x768xf32>
    tpu.vector_store %arg10[%c16, %c0_13], %20 {strides = array<i32>} : memref<144x768xf32, #tpu.memory_space<vmem>>, vector<16x768xf32>,
    %c17_i32 = arith.constant 17 : i32
    %22 = tpu.dynamic_rotate %17 by %c17_i32 dim 1 : vector<16x768xf32>, i32 -> vector<16x768xf32>
    %c32 = arith.constant 32 : index
    %c0_14 = arith.constant 0 : index
    %23 = vector.load %arg10[%c32, %c0_14] : memref<144x768xf32, #tpu.memory_space<vmem>>, vector<16x768xf32>
    tpu.vector_store %arg10[%c32, %c0_14], %22 {strides = array<i32>} : memref<144x768xf32, #tpu.memory_space<vmem>>, vector<16x768xf32>,
    %c1_i32 = arith.constant 1 : i32
    %24 = tpu.dynamic_rotate %17 by %c1_i32 dim 1 : vector<16x768xf32>, i32 -> vector<16x768xf32>
    %c48 = arith.constant 48 : index
    %c0_15 = arith.constant 0 : index
    %25 = vector.load %arg10[%c48, %c0_15] : memref<144x768xf32, #tpu.memory_space<vmem>>, vector<16x768xf32>
    tpu.vector_store %arg10[%c48, %c0_15], %24 {strides = array<i32>} : memref<144x768xf32, #tpu.memory_space<vmem>>, vector<16x768xf32>,
    %c0_i32 = arith.constant 0 : i32
    %26 = tpu.dynamic_rotate %17 by %c0_i32 dim 1 : vector<16x768xf32>, i32 -> vector<16x768xf32>
    %c64 = arith.constant 64 : index
    %c0_16 = arith.constant 0 : index
    %27 = vector.load %arg10[%c64, %c0_16] : memref<144x768xf32, #tpu.memory_space<vmem>>, vector<16x768xf32>
    tpu.vector_store %arg10[%c64, %c0_16], %26 {strides = array<i32>} : memref<144x768xf32, #tpu.memory_space<vmem>>, vector<16x768xf32>,
    %c767_i32 = arith.constant 767 : i32
    %28 = tpu.dynamic_rotate %17 by %c767_i32 dim 1 : vector<16x768xf32>, i32 -> vector<16x768xf32>
    %c80 = arith.constant 80 : index
    %c0_17 = arith.constant 0 : index
    %29 = vector.load %arg10[%c80, %c0_17] : memref<144x768xf32, #tpu.memory_space<vmem>>, vector<16x768xf32>
    tpu.vector_store %arg10[%c80, %c0_17], %28 {strides = array<i32>} : memref<144x768xf32, #tpu.memory_space<vmem>>, vector<16x768xf32>,
    %c751_i32 = arith.constant 751 : i32
    %30 = tpu.dynamic_rotate %17 by %c751_i32 dim 1 : vector<16x768xf32>, i32 -> vector<16x768xf32>
    %c96 = arith.constant 96 : index
    %c0_18 = arith.constant 0 : index
    %31 = vector.load %arg10[%c96, %c0_18] : memref<144x768xf32, #tpu.memory_space<vmem>>, vector<16x768xf32>
    tpu.vector_store %arg10[%c96, %c0_18], %30 {strides = array<i32>} : memref<144x768xf32, #tpu.memory_space<vmem>>, vector<16x768xf32>,
    %c750_i32 = arith.constant 750 : i32
    %32 = tpu.dynamic_rotate %17 by %c750_i32 dim 1 : vector<16x768xf32>, i32 -> vector<16x768xf32>
    %c112 = arith.constant 112 : index
    %c0_19 = arith.constant 0 : index
    %33 = vector.load %arg10[%c112, %c0_19] : memref<144x768xf32, #tpu.memory_space<vmem>>, vector<16x768xf32>
    tpu.vector_store %arg10[%c112, %c0_19], %32 {strides = array<i32>} : memref<144x768xf32, #tpu.memory_space<vmem>>, vector<16x768xf32>,
    %c749_i32 = arith.constant 749 : i32
    %34 = tpu.dynamic_rotate %17 by %c749_i32 dim 1 : vector<16x768xf32>, i32 -> vector<16x768xf32>
    %c128 = arith.constant 128 : index
    %c0_20 = arith.constant 0 : index
    %35 = vector.load %arg10[%c128, %c0_20] : memref<144x768xf32, #tpu.memory_space<vmem>>, vector<16x768xf32>
    tpu.vector_store %arg10[%c128, %c0_20], %34 {strides = array<i32>} : memref<144x768xf32, #tpu.memory_space<vmem>>, vector<16x768xf32>,
    %c0_21 = arith.constant 0 : index
    %c0_22 = arith.constant 0 : index
    %c0_23 = arith.constant 0 : index
    %36 = vector.load %arg5[%c0_21, %c0_22, %c0_23] : memref<2x16x144xf32, #tpu.memory_space<vmem>>, vector<1x16x144xf32>
    %37 = vector.shape_cast %36 : vector<1x16x144xf32> to vector<16x144xf32>
    %c0_24 = arith.constant 0 : index
    %c0_25 = arith.constant 0 : index
    %38 = vector.load %arg10[%c0_24, %c0_25] : memref<144x768xf32, #tpu.memory_space<vmem>>, vector<144x768xf32>
    %cst_26 = arith.constant dense<0.000000e+00> : vector<16x768xf32>
    %39 = tpu.matmul %37, %38, %cst_26 {dimension_numbers = #tpu.dot_dimension_numbers<[1], [0], [0], [1], [0, 0, 1, 1], [], []>} : vector<16x144xf32>, vector<144x768xf32>, vector<16x768xf32> -> vector<16x768xf32>
    %c0_27 = arith.constant 0 : index
    %c0_28 = arith.constant 0 : index
    %c0_29 = arith.constant 0 : index
    %40 = vector.load %arg6[%c0_27, %c0_28, %c0_29] : memref<2x16x1xf32, #tpu.memory_space<vmem>>, vector<1x16x1xf32>
    %41 = vector.shape_cast %40 : vector<1x16x1xf32> to vector<16x1xf32>
    %42 = vector.broadcast %41 : vector<16x1xf32> to vector<16x768xf32>
    %43 = arith.addf %39, %42 : vector<16x768xf32>
    %cst_30 = arith.constant 0.000000e+00 : f32
    %cst_31 = arith.constant 2.000000e+01 : f32
    %44 = vector.broadcast %cst_30 : f32 to vector<16x768xf32>
    %45 = arith.maximumf %44, %43 : vector<16x768xf32>
    %46 = vector.broadcast %cst_31 : f32 to vector<16x768xf32>
    %47 = arith.minimumf %46, %45 : vector<16x768xf32>
    %48 = arith.mulf %47, %3 : vector<16x768xf32>
    %c0_32 = arith.constant 0 : index
    %c0_33 = arith.constant 0 : index
    %49 = vector.load %arg11[%c0_32, %c0_33] : memref<32x768xf32, #tpu.memory_space<vmem>>, vector<16x768xf32>
    tpu.vector_store %arg11[%c0_32, %c0_33], %48 {strides = array<i32>} : memref<32x768xf32, #tpu.memory_space<vmem>>, vector<16x768xf32>,
    %50 = vector.extract_strided_slice %15 {offsets = [16, 0], sizes = [16, 768], strides = [1, 1]} : vector<32x768xf32> to vector<16x768xf32>
    %51 = arith.mulf %50, %3 : vector<16x768xf32>
    %52 = arith.addf %48, %51 : vector<16x768xf32>
    %c19_i32_34 = arith.constant 19 : i32
    %53 = tpu.dynamic_rotate %52 by %c19_i32_34 dim 1 : vector<16x768xf32>, i32 -> vector<16x768xf32>
    %c0_35 = arith.constant 0 : index
    %c0_36 = arith.constant 0 : index
    %54 = vector.load %arg10[%c0_35, %c0_36] : memref<144x768xf32, #tpu.memory_space<vmem>>, vector<16x768xf32>
    tpu.vector_store %arg10[%c0_35, %c0_36], %53 {strides = array<i32>} : memref<144x768xf32, #tpu.memory_space<vmem>>, vector<16x768xf32>,
    %c18_i32_37 = arith.constant 18 : i32
    %55 = tpu.dynamic_rotate %52 by %c18_i32_37 dim 1 : vector<16x768xf32>, i32 -> vector<16x768xf32>
    %c16_38 = arith.constant 16 : index
    %c0_39 = arith.constant 0 : index
    %56 = vector.load %arg10[%c16_38, %c0_39] : memref<144x768xf32, #tpu.memory_space<vmem>>, vector<16x768xf32>
    tpu.vector_store %arg10[%c16_38, %c0_39], %55 {strides = array<i32>} : memref<144x768xf32, #tpu.memory_space<vmem>>, vector<16x768xf32>,
    %c17_i32_40 = arith.constant 17 : i32
    %57 = tpu.dynamic_rotate %52 by %c17_i32_40 dim 1 : vector<16x768xf32>, i32 -> vector<16x768xf32>
    %c32_41 = arith.constant 32 : index
    %c0_42 = arith.constant 0 : index
    %58 = vector.load %arg10[%c32_41, %c0_42] : memref<144x768xf32, #tpu.memory_space<vmem>>, vector<16x768xf32>
    tpu.vector_store %arg10[%c32_41, %c0_42], %57 {strides = array<i32>} : memref<144x768xf32, #tpu.memory_space<vmem>>, vector<16x768xf32>,
    %c1_i32_43 = arith.constant 1 : i32
    %59 = tpu.dynamic_rotate %52 by %c1_i32_43 dim 1 : vector<16x768xf32>, i32 -> vector<16x768xf32>
    %c48_44 = arith.constant 48 : index
    %c0_45 = arith.constant 0 : index
    %60 = vector.load %arg10[%c48_44, %c0_45] : memref<144x768xf32, #tpu.memory_space<vmem>>, vector<16x768xf32>
    tpu.vector_store %arg10[%c48_44, %c0_45], %59 {strides = array<i32>} : memref<144x768xf32, #tpu.memory_space<vmem>>, vector<16x768xf32>,
    %c0_i32_46 = arith.constant 0 : i32
    %61 = tpu.dynamic_rotate %52 by %c0_i32_46 dim 1 : vector<16x768xf32>, i32 -> vector<16x768xf32>
    %c64_47 = arith.constant 64 : index
    %c0_48 = arith.constant 0 : index
    %62 = vector.load %arg10[%c64_47, %c0_48] : memref<144x768xf32, #tpu.memory_space<vmem>>, vector<16x768xf32>
    tpu.vector_store %arg10[%c64_47, %c0_48], %61 {strides = array<i32>} : memref<144x768xf32, #tpu.memory_space<vmem>>, vector<16x768xf32>,
    %c767_i32_49 = arith.constant 767 : i32
    %63 = tpu.dynamic_rotate %52 by %c767_i32_49 dim 1 : vector<16x768xf32>, i32 -> vector<16x768xf32>
    %c80_50 = arith.constant 80 : index
    %c0_51 = arith.constant 0 : index
    %64 = vector.load %arg10[%c80_50, %c0_51] : memref<144x768xf32, #tpu.memory_space<vmem>>, vector<16x768xf32>
    tpu.vector_store %arg10[%c80_50, %c0_51], %63 {strides = array<i32>} : memref<144x768xf32, #tpu.memory_space<vmem>>, vector<16x768xf32>,
    %c751_i32_52 = arith.constant 751 : i32
    %65 = tpu.dynamic_rotate %52 by %c751_i32_52 dim 1 : vector<16x768xf32>, i32 -> vector<16x768xf32>
    %c96_53 = arith.constant 96 : index
    %c0_54 = arith.constant 0 : index
    %66 = vector.load %arg10[%c96_53, %c0_54] : memref<144x768xf32, #tpu.memory_space<vmem>>, vector<16x768xf32>
    tpu.vector_store %arg10[%c96_53, %c0_54], %65 {strides = array<i32>} : memref<144x768xf32, #tpu.memory_space<vmem>>, vector<16x768xf32>,
    %c750_i32_55 = arith.constant 750 : i32
    %67 = tpu.dynamic_rotate %52 by %c750_i32_55 dim 1 : vector<16x768xf32>, i32 -> vector<16x768xf32>
    %c112_56 = arith.constant 112 : index
    %c0_57 = arith.constant 0 : index
    %68 = vector.load %arg10[%c112_56, %c0_57] : memref<144x768xf32, #tpu.memory_space<vmem>>, vector<16x768xf32>
    tpu.vector_store %arg10[%c112_56, %c0_57], %67 {strides = array<i32>} : memref<144x768xf32, #tpu.memory_space<vmem>>, vector<16x768xf32>,
    %c749_i32_58 = arith.constant 749 : i32
    %69 = tpu.dynamic_rotate %52 by %c749_i32_58 dim 1 : vector<16x768xf32>, i32 -> vector<16x768xf32>
    %c128_59 = arith.constant 128 : index
    %c0_60 = arith.constant 0 : index
    %70 = vector.load %arg10[%c128_59, %c0_60] : memref<144x768xf32, #tpu.memory_space<vmem>>, vector<16x768xf32>
    tpu.vector_store %arg10[%c128_59, %c0_60], %69 {strides = array<i32>} : memref<144x768xf32, #tpu.memory_space<vmem>>, vector<16x768xf32>,
    %c1 = arith.constant 1 : index
    %c0_61 = arith.constant 0 : index
    %c0_62 = arith.constant 0 : index
    %71 = vector.load %arg5[%c1, %c0_61, %c0_62] : memref<2x16x144xf32, #tpu.memory_space<vmem>>, vector<1x16x144xf32>
    %72 = vector.shape_cast %71 : vector<1x16x144xf32> to vector<16x144xf32>
    %c0_63 = arith.constant 0 : index
    %c0_64 = arith.constant 0 : index
    %73 = vector.load %arg10[%c0_63, %c0_64] : memref<144x768xf32, #tpu.memory_space<vmem>>, vector<144x768xf32>
    %cst_65 = arith.constant dense<0.000000e+00> : vector<16x768xf32>
    %74 = tpu.matmul %72, %73, %cst_65 {dimension_numbers = #tpu.dot_dimension_numbers<[1], [0], [0], [1], [0, 0, 1, 1], [], []>} : vector<16x144xf32>, vector<144x768xf32>, vector<16x768xf32> -> vector<16x768xf32>
    %c1_66 = arith.constant 1 : index
    %c0_67 = arith.constant 0 : index
    %c0_68 = arith.constant 0 : index
    %75 = vector.load %arg6[%c1_66, %c0_67, %c0_68] : memref<2x16x1xf32, #tpu.memory_space<vmem>>, vector<1x16x1xf32>
    %76 = vector.shape_cast %75 : vector<1x16x1xf32> to vector<16x1xf32>
    %77 = vector.broadcast %76 : vector<16x1xf32> to vector<16x768xf32>
    %78 = arith.addf %74, %77 : vector<16x768xf32>
    %cst_69 = arith.constant 0.000000e+00 : f32
    %cst_70 = arith.constant 2.000000e+01 : f32
    %79 = vector.broadcast %cst_69 : f32 to vector<16x768xf32>
    %80 = arith.maximumf %79, %78 : vector<16x768xf32>
    %81 = vector.broadcast %cst_70 : f32 to vector<16x768xf32>
    %82 = arith.minimumf %81, %80 : vector<16x768xf32>
    %83 = arith.mulf %82, %3 : vector<16x768xf32>
    %c16_71 = arith.constant 16 : index
    %c0_72 = arith.constant 0 : index
    %84 = vector.load %arg11[%c16_71, %c0_72] : memref<32x768xf32, #tpu.memory_space<vmem>>, vector<16x768xf32>
    tpu.vector_store %arg11[%c16_71, %c0_72], %83 {strides = array<i32>} : memref<32x768xf32, #tpu.memory_space<vmem>>, vector<16x768xf32>,
    %c0_73 = arith.constant 0 : index
    %c0_74 = arith.constant 0 : index
    %85 = vector.load %arg7[%c0_73, %c0_74] : memref<64x32xf32, #tpu.memory_space<vmem>>, vector<64x32xf32>
    %c0_75 = arith.constant 0 : index
    %c0_76 = arith.constant 0 : index
    %86 = vector.load %arg11[%c0_75, %c0_76] : memref<32x768xf32, #tpu.memory_space<vmem>>, vector<32x768xf32>
    %cst_77 = arith.constant dense<0.000000e+00> : vector<64x768xf32>
    %87 = tpu.matmul %85, %86, %cst_77 {dimension_numbers = #tpu.dot_dimension_numbers<[1], [0], [0], [1], [0, 0, 1, 1], [], []>} : vector<64x32xf32>, vector<32x768xf32>, vector<64x768xf32> -> vector<64x768xf32>
    %c0_78 = arith.constant 0 : index
    %c0_79 = arith.constant 0 : index
    %88 = vector.load %arg8[%c0_78, %c0_79] : memref<64x1xf32, #tpu.memory_space<vmem>>, vector<64x1xf32>
    %89 = vector.broadcast %88 : vector<64x1xf32> to vector<64x768xf32>
    %90 = arith.addf %87, %89 : vector<64x768xf32>
    %c0_80 = arith.constant 0 : index
    %c0_81 = arith.constant 0 : index
    %91 = vector.load %arg12[%c0_80, %c0_81] : memref<64x768xf32, #tpu.memory_space<vmem>>, vector<64x768xf32>
    %92 = arith.addf %90, %91 : vector<64x768xf32>
    %cst_82 = arith.constant 0.000000e+00 : f32
    %cst_83 = arith.constant 2.000000e+01 : f32
    %93 = vector.broadcast %cst_82 : f32 to vector<64x768xf32>
    %94 = arith.maximumf %93, %92 : vector<64x768xf32>
    %95 = vector.broadcast %cst_83 : f32 to vector<64x768xf32>
    %96 = arith.minimumf %95, %94 : vector<64x768xf32>
    %c0_84 = arith.constant 0 : index
    %c0_85 = arith.constant 0 : index
    %97 = vector.load %arg9[%c0_84, %c0_85] : memref<64x768xf32, #tpu.memory_space<vmem>>, vector<64x768xf32>
    tpu.vector_store %arg9[%c0_84, %c0_85], %96 {strides = array<i32>} : memref<64x768xf32, #tpu.memory_space<vmem>>, vector<64x768xf32>,
    return
  }
  func.func @transform_0(%arg0: i32) -> (i32, i32) {
    %c0_i32 = arith.constant 0 : i32
    %c0_i32_0 = arith.constant 0 : i32
    return %c0_i32, %arg0 : i32, i32
  }
  func.func @transform_1(%arg0: i32) -> (i32, i32) {
    %c0_i32 = arith.constant 0 : i32
    %c0_i32_0 = arith.constant 0 : i32
    return %c0_i32, %arg0 : i32, i32
  }
  func.func @transform_2(%arg0: i32) -> (i32, i32) {
    %c0_i32 = arith.constant 0 : i32
    %c0_i32_0 = arith.constant 0 : i32
    %c0_i32_1 = arith.constant 0 : i32
    return %c0_i32, %c0_i32_0 : i32, i32
  }
  func.func @transform_3(%arg0: i32) -> (i32, i32) {
    %c0_i32 = arith.constant 0 : i32
    %c0_i32_0 = arith.constant 0 : i32
    %c0_i32_1 = arith.constant 0 : i32
    return %c0_i32, %c0_i32_0 : i32, i32
  }
  func.func @transform_4(%arg0: i32) -> (i32, i32, i32) {
    %c0_i32 = arith.constant 0 : i32
    %c0_i32_0 = arith.constant 0 : i32
    %c0_i32_1 = arith.constant 0 : i32
    %c0_i32_2 = arith.constant 0 : i32
    return %c0_i32, %c0_i32_0, %c0_i32_1 : i32, i32, i32
  }
  func.func @transform_5(%arg0: i32) -> (i32, i32, i32) {
    %c0_i32 = arith.constant 0 : i32
    %c0_i32_0 = arith.constant 0 : i32
    %c0_i32_1 = arith.constant 0 : i32
    %c0_i32_2 = arith.constant 0 : i32
    return %c0_i32, %c0_i32_0, %c0_i32_1 : i32, i32, i32
  }
  func.func @transform_6(%arg0: i32) -> (i32, i32) {
    %c0_i32 = arith.constant 0 : i32
    %c0_i32_0 = arith.constant 0 : i32
    %c0_i32_1 = arith.constant 0 : i32
    return %c0_i32, %c0_i32_0 : i32, i32
  }
  func.func @transform_7(%arg0: i32) -> (i32, i32) {
    %c0_i32 = arith.constant 0 : i32
    %c0_i32_0 = arith.constant 0 : i32
    %c0_i32_1 = arith.constant 0 : i32
    return %c0_i32, %c0_i32_0 : i32, i32
  }
  func.func @transform_8(%arg0: i32) -> (i32, i32) {
    %c0_i32 = arith.constant 0 : i32
    %c0_i32_0 = arith.constant 0 : i32
    return %c0_i32, %arg0 : i32, i32
  }
}

</mosaic_0001>

<llo_original>
// kernel: basic_block_eres2netv2_forward.1
$region0: #{basic_block_eres2netv2_forward.1}
  #allocation0 [shape = 'u32[]', space=smem, size = 0x4, offset = 0x4, fixed_abs, tag = 'smem constant byte address 0x4 - core index']
  #allocation1 [shape = 'u32[144,128]{1,0:T(1,128)}', space=vmem, size = 0x12000, scoped, tag = 'internal scratch']
  #allocation2 [shape = 'f32[144,768]{1,0:T(8,128)}', space=vmem, size = 0x6c000, scoped, tag = 'scratch operand']
  #allocation3 [shape = 'f32[32,768]{1,0:T(8,128)}', space=vmem, size = 0x18000, scoped, tag = 'scratch operand']
  #allocation4 [shape = 'f32[64,768]{1,0:T(8,128)}', space=vmem, size = 0x30000, scoped, tag = 'scratch operand']
  %s0 = inlined_call_operand.vmem [shape: f32[16,768], index: 0, kind: input, shape index: {}]
  %s1 = inlined_call_operand.vmem [shape: f32[1,768], index: 1, kind: input, shape index: {}]
  %s2 = inlined_call_operand.vmem [shape: f32[96,16], index: 2, kind: input, shape index: {}]
  %s3 = inlined_call_operand.vmem [shape: f32[96,1], index: 3, kind: input, shape index: {}]
  %s4 = inlined_call_operand.vmem [shape: f32[2,16,144], index: 4, kind: input, shape index: {}]
  %s5 = inlined_call_operand.vmem [shape: f32[2,16,1], index: 5, kind: input, shape index: {}]
  %s6 = inlined_call_operand.vmem [shape: f32[64,32], index: 6, kind: input, shape index: {}]
  %s7 = inlined_call_operand.vmem [shape: f32[64,1], index: 7, kind: input, shape index: {}]
  %s8 = inlined_call_operand.vmem [shape: f32[64,768], index: 8, kind: output, shape index: {}]
  %s9 = sld [smem:[#allocation0]]
  $region42: #{basic_block_eres2netv2_forward.1} parent=0
    _
  %s11 = ssub.s32 1, %s9
  %s12 = scalar_select 0, %s11, %s9
  // Predicated region
  $region2: #{basic_block_eres2netv2_forward.1} parent=0 // pred_check
    _
  $region3: #{basic_block_eres2netv2_forward.1} parent=0 // pred_check_branch
    %14 = sbr.rel (0) target = $region5
  $region4: #{basic_block_eres2netv2_forward.1} parent=0 // pred_region
    _
  $region5: #{basic_block_eres2netv2_forward.1} parent=0 // pred_fallthru
    _
  // Predicated region
  $region6: #{basic_block_eres2netv2_forward.1} parent=0 // pred_check
    _
  $region7: #{basic_block_eres2netv2_forward.1} parent=0 // pred_check_branch
    %16 = sbr.rel (0) target = $region9
  $region8: #{basic_block_eres2netv2_forward.1} parent=0 // pred_region
    _
  $region9: #{basic_block_eres2netv2_forward.1} parent=0 // pred_fallthru
    _
  // Predicated region
  $region10: #{basic_block_eres2netv2_forward.1} parent=0 // pred_check
    _
  $region11: #{basic_block_eres2netv2_forward.1} parent=0 // pred_check_branch
    %18 = sbr.rel (0) target = $region13
  $region12: #{basic_block_eres2netv2_forward.1} parent=0 // pred_region
    _
  $region13: #{basic_block_eres2netv2_forward.1} parent=0 // pred_fallthru
    _
  // Predicated region
  $region14: #{basic_block_eres2netv2_forward.1} parent=0 // pred_check
    _
  $region15: #{basic_block_eres2netv2_forward.1} parent=0 // pred_check_branch
    %20 = sbr.rel (0) target = $region17
  $region16: #{basic_block_eres2netv2_forward.1} parent=0 // pred_region
    _
  $region17: #{basic_block_eres2netv2_forward.1} parent=0 // pred_fallthru
    _
  // Predicated region
  $region18: #{basic_block_eres2netv2_forward.1} parent=0 // pred_check
    _
  $region19: #{basic_block_eres2netv2_forward.1} parent=0 // pred_check_branch
    %22 = sbr.rel (0) target = $region21
  $region20: #{basic_block_eres2netv2_forward.1} parent=0 // pred_region
    _
  $region21: #{basic_block_eres2netv2_forward.1} parent=0 // pred_fallthru
    _
  // Predicated region
  $region22: #{basic_block_eres2netv2_forward.1} parent=0 // pred_check
    _
  $region23: #{basic_block_eres2netv2_forward.1} parent=0 // pred_check_branch
    %24 = sbr.rel (0) target = $region25
  $region24: #{basic_block_eres2netv2_forward.1} parent=0 // pred_region
    _
  $region25: #{basic_block_eres2netv2_forward.1} parent=0 // pred_fallthru
    _
  // Predicated region
  $region26: #{basic_block_eres2netv2_forward.1} parent=0 // pred_check
    _
  $region27: #{basic_block_eres2netv2_forward.1} parent=0 // pred_check_branch
    %26 = sbr.rel (0) target = $region29
  $region28: #{basic_block_eres2netv2_forward.1} parent=0 // pred_region
    _
  $region29: #{basic_block_eres2netv2_forward.1} parent=0 // pred_fallthru
    _
  // Predicated region
  $region30: #{basic_block_eres2netv2_forward.1} parent=0 // pred_check
    _
  $region31: #{basic_block_eres2netv2_forward.1} parent=0 // pred_check_branch
    %28 = sbr.rel (0) target = $region33
  $region32: #{basic_block_eres2netv2_forward.1} parent=0 // pred_region
    _
  $region33: #{basic_block_eres2netv2_forward.1} parent=0 // pred_fallthru
    _
  %v29 = vld [vmem:[%s0] sm:$0xff]
  %v30 = vld [vmem:[%s0 + $0x8] sm:$0xff]
  %v31 = vld [vmem:[%s0 + $0x10] sm:$0xff]
  %v32 = vld [vmem:[%s0 + $0x18] sm:$0xff]
  %v33 = vld [vmem:[%s0 + $0x20] sm:$0xff]
  %v34 = vld [vmem:[%s0 + $0x28] sm:$0xff]
  %v35 = vld [vmem:[%s0 + $0x30] sm:$0xff]
  %v36 = vld [vmem:[%s0 + $0x38] sm:$0xff]
  %v37 = vld [vmem:[%s0 + $0x40] sm:$0xff]
  %v38 = vld [vmem:[%s0 + $0x48] sm:$0xff]
  %v39 = vld [vmem:[%s0 + $0x50] sm:$0xff]
  %v40 = vld [vmem:[%s0 + $0x58] sm:$0xff]
  %v41 = vld [vmem:[%s1] sm:$0x3f]
  %v43 = vlaneseq
  %v44 = vshrl.u32 %v43, 7
  %v45 = vsub.s32 0, %v44
  %v46 = vrot.slane %v41, %v45
  %v47 = vlaneseq
  %v48 = vshrl.u32 %v47, 7
  %v49 = vsub.s32 1, %v48
  %v50 = vrot.slane %v41, %v49
  %v51 = vlaneseq
  %v52 = vshrl.u32 %v51, 7
  %v53 = vsub.s32 2, %v52
  %v54 = vrot.slane %v41, %v53
  %v55 = vlaneseq
  %v56 = vshrl.u32 %v55, 7
  %v57 = vsub.s32 3, %v56
  %v58 = vrot.slane %v41, %v57
  %v59 = vlaneseq
  %v60 = vshrl.u32 %v59, 7
  %v61 = vsub.s32 4, %v60
  %v62 = vrot.slane %v41, %v61
  %v63 = vlaneseq
  %v64 = vshrl.u32 %v63, 7
  %v65 = vsub.s32 5, %v64
  %v66 = vrot.slane %v41, %v65
  %v73 = vld [vmem:[%s2] sm:$0xff]
  %v74 = vld [vmem:[%s2 + $0x8] sm:$0xff]
  %v75 = vld [vmem:[%s2 + $0x10] sm:$0xff]
  %v76 = vld [vmem:[%s2 + $0x18] sm:$0xff]
  %v77 = vld [vmem:[%s2 + $0x20] sm:$0xff]
  %v78 = vld [vmem:[%s2 + $0x28] sm:$0xff]
  %v79 = vld [vmem:[%s2 + $0x30] sm:$0xff]
  %v80 = vld [vmem:[%s2 + $0x38] sm:$0xff]
  %v81 = vld [vmem:[%s2 + $0x40] sm:$0xff]
  %v82 = vld [vmem:[%s2 + $0x48] sm:$0xff]
  %v83 = vld [vmem:[%s2 + $0x50] sm:$0xff]
  %v84 = vld [vmem:[%s2 + $0x58] sm:$0xff]
  %v85 = vld [vmem:[%s3] sm:$0xff]
  %v86 = vld [vmem:[%s3 + $0x8] sm:$0xff]
  %v87 = vld [vmem:[%s3 + $0x10] sm:$0xff]
  %v88 = vld [vmem:[%s3 + $0x18] sm:$0xff]
  %v89 = vld [vmem:[%s3 + $0x20] sm:$0xff]
  %v90 = vld [vmem:[%s3 + $0x28] sm:$0xff]
  %v91 = vld [vmem:[%s3 + $0x30] sm:$0xff]
  %v92 = vld [vmem:[%s3 + $0x38] sm:$0xff]
  %v93 = vld [vmem:[%s3 + $0x40] sm:$0xff]
  %v94 = vld [vmem:[%s3 + $0x48] sm:$0xff]
  %v95 = vld [vmem:[%s3 + $0x50] sm:$0xff]
  %v96 = vld [vmem:[%s3 + $0x58] sm:$0xff]
  %98 = vset.pattern.permute.xlu0 0
  %99 = vperm.xlu0 %98, %v85
  %v100 = vpop.permute.xlu0 %99
  %103 = vset.pattern.permute.xlu0 0
  %104 = vperm.xlu0 %103, %v86
  %v105 = vpop.permute.xlu0 %104
  %108 = vset.pattern.permute.xlu0 0
  %109 = vperm.xlu0 %108, %v87
  %v110 = vpop.permute.xlu0 %109
  %113 = vset.pattern.permute.xlu0 0
  %114 = vperm.xlu0 %113, %v88
  %v115 = vpop.permute.xlu0 %114
  %118 = vset.pattern.permute.xlu0 0
  %119 = vperm.xlu0 %118, %v89
  %v120 = vpop.permute.xlu0 %119
  %123 = vset.pattern.permute.xlu0 0
  %124 = vperm.xlu0 %123, %v90
  %v125 = vpop.permute.xlu0 %124
  %128 = vset.pattern.permute.xlu0 0
  %129 = vperm.xlu0 %128, %v91
  %v130 = vpop.permute.xlu0 %129
  %133 = vset.pattern.permute.xlu0 0
  %134 = vperm.xlu0 %133, %v92
  %v135 = vpop.permute.xlu0 %134
  %138 = vset.pattern.permute.xlu0 0
  %139 = vperm.xlu0 %138, %v93
  %v140 = vpop.permute.xlu0 %139
  %143 = vset.pattern.permute.xlu0 0
  %144 = vperm.xlu0 %143, %v94
  %v145 = vpop.permute.xlu0 %144
  %148 = vset.pattern.permute.xlu0 0
  %149 = vperm.xlu0 %148, %v95
  %v150 = vpop.permute.xlu0 %149
  %153 = vset.pattern.permute.xlu0 0
  %154 = vperm.xlu0 %153, %v96
  %v155 = vpop.permute.xlu0 %154
  %vm157 = vcmask 130048
  %v159 = vsel %vm157, %v73, 0
  %v162 = vsel %vm157, %v74, 0
  %v165 = vsel %vm157, %v75, 0
  %v168 = vsel %vm157, %v76, 0
  %v171 = vsel %vm157, %v77, 0
  %v174 = vsel %vm157, %v78, 0
  %v177 = vsel %vm157, %v79, 0
  %v180 = vsel %vm157, %v80, 0
  %v183 = vsel %vm157, %v81, 0
  %v186 = vsel %vm157, %v82, 0
  %v189 = vsel %vm157, %v83, 0
  %v192 = vsel %vm157, %v84, 0
  %194 = vmatprep.subr.mxu0 %v30
  %195 = vmatpush1.msra.mxu0 %v29
  %196 = vmatprep.subr.mxu0 %v36
  %197 = vmatpush1.msra.mxu0 %v35
  %198 = vmatprep.subr.mxu0 0.0
  %199 = vmatpush1.msra.mxu0 0.0
  %200 = vmatprep.subr.mxu0 0.0
  %201 = vmatpush1.msra.mxu0 0.0
  %202 = vmatprep.subr.mxu0 0.0
  %203 = vmatpush1.msra.mxu0 0.0
  %204 = vmatprep.subr.mxu0 0.0
  %205 = vmatpush1.msra.mxu0 0.0
  %206 = vmatprep.subr.mxu0 0.0
  %207 = vmatpush1.msra.mxu0 0.0
  %208 = vmatprep.subr.mxu0 0.0
  %209 = vmatpush1.msra.mxu0 0.0
  %210 = vmatprep.subr.mxu0 0.0
  %211 = vmatpush1.msra.mxu0 0.0
  %212 = vmatprep.subr.mxu0 0.0
  %213 = vmatpush1.msra.mxu0 0.0
  %214 = vmatprep.subr.mxu0 0.0
  %215 = vmatpush1.msra.mxu0 0.0
  %216 = vmatprep.subr.mxu0 0.0
  %217 = vmatpush1.msra.mxu0 0.0
  %218 = vmatprep.subr.mxu0 0.0
  %219 = vmatpush1.msra.mxu0 0.0
  %220 = vmatprep.subr.mxu0 0.0
  %221 = vmatpush1.msra.mxu0 0.0
  %222 = vmatprep.subr.mxu0 0.0
  %223 = vmatpush1.msra.mxu0 0.0
  %224 = vmatprep.subr.mxu0 0.0
  %225 = vmatpush1.msra.mxu0 0.0
  %226 = vmatprep.subr.mxu0 0.0
  %227 = vmatpush1.msra.mxu0 0.0
  %228 = vmatprep.subr.mxu0 0.0
  %229 = vmatpush1.msra.mxu0 0.0
  %230 = vmatprep.subr.mxu0 0.0
  %231 = vmatpush1.msra.mxu0 0.0
  %232 = vmatprep.subr.mxu0 0.0
  %233 = vmatpush1.msra.mxu0 0.0
  %234 = vmatprep.subr.mxu0 0.0
  %235 = vmatpush1.msra.mxu0 0.0
  %236 = vmatprep.subr.mxu0 0.0
  %237 = vmatpush1.msra.mxu0 0.0
  %238 = vmatprep.subr.mxu0 0.0
  %239 = vmatpush1.msra.mxu0 0.0
  %240 = vmatprep.subr.mxu0 0.0
  %241 = vmatpush1.msra.mxu0 0.0
  %242 = vmatprep.subr.mxu0 0.0
  %243 = vmatpush1.msra.mxu0 0.0
  %244 = vmatprep.subr.mxu0 0.0
  %245 = vmatpush1.msra.mxu0 0.0
  %246 = vmatprep.subr.mxu0 0.0
  %247 = vmatpush1.msra.mxu0 0.0
  %248 = vmatprep.subr.mxu0 0.0
  %249 = vmatpush1.msra.mxu0 0.0
  %250 = vmatprep.subr.mxu0 0.0
  %251 = vmatpush1.msra.mxu0 0.0
  %252 = vmatprep.subr.mxu0 0.0
  %253 = vmatpush1.msra.mxu0 0.0
  %254 = vmatprep.subr.mxu0 0.0
  %255 = vmatpush1.msra.mxu0 0.0
  %256 = vmatprep.subr.mxu0 0.0
  %257 = vmatpush1.msra.mxu0 0.0
  %258 = vmatprep.mubr.f32.mxu0 0.0
  %259 = vmatmul.mubr.f32.gmra.mrb[0].mxu0 %v159
  %v260 = vpop.f32.mrb[0].mxu0
  %v261 = vadd.f32 %v100, %v260
  %v262 = vpop.f32.mrb[0].mxu0
  %v263 = vadd.f32 %v100, %v262
  %264 = vmatprep.mubr.f32.mxu0 0.0
  %265 = vmatmul.mubr.f32.gmra.mrb[0].mxu0 %v162
  %v266 = vpop.f32.mrb[0].mxu0
  %v267 = vadd.f32 %v105, %v266
  %v268 = vpop.f32.mrb[0].mxu0
  %v269 = vadd.f32 %v105, %v268
  %270 = vmatprep.mubr.f32.mxu0 0.0
  %271 = vmatmul.mubr.f32.gmra.mrb[0].mxu0 %v165
  %v272 = vpop.f32.mrb[0].mxu0
  %v273 = vadd.f32 %v110, %v272
  %v274 = vpop.f32.mrb[0].mxu0
  %v275 = vadd.f32 %v110, %v274
  %276 = vmatprep.mubr.f32.mxu0 0.0
  %277 = vmatmul.mubr.f32.gmra.mrb[0].mxu0 %v168
  %v278 = vpop.f32.mrb[0].mxu0
  %v279 = vadd.f32 %v115, %v278
  %v280 = vpop.f32.mrb[0].mxu0
  %v281 = vadd.f32 %v115, %v280
  %282 = vmatprep.mubr.f32.mxu0 0.0
  %283 = vmatmul.mubr.f32.gmra.mrb[0].mxu0 %v171
  %v284 = vpop.f32.mrb[0].mxu0
  %v285 = vadd.f32 %v120, %v284
  %v286 = vpop.f32.mrb[0].mxu0
  %v287 = vadd.f32 %v120, %v286
  %288 = vmatprep.mubr.f32.mxu0 0.0
  %289 = vmatmul.mubr.f32.gmra.mrb[0].mxu0 %v174
  %v290 = vpop.f32.mrb[0].mxu0
  %v291 = vadd.f32 %v125, %v290
  %v292 = vpop.f32.mrb[0].mxu0
  %v293 = vadd.f32 %v125, %v292
  %294 = vmatprep.mubr.f32.mxu0 0.0
  %295 = vmatmul.mubr.f32.gmra.mrb[0].mxu0 %v177
  %v296 = vpop.f32.mrb[0].mxu0
  %v297 = vadd.f32 %v130, %v296
  %v298 = vpop.f32.mrb[0].mxu0
  %v299 = vadd.f32 %v130, %v298
  %300 = vmatprep.mubr.f32.mxu0 0.0
  %301 = vmatmul.mubr.f32.gmra.mrb[0].mxu0 %v180
  %v302 = vpop.f32.mrb[0].mxu0
  %v303 = vadd.f32 %v135, %v302
  %v304 = vpop.f32.mrb[0].mxu0
  %v305 = vadd.f32 %v135, %v304
  %306 = vmatprep.mubr.f32.mxu0 0.0
  %307 = vmatmul.mubr.f32.gmra.mrb[0].mxu0 %v183
  %v308 = vpop.f32.mrb[0].mxu0
  %v309 = vadd.f32 %v140, %v308
  %v310 = vpop.f32.mrb[0].mxu0
  %v311 = vadd.f32 %v140, %v310
  %312 = vmatprep.mubr.f32.mxu0 0.0
  %313 = vmatmul.mubr.f32.gmra.mrb[0].mxu0 %v186
  %v314 = vpop.f32.mrb[0].mxu0
  %v315 = vadd.f32 %v145, %v314
  %v316 = vpop.f32.mrb[0].mxu0
  %v317 = vadd.f32 %v145, %v316
  %318 = vmatprep.mubr.f32.mxu0 0.0
  %319 = vmatmul.mubr.f32.gmra.mrb[0].mxu0 %v189
  %v320 = vpop.f32.mrb[0].mxu0
  %v321 = vadd.f32 %v150, %v320
  %v322 = vpop.f32.mrb[0].mxu0
  %v323 = vadd.f32 %v150, %v322
  %324 = vmatprep.mubr.f32.mxu0 0.0
  %325 = vmatmul.mubr.f32.gmra.mrb[0].mxu0 %v192
  %v326 = vpop.f32.mrb[0].mxu0
  %v327 = vadd.f32 %v155, %v326
  %v328 = vpop.f32.mrb[0].mxu0
  %v329 = vadd.f32 %v155, %v328
  %330 = vdwg.mxu0
  %331 = vmatprep.subr.mxu0 %v32
  %332 = vmatpush1.msra.mxu0 %v31
  %333 = vmatprep.subr.mxu0 %v38
  %334 = vmatpush1.msra.mxu0 %v37
  %335 = vmatprep.subr.mxu0 0.0
  %336 = vmatpush1.msra.mxu0 0.0
  %337 = vmatprep.subr.mxu0 0.0
  %338 = vmatpush1.msra.mxu0 0.0
  %339 = vmatprep.subr.mxu0 0.0
  %340 = vmatpush1.msra.mxu0 0.0
  %341 = vmatprep.subr.mxu0 0.0
  %342 = vmatpush1.msra.mxu0 0.0
  %343 = vmatprep.subr.mxu0 0.0
  %344 = vmatpush1.msra.mxu0 0.0
  %345 = vmatprep.subr.mxu0 0.0
  %346 = vmatpush1.msra.mxu0 0.0
  %347 = vmatprep.subr.mxu0 0.0
  %348 = vmatpush1.msra.mxu0 0.0
  %349 = vmatprep.subr.mxu0 0.0
  %350 = vmatpush1.msra.mxu0 0.0
  %351 = vmatprep.subr.mxu0 0.0
  %352 = vmatpush1.msra.mxu0 0.0
  %353 = vmatprep.subr.mxu0 0.0
  %354 = vmatpush1.msra.mxu0 0.0
  %355 = vmatprep.subr.mxu0 0.0
  %356 = vmatpush1.msra.mxu0 0.0
  %357 = vmatprep.subr.mxu0 0.0
  %358 = vmatpush1.msra.mxu0 0.0
  %359 = vmatprep.subr.mxu0 0.0
  %360 = vmatpush1.msra.mxu0 0.0
  %361 = vmatprep.subr.mxu0 0.0
  %362 = vmatpush1.msra.mxu0 0.0
  %363 = vmatprep.subr.mxu0 0.0
  %364 = vmatpush1.msra.mxu0 0.0
  %365 = vmatprep.subr.mxu0 0.0
  %366 = vmatpush1.msra.mxu0 0.0
  %367 = vmatprep.subr.mxu0 0.0
  %368 = vmatpush1.msra.mxu0 0.0
  %369 = vmatprep.subr.mxu0 0.0
  %370 = vmatpush1.msra.mxu0 0.0
  %371 = vmatprep.subr.mxu0 0.0
  %372 = vmatpush1.msra.mxu0 0.0
  %373 = vmatprep.subr.mxu0 0.0
  %374 = vmatpush1.msra.mxu0 0.0
  %375 = vmatprep.subr.mxu0 0.0
  %376 = vmatpush1.msra.mxu0 0.0
  %377 = vmatprep.subr.mxu0 0.0
  %378 = vmatpush1.msra.mxu0 0.0
  %379 = vmatprep.subr.mxu0 0.0
  %380 = vmatpush1.msra.mxu0 0.0
  %381 = vmatprep.subr.mxu0 0.0
  %382 = vmatpush1.msra.mxu0 0.0
  %383 = vmatprep.subr.mxu0 0.0
  %384 = vmatpush1.msra.mxu0 0.0
  %385 = vmatprep.subr.mxu0 0.0
  %386 = vmatpush1.msra.mxu0 0.0
  %387 = vmatprep.subr.mxu0 0.0
  %388 = vmatpush1.msra.mxu0 0.0
  %389 = vmatprep.subr.mxu0 0.0
  %390 = vmatpush1.msra.mxu0 0.0
  %391 = vmatprep.subr.mxu0 0.0
  %392 = vmatpush1.msra.mxu0 0.0
  %393 = vmatprep.subr.mxu0 0.0
  %394 = vmatpush1.msra.mxu0 0.0
  %395 = vmatprep.mubr.f32.mxu0 0.0
  %396 = vmatmul.mubr.f32.gmra.mrb[0].mxu0 %v159
  %v397 = vpop.f32.mrb[0].mxu0
  %v398 = vadd.f32 %v100, %v397
  %v399 = vpop.f32.mrb[0].mxu0
  %v400 = vadd.f32 %v100, %v399
  %401 = vmatprep.mubr.f32.mxu0 0.0
  %402 = vmatmul.mubr.f32.gmra.mrb[0].mxu0 %v162
  %v403 = vpop.f32.mrb[0].mxu0
  %v404 = vadd.f32 %v105, %v403
  %v405 = vpop.f32.mrb[0].mxu0
  %v406 = vadd.f32 %v105, %v405
  %407 = vmatprep.mubr.f32.mxu0 0.0
  %408 = vmatmul.mubr.f32.gmra.mrb[0].mxu0 %v165
  %v409 = vpop.f32.mrb[0].mxu0
  %v410 = vadd.f32 %v110, %v409
  %v411 = vpop.f32.mrb[0].mxu0
  %v412 = vadd.f32 %v110, %v411
  %413 = vmatprep.mubr.f32.mxu0 0.0
  %414 = vmatmul.mubr.f32.gmra.mrb[0].mxu0 %v168
  %v415 = vpop.f32.mrb[0].mxu0
  %v416 = vadd.f32 %v115, %v415
  %v417 = vpop.f32.mrb[0].mxu0
  %v418 = vadd.f32 %v115, %v417
  %419 = vmatprep.mubr.f32.mxu0 0.0
  %420 = vmatmul.mubr.f32.gmra.mrb[0].mxu0 %v171
  %v421 = vpop.f32.mrb[0].mxu0
  %v422 = vadd.f32 %v120, %v421
  %v423 = vpop.f32.mrb[0].mxu0
  %v424 = vadd.f32 %v120, %v423
  %425 = vmatprep.mubr.f32.mxu0 0.0
  %426 = vmatmul.mubr.f32.gmra.mrb[0].mxu0 %v174
  %v427 = vpop.f32.mrb[0].mxu0
  %v428 = vadd.f32 %v125, %v427
  %v429 = vpop.f32.mrb[0].mxu0
  %v430 = vadd.f32 %v125, %v429
  %431 = vmatprep.mubr.f32.mxu0 0.0
  %432 = vmatmul.mubr.f32.gmra.mrb[0].mxu0 %v177
  %v433 = vpop.f32.mrb[0].mxu0
  %v434 = vadd.f32 %v130, %v433
  %v435 = vpop.f32.mrb[0].mxu0
  %v436 = vadd.f32 %v130, %v435
  %437 = vmatprep.mubr.f32.mxu0 0.0
  %438 = vmatmul.mubr.f32.gmra.mrb[0].mxu0 %v180
  %v439 = vpop.f32.mrb[0].mxu0
  %v440 = vadd.f32 %v135, %v439
  %v441 = vpop.f32.mrb[0].mxu0
  %v442 = vadd.f32 %v135, %v441
  %443 = vmatprep.mubr.f32.mxu0 0.0
  %444 = vmatmul.mubr.f32.gmra.mrb[0].mxu0 %v183
  %v445 = vpop.f32.mrb[0].mxu0
  %v446 = vadd.f32 %v140, %v445
  %v447 = vpop.f32.mrb[0].mxu0
  %v448 = vadd.f32 %v140, %v447
  %449 = vmatprep.mubr.f32.mxu0 0.0
  %450 = vmatmul.mubr.f32.gmra.mrb[0].mxu0 %v186
  %v451 = vpop.f32.mrb[0].mxu0
  %v452 = vadd.f32 %v145, %v451
  %v453 = vpop.f32.mrb[0].mxu0
  %v454 = vadd.f32 %v145, %v453
  %455 = vmatprep.mubr.f32.mxu0 0.0
  %456 = vmatmul.mubr.f32.gmra.mrb[0].mxu0 %v189
  %v457 = vpop.f32.mrb[0].mxu0
  %v458 = vadd.f32 %v150, %v457
  %v459 = vpop.f32.mrb[0].mxu0
  %v460 = vadd.f32 %v150, %v459
  %461 = vmatprep.mubr.f32.mxu0 0.0
  %462 = vmatmul.mubr.f32.gmra.mrb[0].mxu0 %v192
  %v463 = vpop.f32.mrb[0].mxu0
  %v464 = vadd.f32 %v155, %v463
  %v465 = vpop.f32.mrb[0].mxu0
  %v466 = vadd.f32 %v155, %v465
  %467 = vdwg.mxu0
  %468 = vmatprep.subr.mxu0 %v34
  %469 = vmatpush1.msra.mxu0 %v33
  %470 = vmatprep.subr.mxu0 %v40
  %471 = vmatpush1.msra.mxu0 %v39
  %472 = vmatprep.subr.mxu0 0.0
  %473 = vmatpush1.msra.mxu0 0.0
  %474 = vmatprep.subr.mxu0 0.0
  %475 = vmatpush1.msra.mxu0 0.0
  %476 = vmatprep.subr.mxu0 0.0
  %477 = vmatpush1.msra.mxu0 0.0
  %478 = vmatprep.subr.mxu0 0.0
  %479 = vmatpush1.msra.mxu0 0.0
  %480 = vmatprep.subr.mxu0 0.0
  %481 = vmatpush1.msra.mxu0 0.0
  %482 = vmatprep.subr.mxu0 0.0
  %483 = vmatpush1.msra.mxu0 0.0
  %484 = vmatprep.subr.mxu0 0.0
  %485 = vmatpush1.msra.mxu0 0.0
  %486 = vmatprep.subr.mxu0 0.0
  %487 = vmatpush1.msra.mxu0 0.0
  %488 = vmatprep.subr.mxu0 0.0
  %489 = vmatpush1.msra.mxu0 0.0
  %490 = vmatprep.subr.mxu0 0.0
  %491 = vmatpush1.msra.mxu0 0.0
  %492 = vmatprep.subr.mxu0 0.0
  %493 = vmatpush1.msra.mxu0 0.0
  %494 = vmatprep.subr.mxu0 0.0
  %495 = vmatpush1.msra.mxu0 0.0
  %496 = vmatprep.subr.mxu0 0.0
  %497 = vmatpush1.msra.mxu0 0.0
  %498 = vmatprep.subr.mxu0 0.0
  %499 = vmatpush1.msra.mxu0 0.0
  %500 = vmatprep.subr.mxu0 0.0
  %501 = vmatpush1.msra.mxu0 0.0
  %502 = vmatprep.subr.mxu0 0.0
  %503 = vmatpush1.msra.mxu0 0.0
  %504 = vmatprep.subr.mxu0 0.0
  %505 = vmatpush1.msra.mxu0 0.0
  %506 = vmatprep.subr.mxu0 0.0
  %507 = vmatpush1.msra.mxu0 0.0
  %508 = vmatprep.subr.mxu0 0.0
  %509 = vmatpush1.msra.mxu0 0.0
  %510 = vmatprep.subr.mxu0 0.0
  %511 = vmatpush1.msra.mxu0 0.0
  %512 = vmatprep.subr.mxu0 0.0
  %513 = vmatpush1.msra.mxu0 0.0
  %514 = vmatprep.subr.mxu0 0.0
  %515 = vmatpush1.msra.mxu0 0.0
  %516 = vmatprep.subr.mxu0 0.0
  %517 = vmatpush1.msra.mxu0 0.0
  %518 = vmatprep.subr.mxu0 0.0
  %519 = vmatpush1.msra.mxu0 0.0
  %520 = vmatprep.subr.mxu0 0.0
  %521 = vmatpush1.msra.mxu0 0.0
  %522 = vmatprep.subr.mxu0 0.0
  %523 = vmatpush1.msra.mxu0 0.0
  %524 = vmatprep.subr.mxu0 0.0
  %525 = vmatpush1.msra.mxu0 0.0
  %526 = vmatprep.subr.mxu0 0.0
  %527 = vmatpush1.msra.mxu0 0.0
  %528 = vmatprep.subr.mxu0 0.0
  %529 = vmatpush1.msra.mxu0 0.0
  %530 = vmatprep.subr.mxu0 0.0
  %531 = vmatpush1.msra.mxu0 0.0
  %532 = vmatprep.mubr.f32.mxu0 0.0
  %533 = vmatmul.mubr.f32.gmra.mrb[0].mxu0 %v159
  %v534 = vpop.f32.mrb[0].mxu0
  %v535 = vadd.f32 %v100, %v534
  %v536 = vpop.f32.mrb[0].mxu0
  %v537 = vadd.f32 %v100, %v536
  %538 = vmatprep.mubr.f32.mxu0 0.0
  %539 = vmatmul.mubr.f32.gmra.mrb[0].mxu0 %v162
  %v540 = vpop.f32.mrb[0].mxu0
  %v541 = vadd.f32 %v105, %v540
  %v542 = vpop.f32.mrb[0].mxu0
  %v543 = vadd.f32 %v105, %v542
  %544 = vmatprep.mubr.f32.mxu0 0.0
  %545 = vmatmul.mubr.f32.gmra.mrb[0].mxu0 %v165
  %v546 = vpop.f32.mrb[0].mxu0
  %v547 = vadd.f32 %v110, %v546
  %v548 = vpop.f32.mrb[0].mxu0
  %v549 = vadd.f32 %v110, %v548
  %550 = vmatprep.mubr.f32.mxu0 0.0
  %551 = vmatmul.mubr.f32.gmra.mrb[0].mxu0 %v168
  %v552 = vpop.f32.mrb[0].mxu0
  %v553 = vadd.f32 %v115, %v552
  %v554 = vpop.f32.mrb[0].mxu0
  %v555 = vadd.f32 %v115, %v554
  %556 = vmatprep.mubr.f32.mxu0 0.0
  %557 = vmatmul.mubr.f32.gmra.mrb[0].mxu0 %v171
  %v558 = vpop.f32.mrb[0].mxu0
  %v559 = vadd.f32 %v120, %v558
  %v560 = vpop.f32.mrb[0].mxu0
  %v561 = vadd.f32 %v120, %v560
  %562 = vmatprep.mubr.f32.mxu0 0.0
  %563 = vmatmul.mubr.f32.gmra.mrb[0].mxu0 %v174
  %v564 = vpop.f32.mrb[0].mxu0
  %v565 = vadd.f32 %v125, %v564
  %v566 = vpop.f32.mrb[0].mxu0
  %v567 = vadd.f32 %v125, %v566
  %568 = vmatprep.mubr.f32.mxu0 0.0
  %569 = vmatmul.mubr.f32.gmra.mrb[0].mxu0 %v177
  %v570 = vpop.f32.mrb[0].mxu0
  %v571 = vadd.f32 %v130, %v570
  %v572 = vpop.f32.mrb[0].mxu0
  %v573 = vadd.f32 %v130, %v572
  %574 = vmatprep.mubr.f32.mxu0 0.0
  %575 = vmatmul.mubr.f32.gmra.mrb[0].mxu0 %v180
  %v576 = vpop.f32.mrb[0].mxu0
  %v577 = vadd.f32 %v135, %v576
  %v578 = vpop.f32.mrb[0].mxu0
  %v579 = vadd.f32 %v135, %v578
  %580 = vmatprep.mubr.f32.mxu0 0.0
  %581 = vmatmul.mubr.f32.gmra.mrb[0].mxu0 %v183
  %v582 = vpop.f32.mrb[0].mxu0
  %v583 = vadd.f32 %v140, %v582
  %v584 = vpop.f32.mrb[0].mxu0
  %v585 = vadd.f32 %v140, %v584
  %586 = vmatprep.mubr.f32.mxu0 0.0
  %587 = vmatmul.mubr.f32.gmra.mrb[0].mxu0 %v186
  %v588 = vpop.f32.mrb[0].mxu0
  %v589 = vadd.f32 %v145, %v588
  %v590 = vpop.f32.mrb[0].mxu0
  %v591 = vadd.f32 %v145, %v590
  %592 = vmatprep.mubr.f32.mxu0 0.0
  %593 = vmatmul.mubr.f32.gmra.mrb[0].mxu0 %v189
  %v594 = vpop.f32.mrb[0].mxu0
  %v595 = vadd.f32 %v150, %v594
  %v596 = vpop.f32.mrb[0].mxu0
  %v597 = vadd.f32 %v150, %v596
  %598 = vmatprep.mubr.f32.mxu0 0.0
  %599 = vmatmul.mubr.f32.gmra.mrb[0].mxu0 %v192
  %v600 = vpop.f32.mrb[0].mxu0
  %v601 = vadd.f32 %v155, %v600
  %v602 = vpop.f32.mrb[0].mxu0
  %v603 = vadd.f32 %v155, %v602
  %604 = vdwg.mxu0
  %605 = vst [vmem:[#allocation4] sm:$0xff] %v285
  %606 = vst [vmem:[#allocation4 + $0x8] sm:$0xff] %v287
  %607 = vst [vmem:[#allocation4 + $0x10] sm:$0xff] %v422
  %608 = vst [vmem:[#allocation4 + $0x18] sm:$0xff] %v424
  %609 = vst [vmem:[#allocation4 + $0x20] sm:$0xff] %v559
  %610 = vst [vmem:[#allocation4 + $0x28] sm:$0xff] %v561
  %611 = vst [vmem:[#allocation4 + $0x30] sm:$0xff] %v291
  %612 = vst [vmem:[#allocation4 + $0x38] sm:$0xff] %v293
  %613 = vst [vmem:[#allocation4 + $0x40] sm:$0xff] %v428
  %614 = vst [vmem:[#allocation4 + $0x48] sm:$0xff] %v430
  %615 = vst [vmem:[#allocation4 + $0x50] sm:$0xff] %v565
  %616 = vst [vmem:[#allocation4 + $0x58] sm:$0xff] %v567
  %617 = vst [vmem:[#allocation4 + $0x60] sm:$0xff] %v297
  %618 = vst [vmem:[#allocation4 + $0x68] sm:$0xff] %v299
  %619 = vst [vmem:[#allocation4 + $0x70] sm:$0xff] %v434
  %620 = vst [vmem:[#allocation4 + $0x78] sm:$0xff] %v436
  %621 = vst [vmem:[#allocation4 + $0x80] sm:$0xff] %v571
  %622 = vst [vmem:[#allocation4 + $0x88] sm:$0xff] %v573
  %623 = vst [vmem:[#allocation4 + $0x90] sm:$0xff] %v303
  %624 = vst [vmem:[#allocation4 + $0x98] sm:$0xff] %v305
  %625 = vst [vmem:[#allocation4 + $0xa0] sm:$0xff] %v440
  %626 = vst [vmem:[#allocation4 + $0xa8] sm:$0xff] %v442
  %627 = vst [vmem:[#allocation4 + $0xb0] sm:$0xff] %v577
  %628 = vst [vmem:[#allocation4 + $0xb8] sm:$0xff] %v579
  %629 = vst [vmem:[#allocation4 + $0xc0] sm:$0xff] %v309
  %630 = vst [vmem:[#allocation4 + $0xc8] sm:$0xff] %v311
  %631 = vst [vmem:[#allocation4 + $0xd0] sm:$0xff] %v446
  %632 = vst [vmem:[#allocation4 + $0xd8] sm:$0xff] %v448
  %633 = vst [vmem:[#allocation4 + $0xe0] sm:$0xff] %v583
  %634 = vst [vmem:[#allocation4 + $0xe8] sm:$0xff] %v585
  %635 = vst [vmem:[#allocation4 + $0xf0] sm:$0xff] %v315
  %636 = vst [vmem:[#allocation4 + $0xf8] sm:$0xff] %v317
  %637 = vst [vmem:[#allocation4 + $0x100] sm:$0xff] %v452
  %638 = vst [vmem:[#allocation4 + $0x108] sm:$0xff] %v454
  %639 = vst [vmem:[#allocation4 + $0x110] sm:$0xff] %v589
  %640 = vst [vmem:[#allocation4 + $0x118] sm:$0xff] %v591
  %641 = vst [vmem:[#allocation4 + $0x120] sm:$0xff] %v321
  %642 = vst [vmem:[#allocation4 + $0x128] sm:$0xff] %v323
  %643 = vst [vmem:[#allocation4 + $0x130] sm:$0xff] %v458
  %644 = vst [vmem:[#allocation4 + $0x138] sm:$0xff] %v460
  %645 = vst [vmem:[#allocation4 + $0x140] sm:$0xff] %v595
  %646 = vst [vmem:[#allocation4 + $0x148] sm:$0xff] %v597
  %647 = vst [vmem:[#allocation4 + $0x150] sm:$0xff] %v327
  %648 = vst [vmem:[#allocation4 + $0x158] sm:$0xff] %v329
  %649 = vst [vmem:[#allocation4 + $0x160] sm:$0xff] %v464
  %650 = vst [vmem:[#allocation4 + $0x168] sm:$0xff] %v466
  %651 = vst [vmem:[#allocation4 + $0x170] sm:$0xff] %v601
  %652 = vst [vmem:[#allocation4 + $0x178] sm:$0xff] %v603
  %v653 = vmax.f32 %v261, 0.0
  %v654 = vmax.f32 %v263, 0.0
  %v655 = vmax.f32 %v398, 0.0
  %v656 = vmax.f32 %v400, 0.0
  %v657 = vmax.f32 %v535, 0.0
  %v658 = vmax.f32 %v537, 0.0
  %v659 = vmax.f32 %v267, 0.0
  %v660 = vmax.f32 %v269, 0.0
  %v661 = vmax.f32 %v404, 0.0
  %v662 = vmax.f32 %v406, 0.0
  %v663 = vmax.f32 %v541, 0.0
  %v664 = vmax.f32 %v543, 0.0
  %v665 = vmax.f32 %v273, 0.0
  %v666 = vmax.f32 %v275, 0.0
  %v667 = vmax.f32 %v410, 0.0
  %v668 = vmax.f32 %v412, 0.0
  %v669 = vmax.f32 %v547, 0.0
  %v670 = vmax.f32 %v549, 0.0
  %v671 = vmax.f32 %v279, 0.0
  %v672 = vmax.f32 %v281, 0.0
  %v673 = vmax.f32 %v416, 0.0
  %v674 = vmax.f32 %v418, 0.0
  %v675 = vmax.f32 %v553, 0.0
  %v676 = vmax.f32 %v555, 0.0
  %v677 = vmin.f32 %v653, 20.0
  %v678 = vmin.f32 %v654, 20.0
  %v679 = vmin.f32 %v655, 20.0
  %v680 = vmin.f32 %v656, 20.0
  %v681 = vmin.f32 %v657, 20.0
  %v682 = vmin.f32 %v658, 20.0
  %v683 = vmin.f32 %v659, 20.0
  %v684 = vmin.f32 %v660, 20.0
  %v685 = vmin.f32 %v661, 20.0
  %v686 = vmin.f32 %v662, 20.0
  %v687 = vmin.f32 %v663, 20.0
  %v688 = vmin.f32 %v664, 20.0
  %v689 = vmin.f32 %v665, 20.0
  %v690 = vmin.f32 %v666, 20.0
  %v691 = vmin.f32 %v667, 20.0
  %v692 = vmin.f32 %v668, 20.0
  %v693 = vmin.f32 %v669, 20.0
  %v694 = vmin.f32 %v670, 20.0
  %v695 = vmin.f32 %v671, 20.0
  %v696 = vmin.f32 %v672, 20.0
  %v697 = vmin.f32 %v673, 20.0
  %v698 = vmin.f32 %v674, 20.0
  %v699 = vmin.f32 %v675, 20.0
  %v700 = vmin.f32 %v676, 20.0
  %v701 = vmul.f32 %v677, %v46
  %v702 = vmul.f32 %v678, %v50
  %v703 = vmul.f32 %v679, %v54
  %v704 = vmul.f32 %v680, %v58
  %v705 = vmul.f32 %v681, %v62
  %v706 = vmul.f32 %v682, %v66
  %v707 = vmul.f32 %v683, %v46
  %v708 = vmul.f32 %v684, %v50
  %v709 = vmul.f32 %v685, %v54
  %v710 = vmul.f32 %v686, %v58
  %v711 = vmul.f32 %v687, %v62
  %v712 = vmul.f32 %v688, %v66
  %713 = vrot.lane.b32.xlu0 %v701, 19
  %v714 = vpop.permute.xlu0 %713
  %715 = vrot.lane.b32.xlu0 %v707, 19
  %v716 = vpop.permute.xlu0 %715
  %717 = vrot.lane.b32.xlu0 %v702, 19
  %v718 = vpop.permute.xlu0 %717
  %719 = vrot.lane.b32.xlu0 %v708, 19
  %v720 = vpop.permute.xlu0 %719
  %721 = vrot.lane.b32.xlu0 %v703, 19
  %v722 = vpop.permute.xlu0 %721
  %723 = vrot.lane.b32.xlu0 %v709, 19
  %v724 = vpop.permute.xlu0 %723
  %725 = vrot.lane.b32.xlu0 %v704, 19
  %v726 = vpop.permute.xlu0 %725
  %727 = vrot.lane.b32.xlu0 %v710, 19
  %v728 = vpop.permute.xlu0 %727
  %729 = vrot.lane.b32.xlu0 %v705, 19
  %v730 = vpop.permute.xlu0 %729
  %731 = vrot.lane.b32.xlu0 %v711, 19
  %v732 = vpop.permute.xlu0 %731
  %733 = vrot.lane.b32.xlu0 %v706, 19
  %v734 = vpop.permute.xlu0 %733
  %735 = vrot.lane.b32.xlu0 %v712, 19
  %v736 = vpop.permute.xlu0 %735
  %v737 = vlaneseq
  %v738 = vand.u32 %v737, 127
  %vm739 = vcmp.lt.s32.totalorder %v738, 19
  %v740 = vsel %vm739, %v730, %v734
  %v741 = vsel %vm739, %v732, %v736
  %v742 = vsel %vm739, %v726, %v730
  %v743 = vsel %vm739, %v728, %v732
  %v744 = vsel %vm739, %v722, %v726
  %v745 = vsel %vm739, %v724, %v728
  %v746 = vsel %vm739, %v718, %v722
  %v747 = vsel %vm739, %v720, %v724
  %v748 = vsel %vm739, %v714, %v718
  %v749 = vsel %vm739, %v716, %v720
  %v750 = vsel %vm739, %v734, %v714
  %v751 = vsel %vm739, %v736, %v716
  %752 = vst [vmem:[#allocation2] sm:$0xff] %v750
  %753 = vst [vmem:[#allocation2 + $0x8] sm:$0xff] %v748
  %754 = vst [vmem:[#allocation2 + $0x10] sm:$0xff] %v746
  %755 = vst [vmem:[#allocation2 + $0x18] sm:$0xff] %v744
  %756 = vst [vmem:[#allocation2 + $0x20] sm:$0xff] %v742
  %757 = vst [vmem:[#allocation2 + $0x28] sm:$0xff] %v740
  %758 = vst [vmem:[#allocation2 + $0x30] sm:$0xff] %v751
  %759 = vst [vmem:[#allocation2 + $0x38] sm:$0xff] %v749
  %760 = vst [vmem:[#allocation2 + $0x40] sm:$0xff] %v747
  %761 = vst [vmem:[#allocation2 + $0x48] sm:$0xff] %v745
  %762 = vst [vmem:[#allocation2 + $0x50] sm:$0xff] %v743
  %763 = vst [vmem:[#allocation2 + $0x58] sm:$0xff] %v741
  %764 = vrot.lane.b32.xlu0 %v701, 18
  %v765 = vpop.permute.xlu0 %764
  %766 = vrot.lane.b32.xlu0 %v707, 18
  %v767 = vpop.permute.xlu0 %766
  %768 = vrot.lane.b32.xlu0 %v702, 18
  %v769 = vpop.permute.xlu0 %768
  %770 = vrot.lane.b32.xlu0 %v708, 18
  %v771 = vpop.permute.xlu0 %770
  %772 = vrot.lane.b32.xlu0 %v703, 18
  %v773 = vpop.permute.xlu0 %772
  %774 = vrot.lane.b32.xlu0 %v709, 18
  %v775 = vpop.permute.xlu0 %774
  %776 = vrot.lane.b32.xlu0 %v704, 18
  %v777 = vpop.permute.xlu0 %776
  %778 = vrot.lane.b32.xlu0 %v710, 18
  %v779 = vpop.permute.xlu0 %778
  %780 = vrot.lane.b32.xlu0 %v705, 18
  %v781 = vpop.permute.xlu0 %780
  %782 = vrot.lane.b32.xlu0 %v711, 18
  %v783 = vpop.permute.xlu0 %782
  %784 = vrot.lane.b32.xlu0 %v706, 18
  %v785 = vpop.permute.xlu0 %784
  %786 = vrot.lane.b32.xlu0 %v712, 18
  %v787 = vpop.permute.xlu0 %786
  %vm788 = vcmp.lt.s32.totalorder %v738, 18
  %v789 = vsel %vm788, %v781, %v785
  %v790 = vsel %vm788, %v783, %v787
  %v791 = vsel %vm788, %v777, %v781
  %v792 = vsel %vm788, %v779, %v783
  %v793 = vsel %vm788, %v773, %v777
  %v794 = vsel %vm788, %v775, %v779
  %v795 = vsel %vm788, %v769, %v773
  %v796 = vsel %vm788, %v771, %v775
  %v797 = vsel %vm788, %v765, %v769
  %v798 = vsel %vm788, %v767, %v771
  %v799 = vsel %vm788, %v785, %v765
  %v800 = vsel %vm788, %v787, %v767
  %801 = vst [vmem:[#allocation2 + $0x60] sm:$0xff] %v799
  %802 = vst [vmem:[#allocation2 + $0x68] sm:$0xff] %v797
  %803 = vst [vmem:[#allocation2 + $0x70] sm:$0xff] %v795
  %804 = vst [vmem:[#allocation2 + $0x78] sm:$0xff] %v793
  %805 = vst [vmem:[#allocation2 + $0x80] sm:$0xff] %v791
  %806 = vst [vmem:[#allocation2 + $0x88] sm:$0xff] %v789
  %807 = vst [vmem:[#allocation2 + $0x90] sm:$0xff] %v800
  %808 = vst [vmem:[#allocation2 + $0x98] sm:$0xff] %v798
  %809 = vst [vmem:[#allocation2 + $0xa0] sm:$0xff] %v796
  %810 = vst [vmem:[#allocation2 + $0xa8] sm:$0xff] %v794
  %811 = vst [vmem:[#allocation2 + $0xb0] sm:$0xff] %v792
  %812 = vst [vmem:[#allocation2 + $0xb8] sm:$0xff] %v790
  %813 = vrot.lane.b32.xlu0 %v701, 17
  %v814 = vpop.permute.xlu0 %813
  %815 = vrot.lane.b32.xlu0 %v707, 17
  %v816 = vpop.permute.xlu0 %815
  %817 = vrot.lane.b32.xlu0 %v702, 17
  %v818 = vpop.permute.xlu0 %817
  %819 = vrot.lane.b32.xlu0 %v708, 17
  %v820 = vpop.permute.xlu0 %819
  %821 = vrot.lane.b32.xlu0 %v703, 17
  %v822 = vpop.permute.xlu0 %821
  %823 = vrot.lane.b32.xlu0 %v709, 17
  %v824 = vpop.permute.xlu0 %823
  %825 = vrot.lane.b32.xlu0 %v704, 17
  %v826 = vpop.permute.xlu0 %825
  %827 = vrot.lane.b32.xlu0 %v710, 17
  %v828 = vpop.permute.xlu0 %827
  %829 = vrot.lane.b32.xlu0 %v705, 17
  %v830 = vpop.permute.xlu0 %829
  %831 = vrot.lane.b32.xlu0 %v711, 17
  %v832 = vpop.permute.xlu0 %831
  %833 = vrot.lane.b32.xlu0 %v706, 17
  %v834 = vpop.permute.xlu0 %833
  %835 = vrot.lane.b32.xlu0 %v712, 17
  %v836 = vpop.permute.xlu0 %835
  %vm837 = vcmp.lt.s32.totalorder %v738, 17
  %v838 = vsel %vm837, %v830, %v834
  %v839 = vsel %vm837, %v832, %v836
  %v840 = vsel %vm837, %v826, %v830
  %v841 = vsel %vm837, %v828, %v832
  %v842 = vsel %vm837, %v822, %v826
  %v843 = vsel %vm837, %v824, %v828
  %v844 = vsel %vm837, %v818, %v822
  %v845 = vsel %vm837, %v820, %v824
  %v846 = vsel %vm837, %v814, %v818
  %v847 = vsel %vm837, %v816, %v820
  %v848 = vsel %vm837, %v834, %v814
  %v849 = vsel %vm837, %v836, %v816
  %850 = vst [vmem:[#allocation2 + $0xc0] sm:$0xff] %v848
  %851 = vst [vmem:[#allocation2 + $0xc8] sm:$0xff] %v846
  %852 = vst [vmem:[#allocation2 + $0xd0] sm:$0xff] %v844
  %853 = vst [vmem:[#allocation2 + $0xd8] sm:$0xff] %v842
  %854 = vst [vmem:[#allocation2 + $0xe0] sm:$0xff] %v840
  %855 = vst [vmem:[#allocation2 + $0xe8] sm:$0xff] %v838
  %856 = vst [vmem:[#allocation2 + $0xf0] sm:$0xff] %v849
  %857 = vst [vmem:[#allocation2 + $0xf8] sm:$0xff] %v847
  %858 = vst [vmem:[#allocation2 + $0x100] sm:$0xff] %v845
  %859 = vst [vmem:[#allocation2 + $0x108] sm:$0xff] %v843
  %860 = vst [vmem:[#allocation2 + $0x110] sm:$0xff] %v841
  %861 = vst [vmem:[#allocation2 + $0x118] sm:$0xff] %v839
  %862 = vrot.lane.b32.xlu0 %v701, 1
  %v863 = vpop.permute.xlu0 %862
  %864 = vrot.lane.b32.xlu0 %v707, 1
  %v865 = vpop.permute.xlu0 %864
  %866 = vrot.lane.b32.xlu0 %v702, 1
  %v867 = vpop.permute.xlu0 %866
  %868 = vrot.lane.b32.xlu0 %v708, 1
  %v869 = vpop.permute.xlu0 %868
  %870 = vrot.lane.b32.xlu0 %v703, 1
  %v871 = vpop.permute.xlu0 %870
  %872 = vrot.lane.b32.xlu0 %v709, 1
  %v873 = vpop.permute.xlu0 %872
  %874 = vrot.lane.b32.xlu0 %v704, 1
  %v875 = vpop.permute.xlu0 %874
  %876 = vrot.lane.b32.xlu0 %v710, 1
  %v877 = vpop.permute.xlu0 %876
  %878 = vrot.lane.b32.xlu0 %v705, 1
  %v879 = vpop.permute.xlu0 %878
  %880 = vrot.lane.b32.xlu0 %v711, 1
  %v881 = vpop.permute.xlu0 %880
  %882 = vrot.lane.b32.xlu0 %v706, 1
  %v883 = vpop.permute.xlu0 %882
  %884 = vrot.lane.b32.xlu0 %v712, 1
  %v885 = vpop.permute.xlu0 %884
  %vm886 = vcmp.lt.s32.totalorder %v738, 1
  %v887 = vsel %vm886, %v879, %v883
  %v888 = vsel %vm886, %v881, %v885
  %v889 = vsel %vm886, %v875, %v879
  %v890 = vsel %vm886, %v877, %v881
  %v891 = vsel %vm886, %v871, %v875
  %v892 = vsel %vm886, %v873, %v877
  %v893 = vsel %vm886, %v867, %v871
  %v894 = vsel %vm886, %v869, %v873
  %v895 = vsel %vm886, %v863, %v867
  %v896 = vsel %vm886, %v865, %v869
  %v897 = vsel %vm886, %v883, %v863
  %v898 = vsel %vm886, %v885, %v865
  %899 = vst [vmem:[#allocation2 + $0x120] sm:$0xff] %v897
  %900 = vst [vmem:[#allocation2 + $0x128] sm:$0xff] %v895
  %901 = vst [vmem:[#allocation2 + $0x130] sm:$0xff] %v893
  %902 = vst [vmem:[#allocation2 + $0x138] sm:$0xff] %v891
  %903 = vst [vmem:[#allocation2 + $0x140] sm:$0xff] %v889
  %904 = vst [vmem:[#allocation2 + $0x148] sm:$0xff] %v887
  %905 = vst [vmem:[#allocation2 + $0x150] sm:$0xff] %v898
  %906 = vst [vmem:[#allocation2 + $0x158] sm:$0xff] %v896
  %907 = vst [vmem:[#allocation2 + $0x160] sm:$0xff] %v894
  %908 = vst [vmem:[#allocation2 + $0x168] sm:$0xff] %v892
  %909 = vst [vmem:[#allocation2 + $0x170] sm:$0xff] %v890
  %910 = vst [vmem:[#allocation2 + $0x178] sm:$0xff] %v888
  %911 = vst [vmem:[#allocation2 + $0x180] sm:$0xff] %v701
  %912 = vst [vmem:[#allocation2 + $0x188] sm:$0xff] %v702
  %913 = vst [vmem:[#allocation2 + $0x190] sm:$0xff] %v703
  %914 = vst [vmem:[#allocation2 + $0x198] sm:$0xff] %v704
  %915 = vst [vmem:[#allocation2 + $0x1a0] sm:$0xff] %v705
  %916 = vst [vmem:[#allocation2 + $0x1a8] sm:$0xff] %v706
  %917 = vst [vmem:[#allocation2 + $0x1b0] sm:$0xff] %v707
  %918 = vst [vmem:[#allocation2 + $0x1b8] sm:$0xff] %v708
  %919 = vst [vmem:[#allocation2 + $0x1c0] sm:$0xff] %v709
  %920 = vst [vmem:[#allocation2 + $0x1c8] sm:$0xff] %v710
  %921 = vst [vmem:[#allocation2 + $0x1d0] sm:$0xff] %v711
  %922 = vst [vmem:[#allocation2 + $0x1d8] sm:$0xff] %v712
  %923 = vrot.lane.b32.xlu0 %v701, 127
  %v924 = vpop.permute.xlu0 %923
  %925 = vrot.lane.b32.xlu0 %v707, 127
  %v926 = vpop.permute.xlu0 %925
  %927 = vrot.lane.b32.xlu0 %v702, 127
  %v928 = vpop.permute.xlu0 %927
  %929 = vrot.lane.b32.xlu0 %v708, 127
  %v930 = vpop.permute.xlu0 %929
  %931 = vrot.lane.b32.xlu0 %v703, 127
  %v932 = vpop.permute.xlu0 %931
  %933 = vrot.lane.b32.xlu0 %v709, 127
  %v934 = vpop.permute.xlu0 %933
  %935 = vrot.lane.b32.xlu0 %v704, 127
  %v936 = vpop.permute.xlu0 %935
  %937 = vrot.lane.b32.xlu0 %v710, 127
  %v938 = vpop.permute.xlu0 %937
  %939 = vrot.lane.b32.xlu0 %v705, 127
  %v940 = vpop.permute.xlu0 %939
  %941 = vrot.lane.b32.xlu0 %v711, 127
  %v942 = vpop.permute.xlu0 %941
  %943 = vrot.lane.b32.xlu0 %v706, 127
  %v944 = vpop.permute.xlu0 %943
  %945 = vrot.lane.b32.xlu0 %v712, 127
  %v946 = vpop.permute.xlu0 %945
  %vm947 = vcmp.lt.s32.totalorder %v738, 127
  %v948 = vsel %vm947, %v940, %v944
  %v949 = vsel %vm947, %v942, %v946
  %v950 = vsel %vm947, %v936, %v940
  %v951 = vsel %vm947, %v938, %v942
  %v952 = vsel %vm947, %v932, %v936
  %v953 = vsel %vm947, %v934, %v938
  %v954 = vsel %vm947, %v928, %v932
  %v955 = vsel %vm947, %v930, %v934
  %v956 = vsel %vm947, %v924, %v928
  %v957 = vsel %vm947, %v926, %v930
  %v958 = vsel %vm947, %v944, %v924
  %v959 = vsel %vm947, %v946, %v926
  %960 = vst [vmem:[#allocation2 + $0x1e0] sm:$0xff] %v956
  %961 = vst [vmem:[#allocation2 + $0x1e8] sm:$0xff] %v954
  %962 = vst [vmem:[#allocation2 + $0x1f0] sm:$0xff] %v952
  %963 = vst [vmem:[#allocation2 + $0x1f8] sm:$0xff] %v950
  %964 = vst [vmem:[#allocation2 + $0x200] sm:$0xff] %v948
  %965 = vst [vmem:[#allocation2 + $0x208] sm:$0xff] %v958
  %966 = vst [vmem:[#allocation2 + $0x210] sm:$0xff] %v957
  %967 = vst [vmem:[#allocation2 + $0x218] sm:$0xff] %v955
  %968 = vst [vmem:[#allocation2 + $0x220] sm:$0xff] %v953
  %969 = vst [vmem:[#allocation2 + $0x228] sm:$0xff] %v951
  %970 = vst [vmem:[#allocation2 + $0x230] sm:$0xff] %v949
  %971 = vst [vmem:[#allocation2 + $0x238] sm:$0xff] %v959
  %972 = vrot.lane.b32.xlu0 %v701, 111
  %v973 = vpop.permute.xlu0 %972
  %974 = vrot.lane.b32.xlu0 %v707, 111
  %v975 = vpop.permute.xlu0 %974
  %976 = vrot.lane.b32.xlu0 %v702, 111
  %v977 = vpop.permute.xlu0 %976
  %978 = vrot.lane.b32.xlu0 %v708, 111
  %v979 = vpop.permute.xlu0 %978
  %980 = vrot.lane.b32.xlu0 %v703, 111
  %v981 = vpop.permute.xlu0 %980
  %982 = vrot.lane.b32.xlu0 %v709, 111
  %v983 = vpop.permute.xlu0 %982
  %984 = vrot.lane.b32.xlu0 %v704, 111
  %v985 = vpop.permute.xlu0 %984
  %986 = vrot.lane.b32.xlu0 %v710, 111
  %v987 = vpop.permute.xlu0 %986
  %988 = vrot.lane.b32.xlu0 %v705, 111
  %v989 = vpop.permute.xlu0 %988
  %990 = vrot.lane.b32.xlu0 %v711, 111
  %v991 = vpop.permute.xlu0 %990
  %992 = vrot.lane.b32.xlu0 %v706, 111
  %v993 = vpop.permute.xlu0 %992
  %994 = vrot.lane.b32.xlu0 %v712, 111
  %v995 = vpop.permute.xlu0 %994
  %vm996 = vcmp.lt.s32.totalorder %v738, 111
  %v997 = vsel %vm996, %v989, %v993
  %v998 = vsel %vm996, %v991, %v995
  %v999 = vsel %vm996, %v985, %v989
  %v1000 = vsel %vm996, %v987, %v991
  %v1001 = vsel %vm996, %v981, %v985
  %v1002 = vsel %vm996, %v983, %v987
  %v1003 = vsel %vm996, %v977, %v981
  %v1004 = vsel %vm996, %v979, %v983
  %v1005 = vsel %vm996, %v973, %v977
  %v1006 = vsel %vm996, %v975, %v979
  %v1007 = vsel %vm996, %v993, %v973
  %v1008 = vsel %vm996, %v995, %v975
  %1009 = vst [vmem:[#allocation2 + $0x240] sm:$0xff] %v1005
  %1010 = vst [vmem:[#allocation2 + $0x248] sm:$0xff] %v1003
  %1011 = vst [vmem:[#allocation2 + $0x250] sm:$0xff] %v1001
  %1012 = vst [vmem:[#allocation2 + $0x258] sm:$0xff] %v999
  %1013 = vst [vmem:[#allocation2 + $0x260] sm:$0xff] %v997
  %1014 = vst [vmem:[#allocation2 + $0x268] sm:$0xff] %v1007
  %1015 = vst [vmem:[#allocation2 + $0x270] sm:$0xff] %v1006
  %1016 = vst [vmem:[#allocation2 + $0x278] sm:$0xff] %v1004
  %1017 = vst [vmem:[#allocation2 + $0x280] sm:$0xff] %v1002
  %1018 = vst [vmem:[#allocation2 + $0x288] sm:$0xff] %v1000
  %1019 = vst [vmem:[#allocation2 + $0x290] sm:$0xff] %v998
  %1020 = vst [vmem:[#allocation2 + $0x298] sm:$0xff] %v1008
  %1021 = vrot.lane.b32.xlu0 %v701, 110
  %v1022 = vpop.permute.xlu0 %1021
  %1023 = vrot.lane.b32.xlu0 %v707, 110
  %v1024 = vpop.permute.xlu0 %1023
  %1025 = vrot.lane.b32.xlu0 %v702, 110
  %v1026 = vpop.permute.xlu0 %1025
  %1027 = vrot.lane.b32.xlu0 %v708, 110
  %v1028 = vpop.permute.xlu0 %1027
  %1029 = vrot.lane.b32.xlu0 %v703, 110
  %v1030 = vpop.permute.xlu0 %1029
  %1031 = vrot.lane.b32.xlu0 %v709, 110
  %v1032 = vpop.permute.xlu0 %1031
  %1033 = vrot.lane.b32.xlu0 %v704, 110
  %v1034 = vpop.permute.xlu0 %1033
  %1035 = vrot.lane.b32.xlu0 %v710, 110
  %v1036 = vpop.permute.xlu0 %1035
  %1037 = vrot.lane.b32.xlu0 %v705, 110
  %v1038 = vpop.permute.xlu0 %1037
  %1039 = vrot.lane.b32.xlu0 %v711, 110
  %v1040 = vpop.permute.xlu0 %1039
  %1041 = vrot.lane.b32.xlu0 %v706, 110
  %v1042 = vpop.permute.xlu0 %1041
  %1043 = vrot.lane.b32.xlu0 %v712, 110
  %v1044 = vpop.permute.xlu0 %1043
  %vm1045 = vcmp.lt.s32.totalorder %v738, 110
  %v1046 = vsel %vm1045, %v1038, %v1042
  %v1047 = vsel %vm1045, %v1040, %v1044
  %v1048 = vsel %vm1045, %v1034, %v1038
  %v1049 = vsel %vm1045, %v1036, %v1040
  %v1050 = vsel %vm1045, %v1030, %v1034
  %v1051 = vsel %vm1045, %v1032, %v1036
  %v1052 = vsel %vm1045, %v1026, %v1030
  %v1053 = vsel %vm1045, %v1028, %v1032
  %v1054 = vsel %vm1045, %v1022, %v1026
  %v1055 = vsel %vm1045, %v1024, %v1028
  %v1056 = vsel %vm1045, %v1042, %v1022
  %v1057 = vsel %vm1045, %v1044, %v1024
  %1058 = vst [vmem:[#allocation2 + $0x2a0] sm:$0xff] %v1054
  %1059 = vst [vmem:[#allocation2 + $0x2a8] sm:$0xff] %v1052
  %1060 = vst [vmem:[#allocation2 + $0x2b0] sm:$0xff] %v1050
  %1061 = vst [vmem:[#allocation2 + $0x2b8] sm:$0xff] %v1048
  %1062 = vst [vmem:[#allocation2 + $0x2c0] sm:$0xff] %v1046
  %1063 = vst [vmem:[#allocation2 + $0x2c8] sm:$0xff] %v1056
  %1064 = vst [vmem:[#allocation2 + $0x2d0] sm:$0xff] %v1055
  %1065 = vst [vmem:[#allocation2 + $0x2d8] sm:$0xff] %v1053
  %1066 = vst [vmem:[#allocation2 + $0x2e0] sm:$0xff] %v1051
  %1067 = vst [vmem:[#allocation2 + $0x2e8] sm:$0xff] %v1049
  %1068 = vst [vmem:[#allocation2 + $0x2f0] sm:$0xff] %v1047
  %1069 = vst [vmem:[#allocation2 + $0x2f8] sm:$0xff] %v1057
  %1070 = vrot.lane.b32.xlu0 %v701, 109
  %v1071 = vpop.permute.xlu0 %1070
  %1072 = vrot.lane.b32.xlu0 %v707, 109
  %v1073 = vpop.permute.xlu0 %1072
  %1074 = vrot.lane.b32.xlu0 %v702, 109
  %v1075 = vpop.permute.xlu0 %1074
  %1076 = vrot.lane.b32.xlu0 %v708, 109
  %v1077 = vpop.permute.xlu0 %1076
  %1078 = vrot.lane.b32.xlu0 %v703, 109
  %v1079 = vpop.permute.xlu0 %1078
  %1080 = vrot.lane.b32.xlu0 %v709, 109
  %v1081 = vpop.permute.xlu0 %1080
  %1082 = vrot.lane.b32.xlu0 %v704, 109
  %v1083 = vpop.permute.xlu0 %1082
  %1084 = vrot.lane.b32.xlu0 %v710, 109
  %v1085 = vpop.permute.xlu0 %1084
  %1086 = vrot.lane.b32.xlu0 %v705, 109
  %v1087 = vpop.permute.xlu0 %1086
  %1088 = vrot.lane.b32.xlu0 %v711, 109
  %v1089 = vpop.permute.xlu0 %1088
  %1090 = vrot.lane.b32.xlu0 %v706, 109
  %v1091 = vpop.permute.xlu0 %1090
  %1092 = vrot.lane.b32.xlu0 %v712, 109
  %v1093 = vpop.permute.xlu0 %1092
  %vm1094 = vcmp.lt.s32.totalorder %v738, 109
  %v1095 = vsel %vm1094, %v1087, %v1091
  %v1096 = vsel %vm1094, %v1089, %v1093
  %v1097 = vsel %vm1094, %v1083, %v1087
  %v1098 = vsel %vm1094, %v1085, %v1089
  %v1099 = vsel %vm1094, %v1079, %v1083
  %v1100 = vsel %vm1094, %v1081, %v1085
  %v1101 = vsel %vm1094, %v1075, %v1079
  %v1102 = vsel %vm1094, %v1077, %v1081
  %v1103 = vsel %vm1094, %v1071, %v1075
  %v1104 = vsel %vm1094, %v1073, %v1077
  %v1105 = vsel %vm1094, %v1091, %v1071
  %v1106 = vsel %vm1094, %v1093, %v1073
  %1107 = vst [vmem:[#allocation2 + $0x300] sm:$0xff] %v1103
  %1108 = vst [vmem:[#allocation2 + $0x308] sm:$0xff] %v1101
  %1109 = vst [vmem:[#allocation2 + $0x310] sm:$0xff] %v1099
  %1110 = vst [vmem:[#allocation2 + $0x318] sm:$0xff] %v1097
  %1111 = vst [vmem:[#allocation2 + $0x320] sm:$0xff] %v1095
  %1112 = vst [vmem:[#allocation2 + $0x328] sm:$0xff] %v1105
  %1113 = vst [vmem:[#allocation2 + $0x330] sm:$0xff] %v1104
  %1114 = vst [vmem:[#allocation2 + $0x338] sm:$0xff] %v1102
  %1115 = vst [vmem:[#allocation2 + $0x340] sm:$0xff] %v1100
  %1116 = vst [vmem:[#allocation2 + $0x348] sm:$0xff] %v1098
  %1117 = vst [vmem:[#allocation2 + $0x350] sm:$0xff] %v1096
  %1118 = vst [vmem:[#allocation2 + $0x358] sm:$0xff] %v1106
  %v1119 = vld [vmem:[%s4] sm:$0xff]
  %v1120 = vld [vmem:[%s4 + $0x8] sm:$0xff]
  %v1121 = vld [vmem:[%s4 + $0x10] sm:$0xff]
  %v1122 = vld [vmem:[%s4 + $0x18] sm:$0xff]
  %v1123 = vld [vmem:[#allocation2] sm:$0xff]
  %v1124 = vld [vmem:[#allocation2 + $0x8] sm:$0xff]
  %v1125 = vld [vmem:[#allocation2 + $0x10] sm:$0xff]
  %v1126 = vld [vmem:[#allocation2 + $0x18] sm:$0xff]
  %v1127 = vld [vmem:[#allocation2 + $0x20] sm:$0xff]
  %v1128 = vld [vmem:[#allocation2 + $0x28] sm:$0xff]
  %v1129 = vld [vmem:[#allocation2 + $0x30] sm:$0xff]
  %v1130 = vld [vmem:[#allocation2 + $0x38] sm:$0xff]
  %v1131 = vld [vmem:[#allocation2 + $0x40] sm:$0xff]
  %v1132 = vld [vmem:[#allocation2 + $0x48] sm:$0xff]
  %v1133 = vld [vmem:[#allocation2 + $0x50] sm:$0xff]
  %v1134 = vld [vmem:[#allocation2 + $0x58] sm:$0xff]
  %v1135 = vld [vmem:[#allocation2 + $0x60] sm:$0xff]
  %v1136 = vld [vmem:[#allocation2 + $0x68] sm:$0xff]
  %v1137 = vld [vmem:[#allocation2 + $0x70] sm:$0xff]
  %v1138 = vld [vmem:[#allocation2 + $0x78] sm:$0xff]
  %v1139 = vld [vmem:[#allocation2 + $0x80] sm:$0xff]
  %v1140 = vld [vmem:[#allocation2 + $0x88] sm:$0xff]
  %v1141 = vld [vmem:[#allocation2 + $0x90] sm:$0xff]
  %v1142 = vld [vmem:[#allocation2 + $0x98] sm:$0xff]
  %v1143 = vld [vmem:[#allocation2 + $0xa0] sm:$0xff]
  %v1144 = vld [vmem:[#allocation2 + $0xa8] sm:$0xff]
  %v1145 = vld [vmem:[#allocation2 + $0xb0] sm:$0xff]
  %v1146 = vld [vmem:[#allocation2 + $0xb8] sm:$0xff]
  %v1147 = vld [vmem:[#allocation2 + $0xc0] sm:$0xff]
  %v1148 = vld [vmem:[#allocation2 + $0xc8] sm:$0xff]
  %v1149 = vld [vmem:[#allocation2 + $0xd0] sm:$0xff]
  %v1150 = vld [vmem:[#allocation2 + $0xd8] sm:$0xff]
  %v1151 = vld [vmem:[#allocation2 + $0xe0] sm:$0xff]
  %v1152 = vld [vmem:[#allocation2 + $0xe8] sm:$0xff]
  %v1153 = vld [vmem:[#allocation2 + $0xf0] sm:$0xff]
  %v1154 = vld [vmem:[#allocation2 + $0xf8] sm:$0xff]
  %v1155 = vld [vmem:[#allocation2 + $0x100] sm:$0xff]
  %v1156 = vld [vmem:[#allocation2 + $0x108] sm:$0xff]
  %v1157 = vld [vmem:[#allocation2 + $0x110] sm:$0xff]
  %v1158 = vld [vmem:[#allocation2 + $0x118] sm:$0xff]
  %v1159 = vld [vmem:[#allocation2 + $0x120] sm:$0xff]
  %v1160 = vld [vmem:[#allocation2 + $0x128] sm:$0xff]
  %v1161 = vld [vmem:[#allocation2 + $0x130] sm:$0xff]
  %v1162 = vld [vmem:[#allocation2 + $0x138] sm:$0xff]
  %v1163 = vld [vmem:[#allocation2 + $0x140] sm:$0xff]
  %v1164 = vld [vmem:[#allocation2 + $0x148] sm:$0xff]
  %v1165 = vld [vmem:[#allocation2 + $0x150] sm:$0xff]
  %v1166 = vld [vmem:[#allocation2 + $0x158] sm:$0xff]
  %v1167 = vld [vmem:[#allocation2 + $0x160] sm:$0xff]
  %v1168 = vld [vmem:[#allocation2 + $0x168] sm:$0xff]
  %v1169 = vld [vmem:[#allocation2 + $0x170] sm:$0xff]
  %v1170 = vld [vmem:[#allocation2 + $0x178] sm:$0xff]
  %v1171 = vld [vmem:[#allocation2 + $0x180] sm:$0xff]
  %v1172 = vld [vmem:[#allocation2 + $0x188] sm:$0xff]
  %v1173 = vld [vmem:[#allocation2 + $0x190] sm:$0xff]
  %v1174 = vld [vmem:[#allocation2 + $0x198] sm:$0xff]
  %v1175 = vld [vmem:[#allocation2 + $0x1a0] sm:$0xff]
  %v1176 = vld [vmem:[#allocation2 + $0x1a8] sm:$0xff]
  %v1177 = vld [vmem:[#allocation2 + $0x1b0] sm:$0xff]
  %v1178 = vld [vmem:[#allocation2 + $0x1b8] sm:$0xff]
  %v1179 = vld [vmem:[#allocation2 + $0x1c0] sm:$0xff]
  %v1180 = vld [vmem:[#allocation2 + $0x1c8] sm:$0xff]
  %v1181 = vld [vmem:[#allocation2 + $0x1d0] sm:$0xff]
  %v1182 = vld [vmem:[#allocation2 + $0x1d8] sm:$0xff]
  %v1183 = vld [vmem:[#allocation2 + $0x1e0] sm:$0xff]
  %v1184 = vld [vmem:[#allocation2 + $0x1e8] sm:$0xff]
  %v1185 = vld [vmem:[#allocation2 + $0x1f0] sm:$0xff]
  %v1186 = vld [vmem:[#allocation2 + $0x1f8] sm:$0xff]
  %v1187 = vld [vmem:[#allocation2 + $0x200] sm:$0xff]
  %v1188 = vld [vmem:[#allocation2 + $0x208] sm:$0xff]
  %v1189 = vld [vmem:[#allocation2 + $0x210] sm:$0xff]
  %v1190 = vld [vmem:[#allocation2 + $0x218] sm:$0xff]
  %v1191 = vld [vmem:[#allocation2 + $0x220] sm:$0xff]
  %v1192 = vld [vmem:[#allocation2 + $0x228] sm:$0xff]
  %v1193 = vld [vmem:[#allocation2 + $0x230] sm:$0xff]
  %v1194 = vld [vmem:[#allocation2 + $0x238] sm:$0xff]
  %v1195 = vld [vmem:[#allocation2 + $0x240] sm:$0xff]
  %v1196 = vld [vmem:[#allocation2 + $0x248] sm:$0xff]
  %v1197 = vld [vmem:[#allocation2 + $0x250] sm:$0xff]
  %v1198 = vld [vmem:[#allocation2 + $0x258] sm:$0xff]
  %v1199 = vld [vmem:[#allocation2 + $0x260] sm:$0xff]
  %v1200 = vld [vmem:[#allocation2 + $0x268] sm:$0xff]
  %v1201 = vld [vmem:[#allocation2 + $0x270] sm:$0xff]
  %v1202 = vld [vmem:[#allocation2 + $0x278] sm:$0xff]
  %v1203 = vld [vmem:[#allocation2 + $0x280] sm:$0xff]
  %v1204 = vld [vmem:[#allocation2 + $0x288] sm:$0xff]
  %v1205 = vld [vmem:[#allocation2 + $0x290] sm:$0xff]
  %v1206 = vld [vmem:[#allocation2 + $0x298] sm:$0xff]
  %v1207 = vld [vmem:[#allocation2 + $0x2a0] sm:$0xff]
  %v1208 = vld [vmem:[#allocation2 + $0x2a8] sm:$0xff]
  %v1209 = vld [vmem:[#allocation2 + $0x2b0] sm:$0xff]
  %v1210 = vld [vmem:[#allocation2 + $0x2b8] sm:$0xff]
  %v1211 = vld [vmem:[#allocation2 + $0x2c0] sm:$0xff]
  %v1212 = vld [vmem:[#allocation2 + $0x2c8] sm:$0xff]
  %v1213 = vld [vmem:[#allocation2 + $0x2d0] sm:$0xff]
  %v1214 = vld [vmem:[#allocation2 + $0x2d8] sm:$0xff]
  %v1215 = vld [vmem:[#allocation2 + $0x2e0] sm:$0xff]
  %v1216 = vld [vmem:[#allocation2 + $0x2e8] sm:$0xff]
  %v1217 = vld [vmem:[#allocation2 + $0x2f0] sm:$0xff]
  %v1218 = vld [vmem:[#allocation2 + $0x2f8] sm:$0xff]
  %v1219 = vld [vmem:[#allocation2 + $0x300] sm:$0xff]
  %v1220 = vld [vmem:[#allocation2 + $0x308] sm:$0xff]
  %v1221 = vld [vmem:[#allocation2 + $0x310] sm:$0xff]
  %v1222 = vld [vmem:[#allocation2 + $0x318] sm:$0xff]
  %v1223 = vld [vmem:[#allocation2 + $0x320] sm:$0xff]
  %v1224 = vld [vmem:[#allocation2 + $0x328] sm:$0xff]
  %v1225 = vld [vmem:[#allocation2 + $0x330] sm:$0xff]
  %v1226 = vld [vmem:[#allocation2 + $0x338] sm:$0xff]
  %v1227 = vld [vmem:[#allocation2 + $0x340] sm:$0xff]
  %v1228 = vld [vmem:[#allocation2 + $0x348] sm:$0xff]
  %v1229 = vld [vmem:[#allocation2 + $0x350] sm:$0xff]
  %v1230 = vld [vmem:[#allocation2 + $0x358] sm:$0xff]
  %v1231 = vld [vmem:[%s5] sm:$0xff]
  %v1232 = vld [vmem:[%s5 + $0x8] sm:$0xff]
  %1234 = vset.pattern.permute.xlu0 0
  %1235 = vperm.xlu0 %1234, %v1231
  %v1236 = vpop.permute.xlu0 %1235
  %1239 = vset.pattern.permute.xlu0 0
  %1240 = vperm.xlu0 %1239, %v1232
  %v1241 = vpop.permute.xlu0 %1240
  %v1244 = vsel %vm157, %v1120, 0
  %v1247 = vsel %vm157, %v1122, 0
  %1249 = vmatprep.subr.mxu0 %v1124
  %1250 = vmatpush1.msra.mxu0 %v1123
  %1251 = vmatprep.subr.mxu0 %v1130
  %1252 = vmatpush1.msra.mxu0 %v1129
  %1253 = vmatprep.subr.mxu0 %v1136
  %1254 = vmatpush1.msra.mxu0 %v1135
  %1255 = vmatprep.subr.mxu0 %v1142
  %1256 = vmatpush1.msra.mxu0 %v1141
  %1257 = vmatprep.subr.mxu0 %v1148
  %1258 = vmatpush1.msra.mxu0 %v1147
  %1259 = vmatprep.subr.mxu0 %v1154
  %1260 = vmatpush1.msra.mxu0 %v1153
  %1261 = vmatprep.subr.mxu0 %v1160
  %1262 = vmatpush1.msra.mxu0 %v1159
  %1263 = vmatprep.subr.mxu0 %v1166
  %1264 = vmatpush1.msra.mxu0 %v1165
  %1265 = vmatprep.subr.mxu0 %v1172
  %1266 = vmatpush1.msra.mxu0 %v1171
  %1267 = vmatprep.subr.mxu0 %v1178
  %1268 = vmatpush1.msra.mxu0 %v1177
  %1269 = vmatprep.subr.mxu0 %v1184
  %1270 = vmatpush1.msra.mxu0 %v1183
  %1271 = vmatprep.subr.mxu0 %v1190
  %1272 = vmatpush1.msra.mxu0 %v1189
  %1273 = vmatprep.subr.mxu0 %v1196
  %1274 = vmatpush1.msra.mxu0 %v1195
  %1275 = vmatprep.subr.mxu0 %v1202
  %1276 = vmatpush1.msra.mxu0 %v1201
  %1277 = vmatprep.subr.mxu0 %v1208
  %1278 = vmatpush1.msra.mxu0 %v1207
  %1279 = vmatprep.subr.mxu0 %v1214
  %1280 = vmatpush1.msra.mxu0 %v1213
  %1281 = vmatprep.subr.mxu0 %v1220
  %1282 = vmatpush1.msra.mxu0 %v1219
  %1283 = vmatprep.subr.mxu0 %v1226
  %1284 = vmatpush1.msra.mxu0 %v1225
  %1285 = vmatprep.subr.mxu0 0.0
  %1286 = vmatpush1.msra.mxu0 0.0
  %1287 = vmatprep.subr.mxu0 0.0
  %1288 = vmatpush1.msra.mxu0 0.0
  %1289 = vmatprep.subr.mxu0 0.0
  %1290 = vmatpush1.msra.mxu0 0.0
  %1291 = vmatprep.subr.mxu0 0.0
  %1292 = vmatpush1.msra.mxu0 0.0
  %1293 = vmatprep.subr.mxu0 0.0
  %1294 = vmatpush1.msra.mxu0 0.0
  %1295 = vmatprep.subr.mxu0 0.0
  %1296 = vmatpush1.msra.mxu0 0.0
  %1297 = vmatprep.subr.mxu0 0.0
  %1298 = vmatpush1.msra.mxu0 0.0
  %1299 = vmatprep.subr.mxu0 0.0
  %1300 = vmatpush1.msra.mxu0 0.0
  %1301 = vmatprep.subr.mxu0 0.0
  %1302 = vmatpush1.msra.mxu0 0.0
  %1303 = vmatprep.subr.mxu0 0.0
  %1304 = vmatpush1.msra.mxu0 0.0
  %1305 = vmatprep.subr.mxu0 0.0
  %1306 = vmatpush1.msra.mxu0 0.0
  %1307 = vmatprep.subr.mxu0 0.0
  %1308 = vmatpush1.msra.mxu0 0.0
  %1309 = vmatprep.subr.mxu0 0.0
  %1310 = vmatpush1.msra.mxu0 0.0
  %1311 = vmatprep.subr.mxu0 0.0
  %1312 = vmatpush1.msra.mxu0 0.0
  %1313 = vmatprep.mubr.f32.mxu0 %v1244
  %1314 = vmatmul.mubr.f32.gmra.mrb[0].mxu0 %v1119
  %v1315 = vpop.f32.mrb[0].mxu0
  %v1316 = vadd.f32 %v1236, %v1315
  %v1317 = vpop.f32.mrb[0].mxu0
  %v1318 = vadd.f32 %v1236, %v1317
  %1319 = vmatprep.mubr.f32.mxu0 %v1247
  %1320 = vmatmul.mubr.f32.gmra.mrb[0].mxu0 %v1121
  %v1321 = vpop.f32.mrb[0].mxu0
  %v1322 = vadd.f32 %v1241, %v1321
  %v1323 = vpop.f32.mrb[0].mxu0
  %v1324 = vadd.f32 %v1241, %v1323
  %1325 = vdwg.mxu0
  %1326 = vmatprep.subr.mxu0 %v1126
  %1327 = vmatpush1.msra.mxu0 %v1125
  %1328 = vmatprep.subr.mxu0 %v1132
  %1329 = vmatpush1.msra.mxu0 %v1131
  %1330 = vmatprep.subr.mxu0 %v1138
  %1331 = vmatpush1.msra.mxu0 %v1137
  %1332 = vmatprep.subr.mxu0 %v1144
  %1333 = vmatpush1.msra.mxu0 %v1143
  %1334 = vmatprep.subr.mxu0 %v1150
  %1335 = vmatpush1.msra.mxu0 %v1149
  %1336 = vmatprep.subr.mxu0 %v1156
  %1337 = vmatpush1.msra.mxu0 %v1155
  %1338 = vmatprep.subr.mxu0 %v1162
  %1339 = vmatpush1.msra.mxu0 %v1161
  %1340 = vmatprep.subr.mxu0 %v1168
  %1341 = vmatpush1.msra.mxu0 %v1167
  %1342 = vmatprep.subr.mxu0 %v1174
  %1343 = vmatpush1.msra.mxu0 %v1173
  %1344 = vmatprep.subr.mxu0 %v1180
  %1345 = vmatpush1.msra.mxu0 %v1179
  %1346 = vmatprep.subr.mxu0 %v1186
  %1347 = vmatpush1.msra.mxu0 %v1185
  %1348 = vmatprep.subr.mxu0 %v1192
  %1349 = vmatpush1.msra.mxu0 %v1191
  %1350 = vmatprep.subr.mxu0 %v1198
  %1351 = vmatpush1.msra.mxu0 %v1197
  %1352 = vmatprep.subr.mxu0 %v1204
  %1353 = vmatpush1.msra.mxu0 %v1203
  %1354 = vmatprep.subr.mxu0 %v1210
  %1355 = vmatpush1.msra.mxu0 %v1209
  %1356 = vmatprep.subr.mxu0 %v1216
  %1357 = vmatpush1.msra.mxu0 %v1215
  %1358 = vmatprep.subr.mxu0 %v1222
  %1359 = vmatpush1.msra.mxu0 %v1221
  %1360 = vmatprep.subr.mxu0 %v1228
  %1361 = vmatpush1.msra.mxu0 %v1227
  %1362 = vmatprep.subr.mxu0 0.0
  %1363 = vmatpush1.msra.mxu0 0.0
  %1364 = vmatprep.subr.mxu0 0.0
  %1365 = vmatpush1.msra.mxu0 0.0
  %1366 = vmatprep.subr.mxu0 0.0
  %1367 = vmatpush1.msra.mxu0 0.0
  %1368 = vmatprep.subr.mxu0 0.0
  %1369 = vmatpush1.msra.mxu0 0.0
  %1370 = vmatprep.subr.mxu0 0.0
  %1371 = vmatpush1.msra.mxu0 0.0
  %1372 = vmatprep.subr.mxu0 0.0
  %1373 = vmatpush1.msra.mxu0 0.0
  %1374 = vmatprep.subr.mxu0 0.0
  %1375 = vmatpush1.msra.mxu0 0.0
  %1376 = vmatprep.subr.mxu0 0.0
  %1377 = vmatpush1.msra.mxu0 0.0
  %1378 = vmatprep.subr.mxu0 0.0
  %1379 = vmatpush1.msra.mxu0 0.0
  %1380 = vmatprep.subr.mxu0 0.0
  %1381 = vmatpush1.msra.mxu0 0.0
  %1382 = vmatprep.subr.mxu0 0.0
  %1383 = vmatpush1.msra.mxu0 0.0
  %1384 = vmatprep.subr.mxu0 0.0
  %1385 = vmatpush1.msra.mxu0 0.0
  %1386 = vmatprep.subr.mxu0 0.0
  %1387 = vmatpush1.msra.mxu0 0.0
  %1388 = vmatprep.subr.mxu0 0.0
  %1389 = vmatpush1.msra.mxu0 0.0
  %1390 = vmatprep.mubr.f32.mxu0 %v1244
  %1391 = vmatmul.mubr.f32.gmra.mrb[0].mxu0 %v1119
  %v1392 = vpop.f32.mrb[0].mxu0
  %v1393 = vadd.f32 %v1236, %v1392
  %v1394 = vpop.f32.mrb[0].mxu0
  %v1395 = vadd.f32 %v1236, %v1394
  %1396 = vmatprep.mubr.f32.mxu0 %v1247
  %1397 = vmatmul.mubr.f32.gmra.mrb[0].mxu0 %v1121
  %v1398 = vpop.f32.mrb[0].mxu0
  %v1399 = vadd.f32 %v1241, %v1398
  %v1400 = vpop.f32.mrb[0].mxu0
  %v1401 = vadd.f32 %v1241, %v1400
  %1402 = vdwg.mxu0
  %1403 = vmatprep.subr.mxu0 %v1128
  %1404 = vmatpush1.msra.mxu0 %v1127
  %1405 = vmatprep.subr.mxu0 %v1134
  %1406 = vmatpush1.msra.mxu0 %v1133
  %1407 = vmatprep.subr.mxu0 %v1140
  %1408 = vmatpush1.msra.mxu0 %v1139
  %1409 = vmatprep.subr.mxu0 %v1146
  %1410 = vmatpush1.msra.mxu0 %v1145
  %1411 = vmatprep.subr.mxu0 %v1152
  %1412 = vmatpush1.msra.mxu0 %v1151
  %1413 = vmatprep.subr.mxu0 %v1158
  %1414 = vmatpush1.msra.mxu0 %v1157
  %1415 = vmatprep.subr.mxu0 %v1164
  %1416 = vmatpush1.msra.mxu0 %v1163
  %1417 = vmatprep.subr.mxu0 %v1170
  %1418 = vmatpush1.msra.mxu0 %v1169
  %1419 = vmatprep.subr.mxu0 %v1176
  %1420 = vmatpush1.msra.mxu0 %v1175
  %1421 = vmatprep.subr.mxu0 %v1182
  %1422 = vmatpush1.msra.mxu0 %v1181
  %1423 = vmatprep.subr.mxu0 %v1188
  %1424 = vmatpush1.msra.mxu0 %v1187
  %1425 = vmatprep.subr.mxu0 %v1194
  %1426 = vmatpush1.msra.mxu0 %v1193
  %1427 = vmatprep.subr.mxu0 %v1200
  %1428 = vmatpush1.msra.mxu0 %v1199
  %1429 = vmatprep.subr.mxu0 %v1206
  %1430 = vmatpush1.msra.mxu0 %v1205
  %1431 = vmatprep.subr.mxu0 %v1212
  %1432 = vmatpush1.msra.mxu0 %v1211
  %1433 = vmatprep.subr.mxu0 %v1218
  %1434 = vmatpush1.msra.mxu0 %v1217
  %1435 = vmatprep.subr.mxu0 %v1224
  %1436 = vmatpush1.msra.mxu0 %v1223
  %1437 = vmatprep.subr.mxu0 %v1230
  %1438 = vmatpush1.msra.mxu0 %v1229
  %1439 = vmatprep.subr.mxu0 0.0
  %1440 = vmatpush1.msra.mxu0 0.0
  %1441 = vmatprep.subr.mxu0 0.0
  %1442 = vmatpush1.msra.mxu0 0.0
  %1443 = vmatprep.subr.mxu0 0.0
  %1444 = vmatpush1.msra.mxu0 0.0
  %1445 = vmatprep.subr.mxu0 0.0
  %1446 = vmatpush1.msra.mxu0 0.0
  %1447 = vmatprep.subr.mxu0 0.0
  %1448 = vmatpush1.msra.mxu0 0.0
  %1449 = vmatprep.subr.mxu0 0.0
  %1450 = vmatpush1.msra.mxu0 0.0
  %1451 = vmatprep.subr.mxu0 0.0
  %1452 = vmatpush1.msra.mxu0 0.0
  %1453 = vmatprep.subr.mxu0 0.0
  %1454 = vmatpush1.msra.mxu0 0.0
  %1455 = vmatprep.subr.mxu0 0.0
  %1456 = vmatpush1.msra.mxu0 0.0
  %1457 = vmatprep.subr.mxu0 0.0
  %1458 = vmatpush1.msra.mxu0 0.0
  %1459 = vmatprep.subr.mxu0 0.0
  %1460 = vmatpush1.msra.mxu0 0.0
  %1461 = vmatprep.subr.mxu0 0.0
  %1462 = vmatpush1.msra.mxu0 0.0
  %1463 = vmatprep.subr.mxu0 0.0
  %1464 = vmatpush1.msra.mxu0 0.0
  %1465 = vmatprep.subr.mxu0 0.0
  %1466 = vmatpush1.msra.mxu0 0.0
  %1467 = vmatprep.mubr.f32.mxu0 %v1244
  %1468 = vmatmul.mubr.f32.gmra.mrb[0].mxu0 %v1119
  %v1469 = vpop.f32.mrb[0].mxu0
  %v1470 = vadd.f32 %v1236, %v1469
  %v1471 = vpop.f32.mrb[0].mxu0
  %v1472 = vadd.f32 %v1236, %v1471
  %1473 = vmatprep.mubr.f32.mxu0 %v1247
  %1474 = vmatmul.mubr.f32.gmra.mrb[0].mxu0 %v1121
  %v1475 = vpop.f32.mrb[0].mxu0
  %v1476 = vadd.f32 %v1241, %v1475
  %v1477 = vpop.f32.mrb[0].mxu0
  %v1478 = vadd.f32 %v1241, %v1477
  %1479 = vdwg.mxu0
  %v1480 = vmax.f32 %v1316, 0.0
  %v1481 = vmax.f32 %v1318, 0.0
  %v1482 = vmax.f32 %v1393, 0.0
  %v1483 = vmax.f32 %v1395, 0.0
  %v1484 = vmax.f32 %v1470, 0.0
  %v1485 = vmax.f32 %v1472, 0.0
  %v1486 = vmax.f32 %v1322, 0.0
  %v1487 = vmax.f32 %v1324, 0.0
  %v1488 = vmax.f32 %v1399, 0.0
  %v1489 = vmax.f32 %v1401, 0.0
  %v1490 = vmax.f32 %v1476, 0.0
  %v1491 = vmax.f32 %v1478, 0.0
  %v1492 = vmin.f32 %v1480, 20.0
  %v1493 = vmin.f32 %v1481, 20.0
  %v1494 = vmin.f32 %v1482, 20.0
  %v1495 = vmin.f32 %v1483, 20.0
  %v1496 = vmin.f32 %v1484, 20.0
  %v1497 = vmin.f32 %v1485, 20.0
  %v1498 = vmin.f32 %v1486, 20.0
  %v1499 = vmin.f32 %v1487, 20.0
  %v1500 = vmin.f32 %v1488, 20.0
  %v1501 = vmin.f32 %v1489, 20.0
  %v1502 = vmin.f32 %v1490, 20.0
  %v1503 = vmin.f32 %v1491, 20.0
  %v1504 = vmul.f32 %v1492, %v46
  %v1505 = vmul.f32 %v1493, %v50
  %v1506 = vmul.f32 %v1494, %v54
  %v1507 = vmul.f32 %v1495, %v58
  %v1508 = vmul.f32 %v1496, %v62
  %v1509 = vmul.f32 %v1497, %v66
  %v1510 = vmul.f32 %v1498, %v46
  %v1511 = vmul.f32 %v1499, %v50
  %v1512 = vmul.f32 %v1500, %v54
  %v1513 = vmul.f32 %v1501, %v58
  %v1514 = vmul.f32 %v1502, %v62
  %v1515 = vmul.f32 %v1503, %v66
  %1516 = vst [vmem:[#allocation3] sm:$0xff] %v1504
  %1517 = vst [vmem:[#allocation3 + $0x8] sm:$0xff] %v1505
  %1518 = vst [vmem:[#allocation3 + $0x10] sm:$0xff] %v1506
  %1519 = vst [vmem:[#allocation3 + $0x18] sm:$0xff] %v1507
  %1520 = vst [vmem:[#allocation3 + $0x20] sm:$0xff] %v1508
  %1521 = vst [vmem:[#allocation3 + $0x28] sm:$0xff] %v1509
  %1522 = vst [vmem:[#allocation3 + $0x30] sm:$0xff] %v1510
  %1523 = vst [vmem:[#allocation3 + $0x38] sm:$0xff] %v1511
  %1524 = vst [vmem:[#allocation3 + $0x40] sm:$0xff] %v1512
  %1525 = vst [vmem:[#allocation3 + $0x48] sm:$0xff] %v1513
  %1526 = vst [vmem:[#allocation3 + $0x50] sm:$0xff] %v1514
  %1527 = vst [vmem:[#allocation3 + $0x58] sm:$0xff] %v1515
  %v1528 = vmul.f32 %v689, %v46
  %v1529 = vmul.f32 %v690, %v50
  %v1530 = vmul.f32 %v691, %v54
  %v1531 = vmul.f32 %v692, %v58
  %v1532 = vmul.f32 %v693, %v62
  %v1533 = vmul.f32 %v694, %v66
  %v1534 = vmul.f32 %v695, %v46
  %v1535 = vmul.f32 %v696, %v50
  %v1536 = vmul.f32 %v697, %v54
  %v1537 = vmul.f32 %v698, %v58
  %v1538 = vmul.f32 %v699, %v62
  %v1539 = vmul.f32 %v700, %v66
  %v1540 = vadd.f32 %v1504, %v1528
  %v1541 = vadd.f32 %v1505, %v1529
  %v1542 = vadd.f32 %v1506, %v1530
  %v1543 = vadd.f32 %v1507, %v1531
  %v1544 = vadd.f32 %v1508, %v1532
  %v1545 = vadd.f32 %v1509, %v1533
  %v1546 = vadd.f32 %v1510, %v1534
  %v1547 = vadd.f32 %v1511, %v1535
  %v1548 = vadd.f32 %v1512, %v1536
  %v1549 = vadd.f32 %v1513, %v1537
  %v1550 = vadd.f32 %v1514, %v1538
  %v1551 = vadd.f32 %v1515, %v1539
  %1552 = vrot.lane.b32.xlu0 %v1540, 19
  %v1553 = vpop.permute.xlu0 %1552
  %1554 = vrot.lane.b32.xlu0 %v1546, 19
  %v1555 = vpop.permute.xlu0 %1554
  %1556 = vrot.lane.b32.xlu0 %v1541, 19
  %v1557 = vpop.permute.xlu0 %1556
  %1558 = vrot.lane.b32.xlu0 %v1547, 19
  %v1559 = vpop.permute.xlu0 %1558
  %1560 = vrot.lane.b32.xlu0 %v1542, 19
  %v1561 = vpop.permute.xlu0 %1560
  %1562 = vrot.lane.b32.xlu0 %v1548, 19
  %v1563 = vpop.permute.xlu0 %1562
  %1564 = vrot.lane.b32.xlu0 %v1543, 19
  %v1565 = vpop.permute.xlu0 %1564
  %1566 = vrot.lane.b32.xlu0 %v1549, 19
  %v1567 = vpop.permute.xlu0 %1566
  %1568 = vrot.lane.b32.xlu0 %v1544, 19
  %v1569 = vpop.permute.xlu0 %1568
  %1570 = vrot.lane.b32.xlu0 %v1550, 19
  %v1571 = vpop.permute.xlu0 %1570
  %1572 = vrot.lane.b32.xlu0 %v1545, 19
  %v1573 = vpop.permute.xlu0 %1572
  %1574 = vrot.lane.b32.xlu0 %v1551, 19
  %v1575 = vpop.permute.xlu0 %1574
  %v1576 = vsel %vm739, %v1569, %v1573
  %v1577 = vsel %vm739, %v1571, %v1575
  %v1578 = vsel %vm739, %v1565, %v1569
  %v1579 = vsel %vm739, %v1567, %v1571
  %v1580 = vsel %vm739, %v1561, %v1565
  %v1581 = vsel %vm739, %v1563, %v1567
  %v1582 = vsel %vm739, %v1557, %v1561
  %v1583 = vsel %vm739, %v1559, %v1563
  %v1584 = vsel %vm739, %v1553, %v1557
  %v1585 = vsel %vm739, %v1555, %v1559
  %v1586 = vsel %vm739, %v1573, %v1553
  %v1587 = vsel %vm739, %v1575, %v1555
  %1588 = vst [vmem:[#allocation2] sm:$0xff] %v1586
  %1589 = vst [vmem:[#allocation2 + $0x8] sm:$0xff] %v1584
  %1590 = vst [vmem:[#allocation2 + $0x10] sm:$0xff] %v1582
  %1591 = vst [vmem:[#allocation2 + $0x18] sm:$0xff] %v1580
  %1592 = vst [vmem:[#allocation2 + $0x20] sm:$0xff] %v1578
  %1593 = vst [vmem:[#allocation2 + $0x28] sm:$0xff] %v1576
  %1594 = vst [vmem:[#allocation2 + $0x30] sm:$0xff] %v1587
  %1595 = vst [vmem:[#allocation2 + $0x38] sm:$0xff] %v1585
  %1596 = vst [vmem:[#allocation2 + $0x40] sm:$0xff] %v1583
  %1597 = vst [vmem:[#allocation2 + $0x48] sm:$0xff] %v1581
  %1598 = vst [vmem:[#allocation2 + $0x50] sm:$0xff] %v1579
  %1599 = vst [vmem:[#allocation2 + $0x58] sm:$0xff] %v1577
  %1600 = vrot.lane.b32.xlu0 %v1540, 18
  %v1601 = vpop.permute.xlu0 %1600
  %1602 = vrot.lane.b32.xlu0 %v1546, 18
  %v1603 = vpop.permute.xlu0 %1602
  %1604 = vrot.lane.b32.xlu0 %v1541, 18
  %v1605 = vpop.permute.xlu0 %1604
  %1606 = vrot.lane.b32.xlu0 %v1547, 18
  %v1607 = vpop.permute.xlu0 %1606
  %1608 = vrot.lane.b32.xlu0 %v1542, 18
  %v1609 = vpop.permute.xlu0 %1608
  %1610 = vrot.lane.b32.xlu0 %v1548, 18
  %v1611 = vpop.permute.xlu0 %1610
  %1612 = vrot.lane.b32.xlu0 %v1543, 18
  %v1613 = vpop.permute.xlu0 %1612
  %1614 = vrot.lane.b32.xlu0 %v1549, 18
  %v1615 = vpop.permute.xlu0 %1614
  %1616 = vrot.lane.b32.xlu0 %v1544, 18
  %v1617 = vpop.permute.xlu0 %1616
  %1618 = vrot.lane.b32.xlu0 %v1550, 18
  %v1619 = vpop.permute.xlu0 %1618
  %1620 = vrot.lane.b32.xlu0 %v1545, 18
  %v1621 = vpop.permute.xlu0 %1620
  %1622 = vrot.lane.b32.xlu0 %v1551, 18
  %v1623 = vpop.permute.xlu0 %1622
  %v1624 = vsel %vm788, %v1617, %v1621
  %v1625 = vsel %vm788, %v1619, %v1623
  %v1626 = vsel %vm788, %v1613, %v1617
  %v1627 = vsel %vm788, %v1615, %v1619
  %v1628 = vsel %vm788, %v1609, %v1613
  %v1629 = vsel %vm788, %v1611, %v1615
  %v1630 = vsel %vm788, %v1605, %v1609
  %v1631 = vsel %vm788, %v1607, %v1611
  %v1632 = vsel %vm788, %v1601, %v1605
  %v1633 = vsel %vm788, %v1603, %v1607
  %v1634 = vsel %vm788, %v1621, %v1601
  %v1635 = vsel %vm788, %v1623, %v1603
  %1636 = vst [vmem:[#allocation2 + $0x60] sm:$0xff] %v1634
  %1637 = vst [vmem:[#allocation2 + $0x68] sm:$0xff] %v1632
  %1638 = vst [vmem:[#allocation2 + $0x70] sm:$0xff] %v1630
  %1639 = vst [vmem:[#allocation2 + $0x78] sm:$0xff] %v1628
  %1640 = vst [vmem:[#allocation2 + $0x80] sm:$0xff] %v1626
  %1641 = vst [vmem:[#allocation2 + $0x88] sm:$0xff] %v1624
  %1642 = vst [vmem:[#allocation2 + $0x90] sm:$0xff] %v1635
  %1643 = vst [vmem:[#allocation2 + $0x98] sm:$0xff] %v1633
  %1644 = vst [vmem:[#allocation2 + $0xa0] sm:$0xff] %v1631
  %1645 = vst [vmem:[#allocation2 + $0xa8] sm:$0xff] %v1629
  %1646 = vst [vmem:[#allocation2 + $0xb0] sm:$0xff] %v1627
  %1647 = vst [vmem:[#allocation2 + $0xb8] sm:$0xff] %v1625
  %1648 = vrot.lane.b32.xlu0 %v1540, 17
  %v1649 = vpop.permute.xlu0 %1648
  %1650 = vrot.lane.b32.xlu0 %v1546, 17
  %v1651 = vpop.permute.xlu0 %1650
  %1652 = vrot.lane.b32.xlu0 %v1541, 17
  %v1653 = vpop.permute.xlu0 %1652
  %1654 = vrot.lane.b32.xlu0 %v1547, 17
  %v1655 = vpop.permute.xlu0 %1654
  %1656 = vrot.lane.b32.xlu0 %v1542, 17
  %v1657 = vpop.permute.xlu0 %1656
  %1658 = vrot.lane.b32.xlu0 %v1548, 17
  %v1659 = vpop.permute.xlu0 %1658
  %1660 = vrot.lane.b32.xlu0 %v1543, 17
  %v1661 = vpop.permute.xlu0 %1660
  %1662 = vrot.lane.b32.xlu0 %v1549, 17
  %v1663 = vpop.permute.xlu0 %1662
  %1664 = vrot.lane.b32.xlu0 %v1544, 17
  %v1665 = vpop.permute.xlu0 %1664
  %1666 = vrot.lane.b32.xlu0 %v1550, 17
  %v1667 = vpop.permute.xlu0 %1666
  %1668 = vrot.lane.b32.xlu0 %v1545, 17
  %v1669 = vpop.permute.xlu0 %1668
  %1670 = vrot.lane.b32.xlu0 %v1551, 17
  %v1671 = vpop.permute.xlu0 %1670
  %v1672 = vsel %vm837, %v1665, %v1669
  %v1673 = vsel %vm837, %v1667, %v1671
  %v1674 = vsel %vm837, %v1661, %v1665
  %v1675 = vsel %vm837, %v1663, %v1667
  %v1676 = vsel %vm837, %v1657, %v1661
  %v1677 = vsel %vm837, %v1659, %v1663
  %v1678 = vsel %vm837, %v1653, %v1657
  %v1679 = vsel %vm837, %v1655, %v1659
  %v1680 = vsel %vm837, %v1649, %v1653
  %v1681 = vsel %vm837, %v1651, %v1655
  %v1682 = vsel %vm837, %v1669, %v1649
  %v1683 = vsel %vm837, %v1671, %v1651
  %1684 = vst [vmem:[#allocation2 + $0xc0] sm:$0xff] %v1682
  %1685 = vst [vmem:[#allocation2 + $0xc8] sm:$0xff] %v1680
  %1686 = vst [vmem:[#allocation2 + $0xd0] sm:$0xff] %v1678
  %1687 = vst [vmem:[#allocation2 + $0xd8] sm:$0xff] %v1676
  %1688 = vst [vmem:[#allocation2 + $0xe0] sm:$0xff] %v1674
  %1689 = vst [vmem:[#allocation2 + $0xe8] sm:$0xff] %v1672
  %1690 = vst [vmem:[#allocation2 + $0xf0] sm:$0xff] %v1683
  %1691 = vst [vmem:[#allocation2 + $0xf8] sm:$0xff] %v1681
  %1692 = vst [vmem:[#allocation2 + $0x100] sm:$0xff] %v1679
  %1693 = vst [vmem:[#allocation2 + $0x108] sm:$0xff] %v1677
  %1694 = vst [vmem:[#allocation2 + $0x110] sm:$0xff] %v1675
  %1695 = vst [vmem:[#allocation2 + $0x118] sm:$0xff] %v1673
  %1696 = vrot.lane.b32.xlu0 %v1540, 1
  %v1697 = vpop.permute.xlu0 %1696
  %1698 = vrot.lane.b32.xlu0 %v1546, 1
  %v1699 = vpop.permute.xlu0 %1698
  %1700 = vrot.lane.b32.xlu0 %v1541, 1
  %v1701 = vpop.permute.xlu0 %1700
  %1702 = vrot.lane.b32.xlu0 %v1547, 1
  %v1703 = vpop.permute.xlu0 %1702
  %1704 = vrot.lane.b32.xlu0 %v1542, 1
  %v1705 = vpop.permute.xlu0 %1704
  %1706 = vrot.lane.b32.xlu0 %v1548, 1
  %v1707 = vpop.permute.xlu0 %1706
  %1708 = vrot.lane.b32.xlu0 %v1543, 1
  %v1709 = vpop.permute.xlu0 %1708
  %1710 = vrot.lane.b32.xlu0 %v1549, 1
  %v1711 = vpop.permute.xlu0 %1710
  %1712 = vrot.lane.b32.xlu0 %v1544, 1
  %v1713 = vpop.permute.xlu0 %1712
  %1714 = vrot.lane.b32.xlu0 %v1550, 1
  %v1715 = vpop.permute.xlu0 %1714
  %1716 = vrot.lane.b32.xlu0 %v1545, 1
  %v1717 = vpop.permute.xlu0 %1716
  %1718 = vrot.lane.b32.xlu0 %v1551, 1
  %v1719 = vpop.permute.xlu0 %1718
  %v1720 = vsel %vm886, %v1713, %v1717
  %v1721 = vsel %vm886, %v1715, %v1719
  %v1722 = vsel %vm886, %v1709, %v1713
  %v1723 = vsel %vm886, %v1711, %v1715
  %v1724 = vsel %vm886, %v1705, %v1709
  %v1725 = vsel %vm886, %v1707, %v1711
  %v1726 = vsel %vm886, %v1701, %v1705
  %v1727 = vsel %vm886, %v1703, %v1707
  %v1728 = vsel %vm886, %v1697, %v1701
  %v1729 = vsel %vm886, %v1699, %v1703
  %v1730 = vsel %vm886, %v1717, %v1697
  %v1731 = vsel %vm886, %v1719, %v1699
  %1732 = vst [vmem:[#allocation2 + $0x120] sm:$0xff] %v1730
  %1733 = vst [vmem:[#allocation2 + $0x128] sm:$0xff] %v1728
  %1734 = vst [vmem:[#allocation2 + $0x130] sm:$0xff] %v1726
  %1735 = vst [vmem:[#allocation2 + $0x138] sm:$0xff] %v1724
  %1736 = vst [vmem:[#allocation2 + $0x140] sm:$0xff] %v1722
  %1737 = vst [vmem:[#allocation2 + $0x148] sm:$0xff] %v1720
  %1738 = vst [vmem:[#allocation2 + $0x150] sm:$0xff] %v1731
  %1739 = vst [vmem:[#allocation2 + $0x158] sm:$0xff] %v1729
  %1740 = vst [vmem:[#allocation2 + $0x160] sm:$0xff] %v1727
  %1741 = vst [vmem:[#allocation2 + $0x168] sm:$0xff] %v1725
  %1742 = vst [vmem:[#allocation2 + $0x170] sm:$0xff] %v1723
  %1743 = vst [vmem:[#allocation2 + $0x178] sm:$0xff] %v1721
  %1744 = vst [vmem:[#allocation2 + $0x180] sm:$0xff] %v1540
  %1745 = vst [vmem:[#allocation2 + $0x188] sm:$0xff] %v1541
  %1746 = vst [vmem:[#allocation2 + $0x190] sm:$0xff] %v1542
  %1747 = vst [vmem:[#allocation2 + $0x198] sm:$0xff] %v1543
  %1748 = vst [vmem:[#allocation2 + $0x1a0] sm:$0xff] %v1544
  %1749 = vst [vmem:[#allocation2 + $0x1a8] sm:$0xff] %v1545
  %1750 = vst [vmem:[#allocation2 + $0x1b0] sm:$0xff] %v1546
  %1751 = vst [vmem:[#allocation2 + $0x1b8] sm:$0xff] %v1547
  %1752 = vst [vmem:[#allocation2 + $0x1c0] sm:$0xff] %v1548
  %1753 = vst [vmem:[#allocation2 + $0x1c8] sm:$0xff] %v1549
  %1754 = vst [vmem:[#allocation2 + $0x1d0] sm:$0xff] %v1550
  %1755 = vst [vmem:[#allocation2 + $0x1d8] sm:$0xff] %v1551
  %1756 = vrot.lane.b32.xlu0 %v1540, 127
  %v1757 = vpop.permute.xlu0 %1756
  %1758 = vrot.lane.b32.xlu0 %v1546, 127
  %v1759 = vpop.permute.xlu0 %1758
  %1760 = vrot.lane.b32.xlu0 %v1541, 127
  %v1761 = vpop.permute.xlu0 %1760
  %1762 = vrot.lane.b32.xlu0 %v1547, 127
  %v1763 = vpop.permute.xlu0 %1762
  %1764 = vrot.lane.b32.xlu0 %v1542, 127
  %v1765 = vpop.permute.xlu0 %1764
  %1766 = vrot.lane.b32.xlu0 %v1548, 127
  %v1767 = vpop.permute.xlu0 %1766
  %1768 = vrot.lane.b32.xlu0 %v1543, 127
  %v1769 = vpop.permute.xlu0 %1768
  %1770 = vrot.lane.b32.xlu0 %v1549, 127
  %v1771 = vpop.permute.xlu0 %1770
  %1772 = vrot.lane.b32.xlu0 %v1544, 127
  %v1773 = vpop.permute.xlu0 %1772
  %1774 = vrot.lane.b32.xlu0 %v1550, 127
  %v1775 = vpop.permute.xlu0 %1774
  %1776 = vrot.lane.b32.xlu0 %v1545, 127
  %v1777 = vpop.permute.xlu0 %1776
  %1778 = vrot.lane.b32.xlu0 %v1551, 127
  %v1779 = vpop.permute.xlu0 %1778
  %v1780 = vsel %vm947, %v1773, %v1777
  %v1781 = vsel %vm947, %v1775, %v1779
  %v1782 = vsel %vm947, %v1769, %v1773
  %v1783 = vsel %vm947, %v1771, %v1775
  %v1784 = vsel %vm947, %v1765, %v1769
  %v1785 = vsel %vm947, %v1767, %v1771
  %v1786 = vsel %vm947, %v1761, %v1765
  %v1787 = vsel %vm947, %v1763, %v1767
  %v1788 = vsel %vm947, %v1757, %v1761
  %v1789 = vsel %vm947, %v1759, %v1763
  %v1790 = vsel %vm947, %v1777, %v1757
  %v1791 = vsel %vm947, %v1779, %v1759
  %1792 = vst [vmem:[#allocation2 + $0x1e0] sm:$0xff] %v1788
  %1793 = vst [vmem:[#allocation2 + $0x1e8] sm:$0xff] %v1786
  %1794 = vst [vmem:[#allocation2 + $0x1f0] sm:$0xff] %v1784
  %1795 = vst [vmem:[#allocation2 + $0x1f8] sm:$0xff] %v1782
  %1796 = vst [vmem:[#allocation2 + $0x200] sm:$0xff] %v1780
  %1797 = vst [vmem:[#allocation2 + $0x208] sm:$0xff] %v1790
  %1798 = vst [vmem:[#allocation2 + $0x210] sm:$0xff] %v1789
  %1799 = vst [vmem:[#allocation2 + $0x218] sm:$0xff] %v1787
  %1800 = vst [vmem:[#allocation2 + $0x220] sm:$0xff] %v1785
  %1801 = vst [vmem:[#allocation2 + $0x228] sm:$0xff] %v1783
  %1802 = vst [vmem:[#allocation2 + $0x230] sm:$0xff] %v1781
  %1803 = vst [vmem:[#allocation2 + $0x238] sm:$0xff] %v1791
  %1804 = vrot.lane.b32.xlu0 %v1540, 111
  %v1805 = vpop.permute.xlu0 %1804
  %1806 = vrot.lane.b32.xlu0 %v1546, 111
  %v1807 = vpop.permute.xlu0 %1806
  %1808 = vrot.lane.b32.xlu0 %v1541, 111
  %v1809 = vpop.permute.xlu0 %1808
  %1810 = vrot.lane.b32.xlu0 %v1547, 111
  %v1811 = vpop.permute.xlu0 %1810
  %1812 = vrot.lane.b32.xlu0 %v1542, 111
  %v1813 = vpop.permute.xlu0 %1812
  %1814 = vrot.lane.b32.xlu0 %v1548, 111
  %v1815 = vpop.permute.xlu0 %1814
  %1816 = vrot.lane.b32.xlu0 %v1543, 111
  %v1817 = vpop.permute.xlu0 %1816
  %1818 = vrot.lane.b32.xlu0 %v1549, 111
  %v1819 = vpop.permute.xlu0 %1818
  %1820 = vrot.lane.b32.xlu0 %v1544, 111
  %v1821 = vpop.permute.xlu0 %1820
  %1822 = vrot.lane.b32.xlu0 %v1550, 111
  %v1823 = vpop.permute.xlu0 %1822
  %1824 = vrot.lane.b32.xlu0 %v1545, 111
  %v1825 = vpop.permute.xlu0 %1824
  %1826 = vrot.lane.b32.xlu0 %v1551, 111
  %v1827 = vpop.permute.xlu0 %1826
  %v1828 = vsel %vm996, %v1821, %v1825
  %v1829 = vsel %vm996, %v1823, %v1827
  %v1830 = vsel %vm996, %v1817, %v1821
  %v1831 = vsel %vm996, %v1819, %v1823
  %v1832 = vsel %vm996, %v1813, %v1817
  %v1833 = vsel %vm996, %v1815, %v1819
  %v1834 = vsel %vm996, %v1809, %v1813
  %v1835 = vsel %vm996, %v1811, %v1815
  %v1836 = vsel %vm996, %v1805, %v1809
  %v1837 = vsel %vm996, %v1807, %v1811
  %v1838 = vsel %vm996, %v1825, %v1805
  %v1839 = vsel %vm996, %v1827, %v1807
  %1840 = vst [vmem:[#allocation2 + $0x240] sm:$0xff] %v1836
  %1841 = vst [vmem:[#allocation2 + $0x248] sm:$0xff] %v1834
  %1842 = vst [vmem:[#allocation2 + $0x250] sm:$0xff] %v1832
  %1843 = vst [vmem:[#allocation2 + $0x258] sm:$0xff] %v1830
  %1844 = vst [vmem:[#allocation2 + $0x260] sm:$0xff] %v1828
  %1845 = vst [vmem:[#allocation2 + $0x268] sm:$0xff] %v1838
  %1846 = vst [vmem:[#allocation2 + $0x270] sm:$0xff] %v1837
  %1847 = vst [vmem:[#allocation2 + $0x278] sm:$0xff] %v1835
  %1848 = vst [vmem:[#allocation2 + $0x280] sm:$0xff] %v1833
  %1849 = vst [vmem:[#allocation2 + $0x288] sm:$0xff] %v1831
  %1850 = vst [vmem:[#allocation2 + $0x290] sm:$0xff] %v1829
  %1851 = vst [vmem:[#allocation2 + $0x298] sm:$0xff] %v1839
  %1852 = vrot.lane.b32.xlu0 %v1540, 110
  %v1853 = vpop.permute.xlu0 %1852
  %1854 = vrot.lane.b32.xlu0 %v1546, 110
  %v1855 = vpop.permute.xlu0 %1854
  %1856 = vrot.lane.b32.xlu0 %v1541, 110
  %v1857 = vpop.permute.xlu0 %1856
  %1858 = vrot.lane.b32.xlu0 %v1547, 110
  %v1859 = vpop.permute.xlu0 %1858
  %1860 = vrot.lane.b32.xlu0 %v1542, 110
  %v1861 = vpop.permute.xlu0 %1860
  %1862 = vrot.lane.b32.xlu0 %v1548, 110
  %v1863 = vpop.permute.xlu0 %1862
  %1864 = vrot.lane.b32.xlu0 %v1543, 110
  %v1865 = vpop.permute.xlu0 %1864
  %1866 = vrot.lane.b32.xlu0 %v1549, 110
  %v1867 = vpop.permute.xlu0 %1866
  %1868 = vrot.lane.b32.xlu0 %v1544, 110
  %v1869 = vpop.permute.xlu0 %1868
  %1870 = vrot.lane.b32.xlu0 %v1550, 110
  %v1871 = vpop.permute.xlu0 %1870
  %1872 = vrot.lane.b32.xlu0 %v1545, 110
  %v1873 = vpop.permute.xlu0 %1872
  %1874 = vrot.lane.b32.xlu0 %v1551, 110
  %v1875 = vpop.permute.xlu0 %1874
  %v1876 = vsel %vm1045, %v1869, %v1873
  %v1877 = vsel %vm1045, %v1871, %v1875
  %v1878 = vsel %vm1045, %v1865, %v1869
  %v1879 = vsel %vm1045, %v1867, %v1871
  %v1880 = vsel %vm1045, %v1861, %v1865
  %v1881 = vsel %vm1045, %v1863, %v1867
  %v1882 = vsel %vm1045, %v1857, %v1861
  %v1883 = vsel %vm1045, %v1859, %v1863
  %v1884 = vsel %vm1045, %v1853, %v1857
  %v1885 = vsel %vm1045, %v1855, %v1859
  %v1886 = vsel %vm1045, %v1873, %v1853
  %v1887 = vsel %vm1045, %v1875, %v1855
  %1888 = vst [vmem:[#allocation2 + $0x2a0] sm:$0xff] %v1884
  %1889 = vst [vmem:[#allocation2 + $0x2a8] sm:$0xff] %v1882
  %1890 = vst [vmem:[#allocation2 + $0x2b0] sm:$0xff] %v1880
  %1891 = vst [vmem:[#allocation2 + $0x2b8] sm:$0xff] %v1878
  %1892 = vst [vmem:[#allocation2 + $0x2c0] sm:$0xff] %v1876
  %1893 = vst [vmem:[#allocation2 + $0x2c8] sm:$0xff] %v1886
  %1894 = vst [vmem:[#allocation2 + $0x2d0] sm:$0xff] %v1885
  %1895 = vst [vmem:[#allocation2 + $0x2d8] sm:$0xff] %v1883
  %1896 = vst [vmem:[#allocation2 + $0x2e0] sm:$0xff] %v1881
  %1897 = vst [vmem:[#allocation2 + $0x2e8] sm:$0xff] %v1879
  %1898 = vst [vmem:[#allocation2 + $0x2f0] sm:$0xff] %v1877
  %1899 = vst [vmem:[#allocation2 + $0x2f8] sm:$0xff] %v1887
  %1900 = vrot.lane.b32.xlu0 %v1540, 109
  %v1901 = vpop.permute.xlu0 %1900
  %1902 = vrot.lane.b32.xlu0 %v1546, 109
  %v1903 = vpop.permute.xlu0 %1902
  %1904 = vrot.lane.b32.xlu0 %v1541, 109
  %v1905 = vpop.permute.xlu0 %1904
  %1906 = vrot.lane.b32.xlu0 %v1547, 109
  %v1907 = vpop.permute.xlu0 %1906
  %1908 = vrot.lane.b32.xlu0 %v1542, 109
  %v1909 = vpop.permute.xlu0 %1908
  %1910 = vrot.lane.b32.xlu0 %v1548, 109
  %v1911 = vpop.permute.xlu0 %1910
  %1912 = vrot.lane.b32.xlu0 %v1543, 109
  %v1913 = vpop.permute.xlu0 %1912
  %1914 = vrot.lane.b32.xlu0 %v1549, 109
  %v1915 = vpop.permute.xlu0 %1914
  %1916 = vrot.lane.b32.xlu0 %v1544, 109
  %v1917 = vpop.permute.xlu0 %1916
  %1918 = vrot.lane.b32.xlu0 %v1550, 109
  %v1919 = vpop.permute.xlu0 %1918
  %1920 = vrot.lane.b32.xlu0 %v1545, 109
  %v1921 = vpop.permute.xlu0 %1920
  %1922 = vrot.lane.b32.xlu0 %v1551, 109
  %v1923 = vpop.permute.xlu0 %1922
  %v1924 = vsel %vm1094, %v1917, %v1921
  %v1925 = vsel %vm1094, %v1919, %v1923
  %v1926 = vsel %vm1094, %v1913, %v1917
  %v1927 = vsel %vm1094, %v1915, %v1919
  %v1928 = vsel %vm1094, %v1909, %v1913
  %v1929 = vsel %vm1094, %v1911, %v1915
  %v1930 = vsel %vm1094, %v1905, %v1909
  %v1931 = vsel %vm1094, %v1907, %v1911
  %v1932 = vsel %vm1094, %v1901, %v1905
  %v1933 = vsel %vm1094, %v1903, %v1907
  %v1934 = vsel %vm1094, %v1921, %v1901
  %v1935 = vsel %vm1094, %v1923, %v1903
  %1936 = vst [vmem:[#allocation2 + $0x300] sm:$0xff] %v1932
  %1937 = vst [vmem:[#allocation2 + $0x308] sm:$0xff] %v1930
  %1938 = vst [vmem:[#allocation2 + $0x310] sm:$0xff] %v1928
  %1939 = vst [vmem:[#allocation2 + $0x318] sm:$0xff] %v1926
  %1940 = vst [vmem:[#allocation2 + $0x320] sm:$0xff] %v1924
  %1941 = vst [vmem:[#allocation2 + $0x328] sm:$0xff] %v1934
  %1942 = vst [vmem:[#allocation2 + $0x330] sm:$0xff] %v1933
  %1943 = vst [vmem:[#allocation2 + $0x338] sm:$0xff] %v1931
  %1944 = vst [vmem:[#allocation2 + $0x340] sm:$0xff] %v1929
  %1945 = vst [vmem:[#allocation2 + $0x348] sm:$0xff] %v1927
  %1946 = vst [vmem:[#allocation2 + $0x350] sm:$0xff] %v1925
  %1947 = vst [vmem:[#allocation2 + $0x358] sm:$0xff] %v1935
  %s1948 = scalar_lea.vmem %s4, 32
  %v1949 = vld [vmem:[%s1948] sm:$0xff]
  %v1950 = vld [vmem:[%s1948 + $0x8] sm:$0xff]
  %v1951 = vld [vmem:[%s1948 + $0x10] sm:$0xff]
  %v1952 = vld [vmem:[%s1948 + $0x18] sm:$0xff]
  %v1953 = vld [vmem:[#allocation2] sm:$0xff]
  %v1954 = vld [vmem:[#allocation2 + $0x8] sm:$0xff]
  %v1955 = vld [vmem:[#allocation2 + $0x10] sm:$0xff]
  %v1956 = vld [vmem:[#allocation2 + $0x18] sm:$0xff]
  %v1957 = vld [vmem:[#allocation2 + $0x20] sm:$0xff]
  %v1958 = vld [vmem:[#allocation2 + $0x28] sm:$0xff]
  %v1959 = vld [vmem:[#allocation2 + $0x30] sm:$0xff]
  %v1960 = vld [vmem:[#allocation2 + $0x38] sm:$0xff]
  %v1961 = vld [vmem:[#allocation2 + $0x40] sm:$0xff]
  %v1962 = vld [vmem:[#allocation2 + $0x48] sm:$0xff]
  %v1963 = vld [vmem:[#allocation2 + $0x50] sm:$0xff]
  %v1964 = vld [vmem:[#allocation2 + $0x58] sm:$0xff]
  %v1965 = vld [vmem:[#allocation2 + $0x60] sm:$0xff]
  %v1966 = vld [vmem:[#allocation2 + $0x68] sm:$0xff]
  %v1967 = vld [vmem:[#allocation2 + $0x70] sm:$0xff]
  %v1968 = vld [vmem:[#allocation2 + $0x78] sm:$0xff]
  %v1969 = vld [vmem:[#allocation2 + $0x80] sm:$0xff]
  %v1970 = vld [vmem:[#allocation2 + $0x88] sm:$0xff]
  %v1971 = vld [vmem:[#allocation2 + $0x90] sm:$0xff]
  %v1972 = vld [vmem:[#allocation2 + $0x98] sm:$0xff]
  %v1973 = vld [vmem:[#allocation2 + $0xa0] sm:$0xff]
  %v1974 = vld [vmem:[#allocation2 + $0xa8] sm:$0xff]
  %v1975 = vld [vmem:[#allocation2 + $0xb0] sm:$0xff]
  %v1976 = vld [vmem:[#allocation2 + $0xb8] sm:$0xff]
  %v1977 = vld [vmem:[#allocation2 + $0xc0] sm:$0xff]
  %v1978 = vld [vmem:[#allocation2 + $0xc8] sm:$0xff]
  %v1979 = vld [vmem:[#allocation2 + $0xd0] sm:$0xff]
  %v1980 = vld [vmem:[#allocation2 + $0xd8] sm:$0xff]
  %v1981 = vld [vmem:[#allocation2 + $0xe0] sm:$0xff]
  %v1982 = vld [vmem:[#allocation2 + $0xe8] sm:$0xff]
  %v1983 = vld [vmem:[#allocation2 + $0xf0] sm:$0xff]
  %v1984 = vld [vmem:[#allocation2 + $0xf8] sm:$0xff]
  %v1985 = vld [vmem:[#allocation2 + $0x100] sm:$0xff]
  %v1986 = vld [vmem:[#allocation2 + $0x108] sm:$0xff]
  %v1987 = vld [vmem:[#allocation2 + $0x110] sm:$0xff]
  %v1988 = vld [vmem:[#allocation2 + $0x118] sm:$0xff]
  %v1989 = vld [vmem:[#allocation2 + $0x120] sm:$0xff]
  %v1990 = vld [vmem:[#allocation2 + $0x128] sm:$0xff]
  %v1991 = vld [vmem:[#allocation2 + $0x130] sm:$0xff]
  %v1992 = vld [vmem:[#allocation2 + $0x138] sm:$0xff]
  %v1993 = vld [vmem:[#allocation2 + $0x140] sm:$0xff]
  %v1994 = vld [vmem:[#allocation2 + $0x148] sm:$0xff]
  %v1995 = vld [vmem:[#allocation2 + $0x150] sm:$0xff]
  %v1996 = vld [vmem:[#allocation2 + $0x158] sm:$0xff]
  %v1997 = vld [vmem:[#allocation2 + $0x160] sm:$0xff]
  %v1998 = vld [vmem:[#allocation2 + $0x168] sm:$0xff]
  %v1999 = vld [vmem:[#allocation2 + $0x170] sm:$0xff]
  %v2000 = vld [vmem:[#allocation2 + $0x178] sm:$0xff]
  %v2001 = vld [vmem:[#allocation2 + $0x180] sm:$0xff]
  %v2002 = vld [vmem:[#allocation2 + $0x188] sm:$0xff]
  %v2003 = vld [vmem:[#allocation2 + $0x190] sm:$0xff]
  %v2004 = vld [vmem:[#allocation2 + $0x198] sm:$0xff]
  %v2005 = vld [vmem:[#allocation2 + $0x1a0] sm:$0xff]
  %v2006 = vld [vmem:[#allocation2 + $0x1a8] sm:$0xff]
  %v2007 = vld [vmem:[#allocation2 + $0x1b0] sm:$0xff]
  %v2008 = vld [vmem:[#allocation2 + $0x1b8] sm:$0xff]
  %v2009 = vld [vmem:[#allocation2 + $0x1c0] sm:$0xff]
  %v2010 = vld [vmem:[#allocation2 + $0x1c8] sm:$0xff]
  %v2011 = vld [vmem:[#allocation2 + $0x1d0] sm:$0xff]
  %v2012 = vld [vmem:[#allocation2 + $0x1d8] sm:$0xff]
  %v2013 = vld [vmem:[#allocation2 + $0x1e0] sm:$0xff]
  %v2014 = vld [vmem:[#allocation2 + $0x1e8] sm:$0xff]
  %v2015 = vld [vmem:[#allocation2 + $0x1f0] sm:$0xff]
  %v2016 = vld [vmem:[#allocation2 + $0x1f8] sm:$0xff]
  %v2017 = vld [vmem:[#allocation2 + $0x200] sm:$0xff]
  %v2018 = vld [vmem:[#allocation2 + $0x208] sm:$0xff]
  %v2019 = vld [vmem:[#allocation2 + $0x210] sm:$0xff]
  %v2020 = vld [vmem:[#allocation2 + $0x218] sm:$0xff]
  %v2021 = vld [vmem:[#allocation2 + $0x220] sm:$0xff]
  %v2022 = vld [vmem:[#allocation2 + $0x228] sm:$0xff]
  %v2023 = vld [vmem:[#allocation2 + $0x230] sm:$0xff]
  %v2024 = vld [vmem:[#allocation2 + $0x238] sm:$0xff]
  %v2025 = vld [vmem:[#allocation2 + $0x240] sm:$0xff]
  %v2026 = vld [vmem:[#allocation2 + $0x248] sm:$0xff]
  %v2027 = vld [vmem:[#allocation2 + $0x250] sm:$0xff]
  %v2028 = vld [vmem:[#allocation2 + $0x258] sm:$0xff]
  %v2029 = vld [vmem:[#allocation2 + $0x260] sm:$0xff]
  %v2030 = vld [vmem:[#allocation2 + $0x268] sm:$0xff]
  %v2031 = vld [vmem:[#allocation2 + $0x270] sm:$0xff]
  %v2032 = vld [vmem:[#allocation2 + $0x278] sm:$0xff]
  %v2033 = vld [vmem:[#allocation2 + $0x280] sm:$0xff]
  %v2034 = vld [vmem:[#allocation2 + $0x288] sm:$0xff]
  %v2035 = vld [vmem:[#allocation2 + $0x290] sm:$0xff]
  %v2036 = vld [vmem:[#allocation2 + $0x298] sm:$0xff]
  %v2037 = vld [vmem:[#allocation2 + $0x2a0] sm:$0xff]
  %v2038 = vld [vmem:[#allocation2 + $0x2a8] sm:$0xff]
  %v2039 = vld [vmem:[#allocation2 + $0x2b0] sm:$0xff]
  %v2040 = vld [vmem:[#allocation2 + $0x2b8] sm:$0xff]
  %v2041 = vld [vmem:[#allocation2 + $0x2c0] sm:$0xff]
  %v2042 = vld [vmem:[#allocation2 + $0x2c8] sm:$0xff]
  %v2043 = vld [vmem:[#allocation2 + $0x2d0] sm:$0xff]
  %v2044 = vld [vmem:[#allocation2 + $0x2d8] sm:$0xff]
  %v2045 = vld [vmem:[#allocation2 + $0x2e0] sm:$0xff]
  %v2046 = vld [vmem:[#allocation2 + $0x2e8] sm:$0xff]
  %v2047 = vld [vmem:[#allocation2 + $0x2f0] sm:$0xff]
  %v2048 = vld [vmem:[#allocation2 + $0x2f8] sm:$0xff]
  %v2049 = vld [vmem:[#allocation2 + $0x300] sm:$0xff]
  %v2050 = vld [vmem:[#allocation2 + $0x308] sm:$0xff]
  %v2051 = vld [vmem:[#allocation2 + $0x310] sm:$0xff]
  %v2052 = vld [vmem:[#allocation2 + $0x318] sm:$0xff]
  %v2053 = vld [vmem:[#allocation2 + $0x320] sm:$0xff]
  %v2054 = vld [vmem:[#allocation2 + $0x328] sm:$0xff]
  %v2055 = vld [vmem:[#allocation2 + $0x330] sm:$0xff]
  %v2056 = vld [vmem:[#allocation2 + $0x338] sm:$0xff]
  %v2057 = vld [vmem:[#allocation2 + $0x340] sm:$0xff]
  %v2058 = vld [vmem:[#allocation2 + $0x348] sm:$0xff]
  %v2059 = vld [vmem:[#allocation2 + $0x350] sm:$0xff]
  %v2060 = vld [vmem:[#allocation2 + $0x358] sm:$0xff]
  %s2061 = scalar_lea.vmem %s5, 16
  %v2062 = vld [vmem:[%s2061] sm:$0xff]
  %v2063 = vld [vmem:[%s2061 + $0x8] sm:$0xff]
  %2065 = vset.pattern.permute.xlu0 0
  %2066 = vperm.xlu0 %2065, %v2062
  %v2067 = vpop.permute.xlu0 %2066
  %2070 = vset.pattern.permute.xlu0 0
  %2071 = vperm.xlu0 %2070, %v2063
  %v2072 = vpop.permute.xlu0 %2071
  %v2075 = vsel %vm157, %v1950, 0
  %v2078 = vsel %vm157, %v1952, 0
  %2080 = vmatprep.subr.mxu0 %v1954
  %2081 = vmatpush1.msra.mxu0 %v1953
  %2082 = vmatprep.subr.mxu0 %v1960
  %2083 = vmatpush1.msra.mxu0 %v1959
  %2084 = vmatprep.subr.mxu0 %v1966
  %2085 = vmatpush1.msra.mxu0 %v1965
  %2086 = vmatprep.subr.mxu0 %v1972
  %2087 = vmatpush1.msra.mxu0 %v1971
  %2088 = vmatprep.subr.mxu0 %v1978
  %2089 = vmatpush1.msra.mxu0 %v1977
  %2090 = vmatprep.subr.mxu0 %v1984
  %2091 = vmatpush1.msra.mxu0 %v1983
  %2092 = vmatprep.subr.mxu0 %v1990
  %2093 = vmatpush1.msra.mxu0 %v1989
  %2094 = vmatprep.subr.mxu0 %v1996
  %2095 = vmatpush1.msra.mxu0 %v1995
  %2096 = vmatprep.subr.mxu0 %v2002
  %2097 = vmatpush1.msra.mxu0 %v2001
  %2098 = vmatprep.subr.mxu0 %v2008
  %2099 = vmatpush1.msra.mxu0 %v2007
  %2100 = vmatprep.subr.mxu0 %v2014
  %2101 = vmatpush1.msra.mxu0 %v2013
  %2102 = vmatprep.subr.mxu0 %v2020
  %2103 = vmatpush1.msra.mxu0 %v2019
  %2104 = vmatprep.subr.mxu0 %v2026
  %2105 = vmatpush1.msra.mxu0 %v2025
  %2106 = vmatprep.subr.mxu0 %v2032
  %2107 = vmatpush1.msra.mxu0 %v2031
  %2108 = vmatprep.subr.mxu0 %v2038
  %2109 = vmatpush1.msra.mxu0 %v2037
  %2110 = vmatprep.subr.mxu0 %v2044
  %2111 = vmatpush1.msra.mxu0 %v2043
  %2112 = vmatprep.subr.mxu0 %v2050
  %2113 = vmatpush1.msra.mxu0 %v2049
  %2114 = vmatprep.subr.mxu0 %v2056
  %2115 = vmatpush1.msra.mxu0 %v2055
  %2116 = vmatprep.subr.mxu0 0.0
  %2117 = vmatpush1.msra.mxu0 0.0
  %2118 = vmatprep.subr.mxu0 0.0
  %2119 = vmatpush1.msra.mxu0 0.0
  %2120 = vmatprep.subr.mxu0 0.0
  %2121 = vmatpush1.msra.mxu0 0.0
  %2122 = vmatprep.subr.mxu0 0.0
  %2123 = vmatpush1.msra.mxu0 0.0
  %2124 = vmatprep.subr.mxu0 0.0
  %2125 = vmatpush1.msra.mxu0 0.0
  %2126 = vmatprep.subr.mxu0 0.0
  %2127 = vmatpush1.msra.mxu0 0.0
  %2128 = vmatprep.subr.mxu0 0.0
  %2129 = vmatpush1.msra.mxu0 0.0
  %2130 = vmatprep.subr.mxu0 0.0
  %2131 = vmatpush1.msra.mxu0 0.0
  %2132 = vmatprep.subr.mxu0 0.0
  %2133 = vmatpush1.msra.mxu0 0.0
  %2134 = vmatprep.subr.mxu0 0.0
  %2135 = vmatpush1.msra.mxu0 0.0
  %2136 = vmatprep.subr.mxu0 0.0
  %2137 = vmatpush1.msra.mxu0 0.0
  %2138 = vmatprep.subr.mxu0 0.0
  %2139 = vmatpush1.msra.mxu0 0.0
  %2140 = vmatprep.subr.mxu0 0.0
  %2141 = vmatpush1.msra.mxu0 0.0
  %2142 = vmatprep.subr.mxu0 0.0
  %2143 = vmatpush1.msra.mxu0 0.0
  %2144 = vmatprep.mubr.f32.mxu0 %v2075
  %2145 = vmatmul.mubr.f32.gmra.mrb[0].mxu0 %v1949
  %v2146 = vpop.f32.mrb[0].mxu0
  %v2147 = vadd.f32 %v2067, %v2146
  %v2148 = vpop.f32.mrb[0].mxu0
  %v2149 = vadd.f32 %v2067, %v2148
  %2150 = vmatprep.mubr.f32.mxu0 %v2078
  %2151 = vmatmul.mubr.f32.gmra.mrb[0].mxu0 %v1951
  %v2152 = vpop.f32.mrb[0].mxu0
  %v2153 = vadd.f32 %v2072, %v2152
  %v2154 = vpop.f32.mrb[0].mxu0
  %v2155 = vadd.f32 %v2072, %v2154
  %2156 = vdwg.mxu0
  %2157 = vmatprep.subr.mxu0 %v1956
  %2158 = vmatpush1.msra.mxu0 %v1955
  %2159 = vmatprep.subr.mxu0 %v1962
  %2160 = vmatpush1.msra.mxu0 %v1961
  %2161 = vmatprep.subr.mxu0 %v1968
  %2162 = vmatpush1.msra.mxu0 %v1967
  %2163 = vmatprep.subr.mxu0 %v1974
  %2164 = vmatpush1.msra.mxu0 %v1973
  %2165 = vmatprep.subr.mxu0 %v1980
  %2166 = vmatpush1.msra.mxu0 %v1979
  %2167 = vmatprep.subr.mxu0 %v1986
  %2168 = vmatpush1.msra.mxu0 %v1985
  %2169 = vmatprep.subr.mxu0 %v1992
  %2170 = vmatpush1.msra.mxu0 %v1991
  %2171 = vmatprep.subr.mxu0 %v1998
  %2172 = vmatpush1.msra.mxu0 %v1997
  %2173 = vmatprep.subr.mxu0 %v2004
  %2174 = vmatpush1.msra.mxu0 %v2003
  %2175 = vmatprep.subr.mxu0 %v2010
  %2176 = vmatpush1.msra.mxu0 %v2009
  %2177 = vmatprep.subr.mxu0 %v2016
  %2178 = vmatpush1.msra.mxu0 %v2015
  %2179 = vmatprep.subr.mxu0 %v2022
  %2180 = vmatpush1.msra.mxu0 %v2021
  %2181 = vmatprep.subr.mxu0 %v2028
  %2182 = vmatpush1.msra.mxu0 %v2027
  %2183 = vmatprep.subr.mxu0 %v2034
  %2184 = vmatpush1.msra.mxu0 %v2033
  %2185 = vmatprep.subr.mxu0 %v2040
  %2186 = vmatpush1.msra.mxu0 %v2039
  %2187 = vmatprep.subr.mxu0 %v2046
  %2188 = vmatpush1.msra.mxu0 %v2045
  %2189 = vmatprep.subr.mxu0 %v2052
  %2190 = vmatpush1.msra.mxu0 %v2051
  %2191 = vmatprep.subr.mxu0 %v2058
  %2192 = vmatpush1.msra.mxu0 %v2057
  %2193 = vmatprep.subr.mxu0 0.0
  %2194 = vmatpush1.msra.mxu0 0.0
  %2195 = vmatprep.subr.mxu0 0.0
  %2196 = vmatpush1.msra.mxu0 0.0
  %2197 = vmatprep.subr.mxu0 0.0
  %2198 = vmatpush1.msra.mxu0 0.0
  %2199 = vmatprep.subr.mxu0 0.0
  %2200 = vmatpush1.msra.mxu0 0.0
  %2201 = vmatprep.subr.mxu0 0.0
  %2202 = vmatpush1.msra.mxu0 0.0
  %2203 = vmatprep.subr.mxu0 0.0
  %2204 = vmatpush1.msra.mxu0 0.0
  %2205 = vmatprep.subr.mxu0 0.0
  %2206 = vmatpush1.msra.mxu0 0.0
  %2207 = vmatprep.subr.mxu0 0.0
  %2208 = vmatpush1.msra.mxu0 0.0
  %2209 = vmatprep.subr.mxu0 0.0
  %2210 = vmatpush1.msra.mxu0 0.0
  %2211 = vmatprep.subr.mxu0 0.0
  %2212 = vmatpush1.msra.mxu0 0.0
  %2213 = vmatprep.subr.mxu0 0.0
  %2214 = vmatpush1.msra.mxu0 0.0
  %2215 = vmatprep.subr.mxu0 0.0
  %2216 = vmatpush1.msra.mxu0 0.0
  %2217 = vmatprep.subr.mxu0 0.0
  %2218 = vmatpush1.msra.mxu0 0.0
  %2219 = vmatprep.subr.mxu0 0.0
  %2220 = vmatpush1.msra.mxu0 0.0
  %2221 = vmatprep.mubr.f32.mxu0 %v2075
  %2222 = vmatmul.mubr.f32.gmra.mrb[0].mxu0 %v1949
  %v2223 = vpop.f32.mrb[0].mxu0
  %v2224 = vadd.f32 %v2067, %v2223
  %v2225 = vpop.f32.mrb[0].mxu0
  %v2226 = vadd.f32 %v2067, %v2225
  %2227 = vmatprep.mubr.f32.mxu0 %v2078
  %2228 = vmatmul.mubr.f32.gmra.mrb[0].mxu0 %v1951
  %v2229 = vpop.f32.mrb[0].mxu0
  %v2230 = vadd.f32 %v2072, %v2229
  %v2231 = vpop.f32.mrb[0].mxu0
  %v2232 = vadd.f32 %v2072, %v2231
  %2233 = vdwg.mxu0
  %2234 = vmatprep.subr.mxu0 %v1958
  %2235 = vmatpush1.msra.mxu0 %v1957
  %2236 = vmatprep.subr.mxu0 %v1964
  %2237 = vmatpush1.msra.mxu0 %v1963
  %2238 = vmatprep.subr.mxu0 %v1970
  %2239 = vmatpush1.msra.mxu0 %v1969
  %2240 = vmatprep.subr.mxu0 %v1976
  %2241 = vmatpush1.msra.mxu0 %v1975
  %2242 = vmatprep.subr.mxu0 %v1982
  %2243 = vmatpush1.msra.mxu0 %v1981
  %2244 = vmatprep.subr.mxu0 %v1988
  %2245 = vmatpush1.msra.mxu0 %v1987
  %2246 = vmatprep.subr.mxu0 %v1994
  %2247 = vmatpush1.msra.mxu0 %v1993
  %2248 = vmatprep.subr.mxu0 %v2000
  %2249 = vmatpush1.msra.mxu0 %v1999
  %2250 = vmatprep.subr.mxu0 %v2006
  %2251 = vmatpush1.msra.mxu0 %v2005
  %2252 = vmatprep.subr.mxu0 %v2012
  %2253 = vmatpush1.msra.mxu0 %v2011
  %2254 = vmatprep.subr.mxu0 %v2018
  %2255 = vmatpush1.msra.mxu0 %v2017
  %2256 = vmatprep.subr.mxu0 %v2024
  %2257 = vmatpush1.msra.mxu0 %v2023
  %2258 = vmatprep.subr.mxu0 %v2030
  %2259 = vmatpush1.msra.mxu0 %v2029
  %2260 = vmatprep.subr.mxu0 %v2036
  %2261 = vmatpush1.msra.mxu0 %v2035
  %2262 = vmatprep.subr.mxu0 %v2042
  %2263 = vmatpush1.msra.mxu0 %v2041
  %2264 = vmatprep.subr.mxu0 %v2048
  %2265 = vmatpush1.msra.mxu0 %v2047
  %2266 = vmatprep.subr.mxu0 %v2054
  %2267 = vmatpush1.msra.mxu0 %v2053
  %2268 = vmatprep.subr.mxu0 %v2060
  %2269 = vmatpush1.msra.mxu0 %v2059
  %2270 = vmatprep.subr.mxu0 0.0
  %2271 = vmatpush1.msra.mxu0 0.0
  %2272 = vmatprep.subr.mxu0 0.0
  %2273 = vmatpush1.msra.mxu0 0.0
  %2274 = vmatprep.subr.mxu0 0.0
  %2275 = vmatpush1.msra.mxu0 0.0
  %2276 = vmatprep.subr.mxu0 0.0
  %2277 = vmatpush1.msra.mxu0 0.0
  %2278 = vmatprep.subr.mxu0 0.0
  %2279 = vmatpush1.msra.mxu0 0.0
  %2280 = vmatprep.subr.mxu0 0.0
  %2281 = vmatpush1.msra.mxu0 0.0
  %2282 = vmatprep.subr.mxu0 0.0
  %2283 = vmatpush1.msra.mxu0 0.0
  %2284 = vmatprep.subr.mxu0 0.0
  %2285 = vmatpush1.msra.mxu0 0.0
  %2286 = vmatprep.subr.mxu0 0.0
  %2287 = vmatpush1.msra.mxu0 0.0
  %2288 = vmatprep.subr.mxu0 0.0
  %2289 = vmatpush1.msra.mxu0 0.0
  %2290 = vmatprep.subr.mxu0 0.0
  %2291 = vmatpush1.msra.mxu0 0.0
  %2292 = vmatprep.subr.mxu0 0.0
  %2293 = vmatpush1.msra.mxu0 0.0
  %2294 = vmatprep.subr.mxu0 0.0
  %2295 = vmatpush1.msra.mxu0 0.0
  %2296 = vmatprep.subr.mxu0 0.0
  %2297 = vmatpush1.msra.mxu0 0.0
  %2298 = vmatprep.mubr.f32.mxu0 %v2075
  %2299 = vmatmul.mubr.f32.gmra.mrb[0].mxu0 %v1949
  %v2300 = vpop.f32.mrb[0].mxu0
  %v2301 = vadd.f32 %v2067, %v2300
  %v2302 = vpop.f32.mrb[0].mxu0
  %v2303 = vadd.f32 %v2067, %v2302
  %2304 = vmatprep.mubr.f32.mxu0 %v2078
  %2305 = vmatmul.mubr.f32.gmra.mrb[0].mxu0 %v1951
  %v2306 = vpop.f32.mrb[0].mxu0
  %v2307 = vadd.f32 %v2072, %v2306
  %v2308 = vpop.f32.mrb[0].mxu0
  %v2309 = vadd.f32 %v2072, %v2308
  %2310 = vdwg.mxu0
  %v2311 = vmax.f32 %v2147, 0.0
  %v2312 = vmax.f32 %v2149, 0.0
  %v2313 = vmax.f32 %v2224, 0.0
  %v2314 = vmax.f32 %v2226, 0.0
  %v2315 = vmax.f32 %v2301, 0.0
  %v2316 = vmax.f32 %v2303, 0.0
  %v2317 = vmax.f32 %v2153, 0.0
  %v2318 = vmax.f32 %v2155, 0.0
  %v2319 = vmax.f32 %v2230, 0.0
  %v2320 = vmax.f32 %v2232, 0.0
  %v2321 = vmax.f32 %v2307, 0.0
  %v2322 = vmax.f32 %v2309, 0.0
  %v2323 = vmin.f32 %v2311, 20.0
  %v2324 = vmin.f32 %v2312, 20.0
  %v2325 = vmin.f32 %v2313, 20.0
  %v2326 = vmin.f32 %v2314, 20.0
  %v2327 = vmin.f32 %v2315, 20.0
  %v2328 = vmin.f32 %v2316, 20.0
  %v2329 = vmin.f32 %v2317, 20.0
  %v2330 = vmin.f32 %v2318, 20.0
  %v2331 = vmin.f32 %v2319, 20.0
  %v2332 = vmin.f32 %v2320, 20.0
  %v2333 = vmin.f32 %v2321, 20.0
  %v2334 = vmin.f32 %v2322, 20.0
  %v2335 = vmul.f32 %v2323, %v46
  %v2336 = vmul.f32 %v2324, %v50
  %v2337 = vmul.f32 %v2325, %v54
  %v2338 = vmul.f32 %v2326, %v58
  %v2339 = vmul.f32 %v2327, %v62
  %v2340 = vmul.f32 %v2328, %v66
  %v2341 = vmul.f32 %v2329, %v46
  %v2342 = vmul.f32 %v2330, %v50
  %v2343 = vmul.f32 %v2331, %v54
  %v2344 = vmul.f32 %v2332, %v58
  %v2345 = vmul.f32 %v2333, %v62
  %v2346 = vmul.f32 %v2334, %v66
  %2347 = vst [vmem:[#allocation3 + $0x60] sm:$0xff] %v2335
  %2348 = vst [vmem:[#allocation3 + $0x68] sm:$0xff] %v2336
  %2349 = vst [vmem:[#allocation3 + $0x70] sm:$0xff] %v2337
  %2350 = vst [vmem:[#allocation3 + $0x78] sm:$0xff] %v2338
  %2351 = vst [vmem:[#allocation3 + $0x80] sm:$0xff] %v2339
  %2352 = vst [vmem:[#allocation3 + $0x88] sm:$0xff] %v2340
  %2353 = vst [vmem:[#allocation3 + $0x90] sm:$0xff] %v2341
  %2354 = vst [vmem:[#allocation3 + $0x98] sm:$0xff] %v2342
  %2355 = vst [vmem:[#allocation3 + $0xa0] sm:$0xff] %v2343
  %2356 = vst [vmem:[#allocation3 + $0xa8] sm:$0xff] %v2344
  %2357 = vst [vmem:[#allocation3 + $0xb0] sm:$0xff] %v2345
  %2358 = vst [vmem:[#allocation3 + $0xb8] sm:$0xff] %v2346
  %v2359 = vld [vmem:[%s6] sm:$0xff]
  %v2360 = vld [vmem:[%s6 + $0x8] sm:$0xff]
  %v2361 = vld [vmem:[%s6 + $0x10] sm:$0xff]
  %v2362 = vld [vmem:[%s6 + $0x18] sm:$0xff]
  %v2363 = vld [vmem:[%s6 + $0x20] sm:$0xff]
  %v2364 = vld [vmem:[%s6 + $0x28] sm:$0xff]
  %v2365 = vld [vmem:[%s6 + $0x30] sm:$0xff]
  %v2366 = vld [vmem:[%s6 + $0x38] sm:$0xff]
  %v2367 = vld [vmem:[#allocation3] sm:$0xff]
  %v2368 = vld [vmem:[#allocation3 + $0x8] sm:$0xff]
  %v2369 = vld [vmem:[#allocation3 + $0x10] sm:$0xff]
  %v2370 = vld [vmem:[#allocation3 + $0x18] sm:$0xff]
  %v2371 = vld [vmem:[#allocation3 + $0x20] sm:$0xff]
  %v2372 = vld [vmem:[#allocation3 + $0x28] sm:$0xff]
  %v2373 = vld [vmem:[#allocation3 + $0x30] sm:$0xff]
  %v2374 = vld [vmem:[#allocation3 + $0x38] sm:$0xff]
  %v2375 = vld [vmem:[#allocation3 + $0x40] sm:$0xff]
  %v2376 = vld [vmem:[#allocation3 + $0x48] sm:$0xff]
  %v2377 = vld [vmem:[#allocation3 + $0x50] sm:$0xff]
  %v2378 = vld [vmem:[#allocation3 + $0x58] sm:$0xff]
  %v2379 = vld [vmem:[#allocation3 + $0x60] sm:$0xff]
  %v2380 = vld [vmem:[#allocation3 + $0x68] sm:$0xff]
  %v2381 = vld [vmem:[#allocation3 + $0x70] sm:$0xff]
  %v2382 = vld [vmem:[#allocation3 + $0x78] sm:$0xff]
  %v2383 = vld [vmem:[#allocation3 + $0x80] sm:$0xff]
  %v2384 = vld [vmem:[#allocation3 + $0x88] sm:$0xff]
  %v2385 = vld [vmem:[#allocation3 + $0x90] sm:$0xff]
  %v2386 = vld [vmem:[#allocation3 + $0x98] sm:$0xff]
  %v2387 = vld [vmem:[#allocation3 + $0xa0] sm:$0xff]
  %v2388 = vld [vmem:[#allocation3 + $0xa8] sm:$0xff]
  %v2389 = vld [vmem:[#allocation3 + $0xb0] sm:$0xff]
  %v2390 = vld [vmem:[#allocation3 + $0xb8] sm:$0xff]
  %v2391 = vld [vmem:[%s7] sm:$0xff]
  %v2392 = vld [vmem:[%s7 + $0x8] sm:$0xff]
  %v2393 = vld [vmem:[%s7 + $0x10] sm:$0xff]
  %v2394 = vld [vmem:[%s7 + $0x18] sm:$0xff]
  %v2395 = vld [vmem:[%s7 + $0x20] sm:$0xff]
  %v2396 = vld [vmem:[%s7 + $0x28] sm:$0xff]
  %v2397 = vld [vmem:[%s7 + $0x30] sm:$0xff]
  %v2398 = vld [vmem:[%s7 + $0x38] sm:$0xff]
  %2400 = vset.pattern.permute.xlu0 0
  %2401 = vperm.xlu0 %2400, %v2391
  %v2402 = vpop.permute.xlu0 %2401
  %2405 = vset.pattern.permute.xlu0 0
  %2406 = vperm.xlu0 %2405, %v2392
  %v2407 = vpop.permute.xlu0 %2406
  %2410 = vset.pattern.permute.xlu0 0
  %2411 = vperm.xlu0 %2410, %v2393
  %v2412 = vpop.permute.xlu0 %2411
  %2415 = vset.pattern.permute.xlu0 0
  %2416 = vperm.xlu0 %2415, %v2394
  %v2417 = vpop.permute.xlu0 %2416
  %2420 = vset.pattern.permute.xlu0 0
  %2421 = vperm.xlu0 %2420, %v2395
  %v2422 = vpop.permute.xlu0 %2421
  %2425 = vset.pattern.permute.xlu0 0
  %2426 = vperm.xlu0 %2425, %v2396
  %v2427 = vpop.permute.xlu0 %2426
  %2430 = vset.pattern.permute.xlu0 0
  %2431 = vperm.xlu0 %2430, %v2397
  %v2432 = vpop.permute.xlu0 %2431
  %2435 = vset.pattern.permute.xlu0 0
  %2436 = vperm.xlu0 %2435, %v2398
  %v2437 = vpop.permute.xlu0 %2436
  %vm2439 = vcmask 261120
  %v2441 = vsel %vm2439, %v2359, 0
  %v2444 = vsel %vm2439, %v2360, 0
  %v2447 = vsel %vm2439, %v2361, 0
  %v2450 = vsel %vm2439, %v2362, 0
  %v2453 = vsel %vm2439, %v2363, 0
  %v2456 = vsel %vm2439, %v2364, 0
  %v2459 = vsel %vm2439, %v2365, 0
  %v2462 = vsel %vm2439, %v2366, 0
  %2464 = vmatprep.subr.mxu0 %v2368
  %2465 = vmatpush1.msra.mxu0 %v2367
  %2466 = vmatprep.subr.mxu0 %v2374
  %2467 = vmatpush1.msra.mxu0 %v2373
  %2468 = vmatprep.subr.mxu0 %v2380
  %2469 = vmatpush1.msra.mxu0 %v2379
  %2470 = vmatprep.subr.mxu0 %v2386
  %2471 = vmatpush1.msra.mxu0 %v2385
  %2472 = vmatprep.subr.mxu0 0.0
  %2473 = vmatpush1.msra.mxu0 0.0
  %2474 = vmatprep.subr.mxu0 0.0
  %2475 = vmatpush1.msra.mxu0 0.0
  %2476 = vmatprep.subr.mxu0 0.0
  %2477 = vmatpush1.msra.mxu0 0.0
  %2478 = vmatprep.subr.mxu0 0.0
  %2479 = vmatpush1.msra.mxu0 0.0
  %2480 = vmatprep.subr.mxu0 0.0
  %2481 = vmatpush1.msra.mxu0 0.0
  %2482 = vmatprep.subr.mxu0 0.0
  %2483 = vmatpush1.msra.mxu0 0.0
  %2484 = vmatprep.subr.mxu0 0.0
  %2485 = vmatpush1.msra.mxu0 0.0
  %2486 = vmatprep.subr.mxu0 0.0
  %2487 = vmatpush1.msra.mxu0 0.0
  %2488 = vmatprep.subr.mxu0 0.0
  %2489 = vmatpush1.msra.mxu0 0.0
  %2490 = vmatprep.subr.mxu0 0.0
  %2491 = vmatpush1.msra.mxu0 0.0
  %2492 = vmatprep.subr.mxu0 0.0
  %2493 = vmatpush1.msra.mxu0 0.0
  %2494 = vmatprep.subr.mxu0 0.0
  %2495 = vmatpush1.msra.mxu0 0.0
  %2496 = vmatprep.subr.mxu0 0.0
  %2497 = vmatpush1.msra.mxu0 0.0
  %2498 = vmatprep.subr.mxu0 0.0
  %2499 = vmatpush1.msra.mxu0 0.0
  %2500 = vmatprep.subr.mxu0 0.0
  %2501 = vmatpush1.msra.mxu0 0.0
  %2502 = vmatprep.subr.mxu0 0.0
  %2503 = vmatpush1.msra.mxu0 0.0
  %2504 = vmatprep.subr.mxu0 0.0
  %2505 = vmatpush1.msra.mxu0 0.0
  %2506 = vmatprep.subr.mxu0 0.0
  %2507 = vmatpush1.msra.mxu0 0.0
  %2508 = vmatprep.subr.mxu0 0.0
  %2509 = vmatpush1.msra.mxu0 0.0
  %2510 = vmatprep.subr.mxu0 0.0
  %2511 = vmatpush1.msra.mxu0 0.0
  %2512 = vmatprep.subr.mxu0 0.0
  %2513 = vmatpush1.msra.mxu0 0.0
  %2514 = vmatprep.subr.mxu0 0.0
  %2515 = vmatpush1.msra.mxu0 0.0
  %2516 = vmatprep.subr.mxu0 0.0
  %2517 = vmatpush1.msra.mxu0 0.0
  %2518 = vmatprep.subr.mxu0 0.0
  %2519 = vmatpush1.msra.mxu0 0.0
  %2520 = vmatprep.subr.mxu0 0.0
  %2521 = vmatpush1.msra.mxu0 0.0
  %2522 = vmatprep.subr.mxu0 0.0
  %2523 = vmatpush1.msra.mxu0 0.0
  %2524 = vmatprep.subr.mxu0 0.0
  %2525 = vmatpush1.msra.mxu0 0.0
  %2526 = vmatprep.subr.mxu0 0.0
  %2527 = vmatpush1.msra.mxu0 0.0
  %2528 = vmatprep.mubr.f32.mxu0 0.0
  %2529 = vmatmul.mubr.f32.gmra.mrb[0].mxu0 %v2441
  %v2530 = vpop.f32.mrb[0].mxu0
  %v2531 = vadd.f32 %v2402, %v2530
  %v2532 = vpop.f32.mrb[0].mxu0
  %v2533 = vadd.f32 %v2402, %v2532
  %2534 = vmatprep.mubr.f32.mxu0 0.0
  %2535 = vmatmul.mubr.f32.gmra.mrb[0].mxu0 %v2444
  %v2536 = vpop.f32.mrb[0].mxu0
  %v2537 = vadd.f32 %v2407, %v2536
  %v2538 = vpop.f32.mrb[0].mxu0
  %v2539 = vadd.f32 %v2407, %v2538
  %2540 = vmatprep.mubr.f32.mxu0 0.0
  %2541 = vmatmul.mubr.f32.gmra.mrb[0].mxu0 %v2447
  %v2542 = vpop.f32.mrb[0].mxu0
  %v2543 = vadd.f32 %v2412, %v2542
  %v2544 = vpop.f32.mrb[0].mxu0
  %v2545 = vadd.f32 %v2412, %v2544
  %2546 = vmatprep.mubr.f32.mxu0 0.0
  %2547 = vmatmul.mubr.f32.gmra.mrb[0].mxu0 %v2450
  %v2548 = vpop.f32.mrb[0].mxu0
  %v2549 = vadd.f32 %v2417, %v2548
  %v2550 = vpop.f32.mrb[0].mxu0
  %v2551 = vadd.f32 %v2417, %v2550
  %2552 = vmatprep.mubr.f32.mxu0 0.0
  %2553 = vmatmul.mubr.f32.gmra.mrb[0].mxu0 %v2453
  %v2554 = vpop.f32.mrb[0].mxu0
  %v2555 = vadd.f32 %v2422, %v2554
  %v2556 = vpop.f32.mrb[0].mxu0
  %v2557 = vadd.f32 %v2422, %v2556
  %2558 = vmatprep.mubr.f32.mxu0 0.0
  %2559 = vmatmul.mubr.f32.gmra.mrb[0].mxu0 %v2456
  %v2560 = vpop.f32.mrb[0].mxu0
  %v2561 = vadd.f32 %v2427, %v2560
  %v2562 = vpop.f32.mrb[0].mxu0
  %v2563 = vadd.f32 %v2427, %v2562
  %2564 = vmatprep.mubr.f32.mxu0 0.0
  %2565 = vmatmul.mubr.f32.gmra.mrb[0].mxu0 %v2459
  %v2566 = vpop.f32.mrb[0].mxu0
  %v2567 = vadd.f32 %v2432, %v2566
  %v2568 = vpop.f32.mrb[0].mxu0
  %v2569 = vadd.f32 %v2432, %v2568
  %2570 = vmatprep.mubr.f32.mxu0 0.0
  %2571 = vmatmul.mubr.f32.gmra.mrb[0].mxu0 %v2462
  %v2572 = vpop.f32.mrb[0].mxu0
  %v2573 = vadd.f32 %v2437, %v2572
  %v2574 = vpop.f32.mrb[0].mxu0
  %v2575 = vadd.f32 %v2437, %v2574
  %2576 = vdwg.mxu0
  %2577 = vmatprep.subr.mxu0 %v2370
  %2578 = vmatpush1.msra.mxu0 %v2369
  %2579 = vmatprep.subr.mxu0 %v2376
  %2580 = vmatpush1.msra.mxu0 %v2375
  %2581 = vmatprep.subr.mxu0 %v2382
  %2582 = vmatpush1.msra.mxu0 %v2381
  %2583 = vmatprep.subr.mxu0 %v2388
  %2584 = vmatpush1.msra.mxu0 %v2387
  %2585 = vmatprep.subr.mxu0 0.0
  %2586 = vmatpush1.msra.mxu0 0.0
  %2587 = vmatprep.subr.mxu0 0.0
  %2588 = vmatpush1.msra.mxu0 0.0
  %2589 = vmatprep.subr.mxu0 0.0
  %2590 = vmatpush1.msra.mxu0 0.0
  %2591 = vmatprep.subr.mxu0 0.0
  %2592 = vmatpush1.msra.mxu0 0.0
  %2593 = vmatprep.subr.mxu0 0.0
  %2594 = vmatpush1.msra.mxu0 0.0
  %2595 = vmatprep.subr.mxu0 0.0
  %2596 = vmatpush1.msra.mxu0 0.0
  %2597 = vmatprep.subr.mxu0 0.0
  %2598 = vmatpush1.msra.mxu0 0.0
  %2599 = vmatprep.subr.mxu0 0.0
  %2600 = vmatpush1.msra.mxu0 0.0
  %2601 = vmatprep.subr.mxu0 0.0
  %2602 = vmatpush1.msra.mxu0 0.0
  %2603 = vmatprep.subr.mxu0 0.0
  %2604 = vmatpush1.msra.mxu0 0.0
  %2605 = vmatprep.subr.mxu0 0.0
  %2606 = vmatpush1.msra.mxu0 0.0
  %2607 = vmatprep.subr.mxu0 0.0
  %2608 = vmatpush1.msra.mxu0 0.0
  %2609 = vmatprep.subr.mxu0 0.0
  %2610 = vmatpush1.msra.mxu0 0.0
  %2611 = vmatprep.subr.mxu0 0.0
  %2612 = vmatpush1.msra.mxu0 0.0
  %2613 = vmatprep.subr.mxu0 0.0
  %2614 = vmatpush1.msra.mxu0 0.0
  %2615 = vmatprep.subr.mxu0 0.0
  %2616 = vmatpush1.msra.mxu0 0.0
  %2617 = vmatprep.subr.mxu0 0.0
  %2618 = vmatpush1.msra.mxu0 0.0
  %2619 = vmatprep.subr.mxu0 0.0
  %2620 = vmatpush1.msra.mxu0 0.0
  %2621 = vmatprep.subr.mxu0 0.0
  %2622 = vmatpush1.msra.mxu0 0.0
  %2623 = vmatprep.subr.mxu0 0.0
  %2624 = vmatpush1.msra.mxu0 0.0
  %2625 = vmatprep.subr.mxu0 0.0
  %2626 = vmatpush1.msra.mxu0 0.0
  %2627 = vmatprep.subr.mxu0 0.0
  %2628 = vmatpush1.msra.mxu0 0.0
  %2629 = vmatprep.subr.mxu0 0.0
  %2630 = vmatpush1.msra.mxu0 0.0
  %2631 = vmatprep.subr.mxu0 0.0
  %2632 = vmatpush1.msra.mxu0 0.0
  %2633 = vmatprep.subr.mxu0 0.0
  %2634 = vmatpush1.msra.mxu0 0.0
  %2635 = vmatprep.subr.mxu0 0.0
  %2636 = vmatpush1.msra.mxu0 0.0
  %2637 = vmatprep.subr.mxu0 0.0
  %2638 = vmatpush1.msra.mxu0 0.0
  %2639 = vmatprep.subr.mxu0 0.0
  %2640 = vmatpush1.msra.mxu0 0.0
  %2641 = vmatprep.mubr.f32.mxu0 0.0
  %2642 = vmatmul.mubr.f32.gmra.mrb[0].mxu0 %v2441
  %v2643 = vpop.f32.mrb[0].mxu0
  %v2644 = vadd.f32 %v2402, %v2643
  %v2645 = vpop.f32.mrb[0].mxu0
  %v2646 = vadd.f32 %v2402, %v2645
  %2647 = vmatprep.mubr.f32.mxu0 0.0
  %2648 = vmatmul.mubr.f32.gmra.mrb[0].mxu0 %v2444
  %v2649 = vpop.f32.mrb[0].mxu0
  %v2650 = vadd.f32 %v2407, %v2649
  %v2651 = vpop.f32.mrb[0].mxu0
  %v2652 = vadd.f32 %v2407, %v2651
  %2653 = vmatprep.mubr.f32.mxu0 0.0
  %2654 = vmatmul.mubr.f32.gmra.mrb[0].mxu0 %v2447
  %v2655 = vpop.f32.mrb[0].mxu0
  %v2656 = vadd.f32 %v2412, %v2655
  %v2657 = vpop.f32.mrb[0].mxu0
  %v2658 = vadd.f32 %v2412, %v2657
  %2659 = vmatprep.mubr.f32.mxu0 0.0
  %2660 = vmatmul.mubr.f32.gmra.mrb[0].mxu0 %v2450
  %v2661 = vpop.f32.mrb[0].mxu0
  %v2662 = vadd.f32 %v2417, %v2661
  %v2663 = vpop.f32.mrb[0].mxu0
  %v2664 = vadd.f32 %v2417, %v2663
  %2665 = vmatprep.mubr.f32.mxu0 0.0
  %2666 = vmatmul.mubr.f32.gmra.mrb[0].mxu0 %v2453
  %v2667 = vpop.f32.mrb[0].mxu0
  %v2668 = vadd.f32 %v2422, %v2667
  %v2669 = vpop.f32.mrb[0].mxu0
  %v2670 = vadd.f32 %v2422, %v2669
  %2671 = vmatprep.mubr.f32.mxu0 0.0
  %2672 = vmatmul.mubr.f32.gmra.mrb[0].mxu0 %v2456
  %v2673 = vpop.f32.mrb[0].mxu0
  %v2674 = vadd.f32 %v2427, %v2673
  %v2675 = vpop.f32.mrb[0].mxu0
  %v2676 = vadd.f32 %v2427, %v2675
  %2677 = vmatprep.mubr.f32.mxu0 0.0
  %2678 = vmatmul.mubr.f32.gmra.mrb[0].mxu0 %v2459
  %v2679 = vpop.f32.mrb[0].mxu0
  %v2680 = vadd.f32 %v2432, %v2679
  %v2681 = vpop.f32.mrb[0].mxu0
  %v2682 = vadd.f32 %v2432, %v2681
  %2683 = vmatprep.mubr.f32.mxu0 0.0
  %2684 = vmatmul.mubr.f32.gmra.mrb[0].mxu0 %v2462
  %v2685 = vpop.f32.mrb[0].mxu0
  %v2686 = vadd.f32 %v2437, %v2685
  %v2687 = vpop.f32.mrb[0].mxu0
  %v2688 = vadd.f32 %v2437, %v2687
  %2689 = vdwg.mxu0
  %2690 = vmatprep.subr.mxu0 %v2372
  %2691 = vmatpush1.msra.mxu0 %v2371
  %2692 = vmatprep.subr.mxu0 %v2378
  %2693 = vmatpush1.msra.mxu0 %v2377
  %2694 = vmatprep.subr.mxu0 %v2384
  %2695 = vmatpush1.msra.mxu0 %v2383
  %2696 = vmatprep.subr.mxu0 %v2390
  %2697 = vmatpush1.msra.mxu0 %v2389
  %2698 = vmatprep.subr.mxu0 0.0
  %2699 = vmatpush1.msra.mxu0 0.0
  %2700 = vmatprep.subr.mxu0 0.0
  %2701 = vmatpush1.msra.mxu0 0.0
  %2702 = vmatprep.subr.mxu0 0.0
  %2703 = vmatpush1.msra.mxu0 0.0
  %2704 = vmatprep.subr.mxu0 0.0
  %2705 = vmatpush1.msra.mxu0 0.0
  %2706 = vmatprep.subr.mxu0 0.0
  %2707 = vmatpush1.msra.mxu0 0.0
  %2708 = vmatprep.subr.mxu0 0.0
  %2709 = vmatpush1.msra.mxu0 0.0
  %2710 = vmatprep.subr.mxu0 0.0
  %2711 = vmatpush1.msra.mxu0 0.0
  %2712 = vmatprep.subr.mxu0 0.0
  %2713 = vmatpush1.msra.mxu0 0.0
  %2714 = vmatprep.subr.mxu0 0.0
  %2715 = vmatpush1.msra.mxu0 0.0
  %2716 = vmatprep.subr.mxu0 0.0
  %2717 = vmatpush1.msra.mxu0 0.0
  %2718 = vmatprep.subr.mxu0 0.0
  %2719 = vmatpush1.msra.mxu0 0.0
  %2720 = vmatprep.subr.mxu0 0.0
  %2721 = vmatpush1.msra.mxu0 0.0
  %2722 = vmatprep.subr.mxu0 0.0
  %2723 = vmatpush1.msra.mxu0 0.0
  %2724 = vmatprep.subr.mxu0 0.0
  %2725 = vmatpush1.msra.mxu0 0.0
  %2726 = vmatprep.subr.mxu0 0.0
  %2727 = vmatpush1.msra.mxu0 0.0
  %2728 = vmatprep.subr.mxu0 0.0
  %2729 = vmatpush1.msra.mxu0 0.0
  %2730 = vmatprep.subr.mxu0 0.0
  %2731 = vmatpush1.msra.mxu0 0.0
  %2732 = vmatprep.subr.mxu0 0.0
  %2733 = vmatpush1.msra.mxu0 0.0
  %2734 = vmatprep.subr.mxu0 0.0
  %2735 = vmatpush1.msra.mxu0 0.0
  %2736 = vmatprep.subr.mxu0 0.0
  %2737 = vmatpush1.msra.mxu0 0.0
  %2738 = vmatprep.subr.mxu0 0.0
  %2739 = vmatpush1.msra.mxu0 0.0
  %2740 = vmatprep.subr.mxu0 0.0
  %2741 = vmatpush1.msra.mxu0 0.0
  %2742 = vmatprep.subr.mxu0 0.0
  %2743 = vmatpush1.msra.mxu0 0.0
  %2744 = vmatprep.subr.mxu0 0.0
  %2745 = vmatpush1.msra.mxu0 0.0
  %2746 = vmatprep.subr.mxu0 0.0
  %2747 = vmatpush1.msra.mxu0 0.0
  %2748 = vmatprep.subr.mxu0 0.0
  %2749 = vmatpush1.msra.mxu0 0.0
  %2750 = vmatprep.subr.mxu0 0.0
  %2751 = vmatpush1.msra.mxu0 0.0
  %2752 = vmatprep.subr.mxu0 0.0
  %2753 = vmatpush1.msra.mxu0 0.0
  %2754 = vmatprep.mubr.f32.mxu0 0.0
  %2755 = vmatmul.mubr.f32.gmra.mrb[0].mxu0 %v2441
  %v2756 = vpop.f32.mrb[0].mxu0
  %v2757 = vadd.f32 %v2402, %v2756
  %v2758 = vpop.f32.mrb[0].mxu0
  %v2759 = vadd.f32 %v2402, %v2758
  %2760 = vmatprep.mubr.f32.mxu0 0.0
  %2761 = vmatmul.mubr.f32.gmra.mrb[0].mxu0 %v2444
  %v2762 = vpop.f32.mrb[0].mxu0
  %v2763 = vadd.f32 %v2407, %v2762
  %v2764 = vpop.f32.mrb[0].mxu0
  %v2765 = vadd.f32 %v2407, %v2764
  %2766 = vmatprep.mubr.f32.mxu0 0.0
  %2767 = vmatmul.mubr.f32.gmra.mrb[0].mxu0 %v2447
  %v2768 = vpop.f32.mrb[0].mxu0
  %v2769 = vadd.f32 %v2412, %v2768
  %v2770 = vpop.f32.mrb[0].mxu0
  %v2771 = vadd.f32 %v2412, %v2770
  %2772 = vmatprep.mubr.f32.mxu0 0.0
  %2773 = vmatmul.mubr.f32.gmra.mrb[0].mxu0 %v2450
  %v2774 = vpop.f32.mrb[0].mxu0
  %v2775 = vadd.f32 %v2417, %v2774
  %v2776 = vpop.f32.mrb[0].mxu0
  %v2777 = vadd.f32 %v2417, %v2776
  %2778 = vmatprep.mubr.f32.mxu0 0.0
  %2779 = vmatmul.mubr.f32.gmra.mrb[0].mxu0 %v2453
  %v2780 = vpop.f32.mrb[0].mxu0
  %v2781 = vadd.f32 %v2422, %v2780
  %v2782 = vpop.f32.mrb[0].mxu0
  %v2783 = vadd.f32 %v2422, %v2782
  %2784 = vmatprep.mubr.f32.mxu0 0.0
  %2785 = vmatmul.mubr.f32.gmra.mrb[0].mxu0 %v2456
  %v2786 = vpop.f32.mrb[0].mxu0
  %v2787 = vadd.f32 %v2427, %v2786
  %v2788 = vpop.f32.mrb[0].mxu0
  %v2789 = vadd.f32 %v2427, %v2788
  %2790 = vmatprep.mubr.f32.mxu0 0.0
  %2791 = vmatmul.mubr.f32.gmra.mrb[0].mxu0 %v2459
  %v2792 = vpop.f32.mrb[0].mxu0
  %v2793 = vadd.f32 %v2432, %v2792
  %v2794 = vpop.f32.mrb[0].mxu0
  %v2795 = vadd.f32 %v2432, %v2794
  %2796 = vmatprep.mubr.f32.mxu0 0.0
  %2797 = vmatmul.mubr.f32.gmra.mrb[0].mxu0 %v2462
  %v2798 = vpop.f32.mrb[0].mxu0
  %v2799 = vadd.f32 %v2437, %v2798
  %v2800 = vpop.f32.mrb[0].mxu0
  %v2801 = vadd.f32 %v2437, %v2800
  %2802 = vdwg.mxu0
  %v2803 = vld [vmem:[#allocation4] sm:$0xff]
  %v2804 = vld [vmem:[#allocation4 + $0x8] sm:$0xff]
  %v2805 = vld [vmem:[#allocation4 + $0x10] sm:$0xff]
  %v2806 = vld [vmem:[#allocation4 + $0x18] sm:$0xff]
  %v2807 = vld [vmem:[#allocation4 + $0x20] sm:$0xff]
  %v2808 = vld [vmem:[#allocation4 + $0x28] sm:$0xff]
  %v2809 = vld [vmem:[#allocation4 + $0x30] sm:$0xff]
  %v2810 = vld [vmem:[#allocation4 + $0x38] sm:$0xff]
  %v2811 = vld [vmem:[#allocation4 + $0x40] sm:$0xff]
  %v2812 = vld [vmem:[#allocation4 + $0x48] sm:$0xff]
  %v2813 = vld [vmem:[#allocation4 + $0x50] sm:$0xff]
  %v2814 = vld [vmem:[#allocation4 + $0x58] sm:$0xff]
  %v2815 = vld [vmem:[#allocation4 + $0x60] sm:$0xff]
  %v2816 = vld [vmem:[#allocation4 + $0x68] sm:$0xff]
  %v2817 = vld [vmem:[#allocation4 + $0x70] sm:$0xff]
  %v2818 = vld [vmem:[#allocation4 + $0x78] sm:$0xff]
  %v2819 = vld [vmem:[#allocation4 + $0x80] sm:$0xff]
  %v2820 = vld [vmem:[#allocation4 + $0x88] sm:$0xff]
  %v2821 = vld [vmem:[#allocation4 + $0x90] sm:$0xff]
  %v2822 = vld [vmem:[#allocation4 + $0x98] sm:$0xff]
  %v2823 = vld [vmem:[#allocation4 + $0xa0] sm:$0xff]
  %v2824 = vld [vmem:[#allocation4 + $0xa8] sm:$0xff]
  %v2825 = vld [vmem:[#allocation4 + $0xb0] sm:$0xff]
  %v2826 = vld [vmem:[#allocation4 + $0xb8] sm:$0xff]
  %v2827 = vld [vmem:[#allocation4 + $0xc0] sm:$0xff]
  %v2828 = vld [vmem:[#allocation4 + $0xc8] sm:$0xff]
  %v2829 = vld [vmem:[#allocation4 + $0xd0] sm:$0xff]
  %v2830 = vld [vmem:[#allocation4 + $0xd8] sm:$0xff]
  %v2831 = vld [vmem:[#allocation4 + $0xe0] sm:$0xff]
  %v2832 = vld [vmem:[#allocation4 + $0xe8] sm:$0xff]
  %v2833 = vld [vmem:[#allocation4 + $0xf0] sm:$0xff]
  %v2834 = vld [vmem:[#allocation4 + $0xf8] sm:$0xff]
  %v2835 = vld [vmem:[#allocation4 + $0x100] sm:$0xff]
  %v2836 = vld [vmem:[#allocation4 + $0x108] sm:$0xff]
  %v2837 = vld [vmem:[#allocation4 + $0x110] sm:$0xff]
  %v2838 = vld [vmem:[#allocation4 + $0x118] sm:$0xff]
  %v2839 = vld [vmem:[#allocation4 + $0x120] sm:$0xff]
  %v2840 = vld [vmem:[#allocation4 + $0x128] sm:$0xff]
  %v2841 = vld [vmem:[#allocation4 + $0x130] sm:$0xff]
  %v2842 = vld [vmem:[#allocation4 + $0x138] sm:$0xff]
  %v2843 = vld [vmem:[#allocation4 + $0x140] sm:$0xff]
  %v2844 = vld [vmem:[#allocation4 + $0x148] sm:$0xff]
  %v2845 = vld [vmem:[#allocation4 + $0x150] sm:$0xff]
  %v2846 = vld [vmem:[#allocation4 + $0x158] sm:$0xff]
  %v2847 = vld [vmem:[#allocation4 + $0x160] sm:$0xff]
  %v2848 = vld [vmem:[#allocation4 + $0x168] sm:$0xff]
  %v2849 = vld [vmem:[#allocation4 + $0x170] sm:$0xff]
  %v2850 = vld [vmem:[#allocation4 + $0x178] sm:$0xff]
  %v2851 = vadd.f32 %v2531, %v2803
  %v2852 = vadd.f32 %v2533, %v2804
  %v2853 = vadd.f32 %v2644, %v2805
  %v2854 = vadd.f32 %v2646, %v2806
  %v2855 = vadd.f32 %v2757, %v2807
  %v2856 = vadd.f32 %v2759, %v2808
  %v2857 = vadd.f32 %v2537, %v2809
  %v2858 = vadd.f32 %v2539, %v2810
  %v2859 = vadd.f32 %v2650, %v2811
  %v2860 = vadd.f32 %v2652, %v2812
  %v2861 = vadd.f32 %v2763, %v2813
  %v2862 = vadd.f32 %v2765, %v2814
  %v2863 = vadd.f32 %v2543, %v2815
  %v2864 = vadd.f32 %v2545, %v2816
  %v2865 = vadd.f32 %v2656, %v2817
  %v2866 = vadd.f32 %v2658, %v2818
  %v2867 = vadd.f32 %v2769, %v2819
  %v2868 = vadd.f32 %v2771, %v2820
  %v2869 = vadd.f32 %v2549, %v2821
  %v2870 = vadd.f32 %v2551, %v2822
  %v2871 = vadd.f32 %v2662, %v2823
  %v2872 = vadd.f32 %v2664, %v2824
  %v2873 = vadd.f32 %v2775, %v2825
  %v2874 = vadd.f32 %v2777, %v2826
  %v2875 = vadd.f32 %v2555, %v2827
  %v2876 = vadd.f32 %v2557, %v2828
  %v2877 = vadd.f32 %v2668, %v2829
  %v2878 = vadd.f32 %v2670, %v2830
  %v2879 = vadd.f32 %v2781, %v2831
  %v2880 = vadd.f32 %v2783, %v2832
  %v2881 = vadd.f32 %v2561, %v2833
  %v2882 = vadd.f32 %v2563, %v2834
  %v2883 = vadd.f32 %v2674, %v2835
  %v2884 = vadd.f32 %v2676, %v2836
  %v2885 = vadd.f32 %v2787, %v2837
  %v2886 = vadd.f32 %v2789, %v2838
  %v2887 = vadd.f32 %v2567, %v2839
  %v2888 = vadd.f32 %v2569, %v2840
  %v2889 = vadd.f32 %v2680, %v2841
  %v2890 = vadd.f32 %v2682, %v2842
  %v2891 = vadd.f32 %v2793, %v2843
  %v2892 = vadd.f32 %v2795, %v2844
  %v2893 = vadd.f32 %v2573, %v2845
  %v2894 = vadd.f32 %v2575, %v2846
  %v2895 = vadd.f32 %v2686, %v2847
  %v2896 = vadd.f32 %v2688, %v2848
  %v2897 = vadd.f32 %v2799, %v2849
  %v2898 = vadd.f32 %v2801, %v2850
  %v2899 = vmax.f32 %v2851, 0.0
  %v2900 = vmax.f32 %v2852, 0.0
  %v2901 = vmax.f32 %v2853, 0.0
  %v2902 = vmax.f32 %v2854, 0.0
  %v2903 = vmax.f32 %v2855, 0.0
  %v2904 = vmax.f32 %v2856, 0.0
  %v2905 = vmax.f32 %v2857, 0.0
  %v2906 = vmax.f32 %v2858, 0.0
  %v2907 = vmax.f32 %v2859, 0.0
  %v2908 = vmax.f32 %v2860, 0.0
  %v2909 = vmax.f32 %v2861, 0.0
  %v2910 = vmax.f32 %v2862, 0.0
  %v2911 = vmax.f32 %v2863, 0.0
  %v2912 = vmax.f32 %v2864, 0.0
  %v2913 = vmax.f32 %v2865, 0.0
  %v2914 = vmax.f32 %v2866, 0.0
  %v2915 = vmax.f32 %v2867, 0.0
  %v2916 = vmax.f32 %v2868, 0.0
  %v2917 = vmax.f32 %v2869, 0.0
  %v2918 = vmax.f32 %v2870, 0.0
  %v2919 = vmax.f32 %v2871, 0.0
  %v2920 = vmax.f32 %v2872, 0.0
  %v2921 = vmax.f32 %v2873, 0.0
  %v2922 = vmax.f32 %v2874, 0.0
  %v2923 = vmax.f32 %v2875, 0.0
  %v2924 = vmax.f32 %v2876, 0.0
  %v2925 = vmax.f32 %v2877, 0.0
  %v2926 = vmax.f32 %v2878, 0.0
  %v2927 = vmax.f32 %v2879, 0.0
  %v2928 = vmax.f32 %v2880, 0.0
  %v2929 = vmax.f32 %v2881, 0.0
  %v2930 = vmax.f32 %v2882, 0.0
  %v2931 = vmax.f32 %v2883, 0.0
  %v2932 = vmax.f32 %v2884, 0.0
  %v2933 = vmax.f32 %v2885, 0.0
  %v2934 = vmax.f32 %v2886, 0.0
  %v2935 = vmax.f32 %v2887, 0.0
  %v2936 = vmax.f32 %v2888, 0.0
  %v2937 = vmax.f32 %v2889, 0.0
  %v2938 = vmax.f32 %v2890, 0.0
  %v2939 = vmax.f32 %v2891, 0.0
  %v2940 = vmax.f32 %v2892, 0.0
  %v2941 = vmax.f32 %v2893, 0.0
  %v2942 = vmax.f32 %v2894, 0.0
  %v2943 = vmax.f32 %v2895, 0.0
  %v2944 = vmax.f32 %v2896, 0.0
  %v2945 = vmax.f32 %v2897, 0.0
  %v2946 = vmax.f32 %v2898, 0.0
  %v2947 = vmin.f32 %v2899, 20.0
  %v2948 = vmin.f32 %v2900, 20.0
  %v2949 = vmin.f32 %v2901, 20.0
  %v2950 = vmin.f32 %v2902, 20.0
  %v2951 = vmin.f32 %v2903, 20.0
  %v2952 = vmin.f32 %v2904, 20.0
  %v2953 = vmin.f32 %v2905, 20.0
  %v2954 = vmin.f32 %v2906, 20.0
  %v2955 = vmin.f32 %v2907, 20.0
  %v2956 = vmin.f32 %v2908, 20.0
  %v2957 = vmin.f32 %v2909, 20.0
  %v2958 = vmin.f32 %v2910, 20.0
  %v2959 = vmin.f32 %v2911, 20.0
  %v2960 = vmin.f32 %v2912, 20.0
  %v2961 = vmin.f32 %v2913, 20.0
  %v2962 = vmin.f32 %v2914, 20.0
  %v2963 = vmin.f32 %v2915, 20.0
  %v2964 = vmin.f32 %v2916, 20.0
  %v2965 = vmin.f32 %v2917, 20.0
  %v2966 = vmin.f32 %v2918, 20.0
  %v2967 = vmin.f32 %v2919, 20.0
  %v2968 = vmin.f32 %v2920, 20.0
  %v2969 = vmin.f32 %v2921, 20.0
  %v2970 = vmin.f32 %v2922, 20.0
  %v2971 = vmin.f32 %v2923, 20.0
  %v2972 = vmin.f32 %v2924, 20.0
  %v2973 = vmin.f32 %v2925, 20.0
  %v2974 = vmin.f32 %v2926, 20.0
  %v2975 = vmin.f32 %v2927, 20.0
  %v2976 = vmin.f32 %v2928, 20.0
  %v2977 = vmin.f32 %v2929, 20.0
  %v2978 = vmin.f32 %v2930, 20.0
  %v2979 = vmin.f32 %v2931, 20.0
  %v2980 = vmin.f32 %v2932, 20.0
  %v2981 = vmin.f32 %v2933, 20.0
  %v2982 = vmin.f32 %v2934, 20.0
  %v2983 = vmin.f32 %v2935, 20.0
  %v2984 = vmin.f32 %v2936, 20.0
  %v2985 = vmin.f32 %v2937, 20.0
  %v2986 = vmin.f32 %v2938, 20.0
  %v2987 = vmin.f32 %v2939, 20.0
  %v2988 = vmin.f32 %v2940, 20.0
  %v2989 = vmin.f32 %v2941, 20.0
  %v2990 = vmin.f32 %v2942, 20.0
  %v2991 = vmin.f32 %v2943, 20.0
  %v2992 = vmin.f32 %v2944, 20.0
  %v2993 = vmin.f32 %v2945, 20.0
  %v2994 = vmin.f32 %v2946, 20.0
  %2995 = vst [vmem:[%s8] sm:$0xff] %v2947
  %2996 = vst [vmem:[%s8 + $0x8] sm:$0xff] %v2948
  %2997 = vst [vmem:[%s8 + $0x10] sm:$0xff] %v2949
  %2998 = vst [vmem:[%s8 + $0x18] sm:$0xff] %v2950
  %2999 = vst [vmem:[%s8 + $0x20] sm:$0xff] %v2951
  %3000 = vst [vmem:[%s8 + $0x28] sm:$0xff] %v2952
  %3001 = vst [vmem:[%s8 + $0x30] sm:$0xff] %v2953
  %3002 = vst [vmem:[%s8 + $0x38] sm:$0xff] %v2954
  %3003 = vst [vmem:[%s8 + $0x40] sm:$0xff] %v2955
  %3004 = vst [vmem:[%s8 + $0x48] sm:$0xff] %v2956
  %3005 = vst [vmem:[%s8 + $0x50] sm:$0xff] %v2957
  %3006 = vst [vmem:[%s8 + $0x58] sm:$0xff] %v2958
  %3007 = vst [vmem:[%s8 + $0x60] sm:$0xff] %v2959
  %3008 = vst [vmem:[%s8 + $0x68] sm:$0xff] %v2960
  %3009 = vst [vmem:[%s8 + $0x70] sm:$0xff] %v2961
  %3010 = vst [vmem:[%s8 + $0x78] sm:$0xff] %v2962
  %3011 = vst [vmem:[%s8 + $0x80] sm:$0xff] %v2963
  %3012 = vst [vmem:[%s8 + $0x88] sm:$0xff] %v2964
  %3013 = vst [vmem:[%s8 + $0x90] sm:$0xff] %v2965
  %3014 = vst [vmem:[%s8 + $0x98] sm:$0xff] %v2966
  %3015 = vst [vmem:[%s8 + $0xa0] sm:$0xff] %v2967
  %3016 = vst [vmem:[%s8 + $0xa8] sm:$0xff] %v2968
  %3017 = vst [vmem:[%s8 + $0xb0] sm:$0xff] %v2969
  %3018 = vst [vmem:[%s8 + $0xb8] sm:$0xff] %v2970
  %3019 = vst [vmem:[%s8 + $0xc0] sm:$0xff] %v2971
  %3020 = vst [vmem:[%s8 + $0xc8] sm:$0xff] %v2972
  %3021 = vst [vmem:[%s8 + $0xd0] sm:$0xff] %v2973
  %3022 = vst [vmem:[%s8 + $0xd8] sm:$0xff] %v2974
  %3023 = vst [vmem:[%s8 + $0xe0] sm:$0xff] %v2975
  %3024 = vst [vmem:[%s8 + $0xe8] sm:$0xff] %v2976
  %3025 = vst [vmem:[%s8 + $0xf0] sm:$0xff] %v2977
  %3026 = vst [vmem:[%s8 + $0xf8] sm:$0xff] %v2978
  %3027 = vst [vmem:[%s8 + $0x100] sm:$0xff] %v2979
  %3028 = vst [vmem:[%s8 + $0x108] sm:$0xff] %v2980
  %3029 = vst [vmem:[%s8 + $0x110] sm:$0xff] %v2981
  %3030 = vst [vmem:[%s8 + $0x118] sm:$0xff] %v2982
  %3031 = vst [vmem:[%s8 + $0x120] sm:$0xff] %v2983
  %3032 = vst [vmem:[%s8 + $0x128] sm:$0xff] %v2984
  %3033 = vst [vmem:[%s8 + $0x130] sm:$0xff] %v2985
  %3034 = vst [vmem:[%s8 + $0x138] sm:$0xff] %v2986
  %3035 = vst [vmem:[%s8 + $0x140] sm:$0xff] %v2987
  %3036 = vst [vmem:[%s8 + $0x148] sm:$0xff] %v2988
  %3037 = vst [vmem:[%s8 + $0x150] sm:$0xff] %v2989
  %3038 = vst [vmem:[%s8 + $0x158] sm:$0xff] %v2990
  %3039 = vst [vmem:[%s8 + $0x160] sm:$0xff] %v2991
  %3040 = vst [vmem:[%s8 + $0x168] sm:$0xff] %v2992
  %3041 = vst [vmem:[%s8 + $0x170] sm:$0xff] %v2993
  %3042 = vst [vmem:[%s8 + $0x178] sm:$0xff] %v2994
  // Predicated region
  $region34: #{basic_block_eres2netv2_forward.1} parent=0 // pred_check
    _
  $region35: #{basic_block_eres2netv2_forward.1} parent=0 // pred_check_branch
    %3044 = sbr.rel (0) target = $region37
  $region36: #{basic_block_eres2netv2_forward.1} parent=0 // pred_region
    _
  $region37: #{basic_block_eres2netv2_forward.1} parent=0 // pred_fallthru
    _
  // Predicated region
  $region38: #{basic_block_eres2netv2_forward.1} parent=0 // pred_check
    _
  $region39: #{basic_block_eres2netv2_forward.1} parent=0 // pred_check_branch
    %3046 = sbr.rel (0) target = $region41
  $region40: #{basic_block_eres2netv2_forward.1} parent=0 // pred_region
    _
  $region41: #{basic_block_eres2netv2_forward.1} parent=0 // pred_fallthru
    _

</llo_original>
